<compile_context>
chip_gen: v7x
topology: tpu7x:2x2x1
jax: 0.10.0
libtpu: 0.0.40
codegen_flags: <defaults>
</compile_context>

<pallas_src>
import functools

import jax
import jax.numpy as jnp
from jax.experimental import pallas as pl
from jax.experimental.pallas import tpu as pltpu

_EPS = 1e-5
_LANE = 128
_SUBLANE = 8
_STATS_PARTS = 2          # leading 'parallel' axis of the stats grid (both v7x TCs)


def _cdiv(a, b):
    return -(-a // b)


def _round_up(x, m):
    return _cdiv(x, m) * m


@functools.lru_cache(maxsize=1)
def _vmem_limit_bytes():
    """Scoped-VMEM budget: half of physical VMEM, capped at 64 MiB.
    v5e/v6e (128 MiB) -> 64 MiB; v7x (64 MiB) -> 32 MiB."""
    try:
        cap = int(getattr(pltpu.get_tpu_info(), "vmem_capacity_bytes",
                          128 * 1024 * 1024))
    except Exception:
        cap = 128 * 1024 * 1024
    return max(min(cap // 2, 64 * 1024 * 1024), 16 * 1024 * 1024)


def _plan_tiles(M, stream_row_bytes, resident_bytes, vmem_limit):
    """Pick an M tile so double-buffered streamed tiles + resident weights stay
    inside the scoped-VMEM budget, keeping the M padding small and guaranteeing
    >= _STATS_PARTS grid steps on the 'parallel' apply axis."""
    budget = max(vmem_limit - resident_bytes - (2 << 20), 2 << 20)
    tile = min(1024, _round_up(max(_cdiv(M, _STATS_PARTS), _SUBLANE), _SUBLANE))
    while tile > _SUBLANE and 2 * tile * stream_row_bytes > budget:
        tile //= 2
    tile = max(_SUBLANE, (tile // _SUBLANE) * _SUBLANE)
    tiles_per_part = max(1, _cdiv(M, _STATS_PARTS * tile))
    Mp = _STATS_PARTS * tiles_per_part * tile
    return tile, tiles_per_part, Mp


# ------------------------------ Pallas kernels ------------------------------ #

def _make_stats_kernel(with_shortcut):
    """Phase 1: y = P@W (streamed out), accumulate per-channel sum / sumsq as
    (8, Cp) partials directly in the output refs (VPU adds only per step)."""

    def _accum(y, sum_ref, sq_ref):
        c = y.shape[-1]
        y3 = y.reshape(-1, _SUBLANE, c)
        sum_ref[...] += jnp.sum(y3, axis=0)[None]
        sq_ref[...] += jnp.sum((y3 * y3), axis=0)[None]

    if with_shortcut:
        def kernel(p_ref, w_ref, xs_ref, ws_ref,
                   y_ref, sum_ref, sq_ref, sums_ref, sqs_ref):
            @pl.when(pl.program_id(1) == 0)
            def _():
                sum_ref[...] = jnp.zeros_like(sum_ref)
                sq_ref[...] = jnp.zeros_like(sq_ref)
                sums_ref[...] = jnp.zeros_like(sums_ref)
                sqs_ref[...] = jnp.zeros_like(sqs_ref)

            y = jnp.dot(p_ref[...], w_ref[...], preferred_element_type=jnp.float32)
            y_ref[...] = y.astype(y_ref.dtype)
            _accum(y, sum_ref, sq_ref)
            s = jnp.dot(xs_ref[...], ws_ref[...], preferred_element_type=jnp.float32)
            _accum(s, sums_ref, sqs_ref)
    else:
        def kernel(p_ref, w_ref, y_ref, sum_ref, sq_ref):
            @pl.when(pl.program_id(1) == 0)
            def _():
                sum_ref[...] = jnp.zeros_like(sum_ref)
                sq_ref[...] = jnp.zeros_like(sq_ref)

            y = jnp.dot(p_ref[...], w_ref[...], preferred_element_type=jnp.float32)
            y_ref[...] = y.astype(y_ref.dtype)
            _accum(y, sum_ref, sq_ref)

    return kernel


def _make_apply_kernel(mode, relu):
    """Phase 2: out = y*scale+shift [+ shortcut 1x1 conv BN / + residual] [ReLU].
    Elementwise stays in f32 (v5e VPU has no bf16 path); only DMA is narrow."""

    def _affine(y, sc_ref, sh_ref):
        return y.astype(jnp.float32) * sc_ref[...] + sh_ref[...]

    if mode == "conv_shortcut":
        def kernel(y_ref, sc_ref, sh_ref, xs_ref, ws_ref, scs_ref, shs_ref, o_ref):
            out = _affine(y_ref[...], sc_ref, sh_ref)
            s = jnp.dot(xs_ref[...], ws_ref[...], preferred_element_type=jnp.float32)
            out = out + s * scs_ref[...] + shs_ref[...]
            if relu:
                out = jnp.maximum(out, 0.0)
            o_ref[...] = out.astype(o_ref.dtype)
    elif mode == "identity_residual":
        def kernel(y_ref, sc_ref, sh_ref, r_ref, o_ref):
            out = _affine(y_ref[...], sc_ref, sh_ref) + r_ref[...].astype(jnp.float32)
            if relu:
                out = jnp.maximum(out, 0.0)
            o_ref[...] = out.astype(o_ref.dtype)
    else:
        def kernel(y_ref, sc_ref, sh_ref, o_ref):
            out = _affine(y_ref[...], sc_ref, sh_ref)
            if relu:
                out = jnp.maximum(out, 0.0)
            o_ref[...] = out.astype(o_ref.dtype)

    return kernel


# ----------------------------- pallas_call wrappers -------------------------- #

def _conv_stats_call(p, w, tile_m, tiles_per_part, *, shortcut=None,
                     y_dtype, vmem_limit):
    Mp, Kp = p.shape
    Cp = w.shape[1]
    T = tiles_per_part
    grid = (_STATS_PARTS, T)

    def row_map(c, i):
        return (c * T + i, 0)

    const_map = lambda c, i: (0, 0)
    stat_spec = pl.BlockSpec((1, _SUBLANE, Cp), lambda c, i: (c, 0, 0))
    stat_shape = jax.ShapeDtypeStruct((_STATS_PARTS, _SUBLANE, Cp), jnp.float32)

    in_specs = [pl.BlockSpec((tile_m, Kp), row_map),
                pl.BlockSpec((Kp, Cp), const_map)]
    inputs = [p, w]
    out_shape = [jax.ShapeDtypeStruct((Mp, Cp), y_dtype), stat_shape, stat_shape]
    out_specs = [pl.BlockSpec((tile_m, Cp), row_map), stat_spec, stat_spec]
    flops = 2 * Mp * Kp * Cp
    nbytes = (p.size * p.dtype.itemsize + w.size * w.dtype.itemsize
              + Mp * Cp * jnp.dtype(y_dtype).itemsize)

    if shortcut is not None:
        xs, ws = shortcut
        Ksp = xs.shape[1]
        in_specs += [pl.BlockSpec((tile_m, Ksp), row_map),
                     pl.BlockSpec((Ksp, Cp), const_map)]
        inputs += [xs, ws]
        out_shape += [stat_shape, stat_shape]
        out_specs += [stat_spec, stat_spec]
        flops += 2 * Mp * Ksp * Cp
        nbytes += xs.size * xs.dtype.itemsize + ws.size * ws.dtype.itemsize

    return pl.pallas_call(
        _make_stats_kernel(with_shortcut=shortcut is not None),
        out_shape=tuple(out_shape),
        grid_spec=pltpu.PrefetchScalarGridSpec(
            num_scalar_prefetch=0, grid=grid,
            in_specs=in_specs, out_specs=tuple(out_specs)),
        compiler_params=pltpu.CompilerParams(
            dimension_semantics=("parallel", "arbitrary"),
            vmem_limit_bytes=vmem_limit),
        cost_estimate=pl.CostEstimate(flops=int(flops), transcendentals=0,
                                      bytes_accessed=int(nbytes)),
    )(*inputs)


def _bn_apply_call(y, scale, shift, tile_m, *, shortcut=None, residual=None,
                   relu=True, out_dtype=jnp.float32, vmem_limit=None):
    Mp, Cp = y.shape
    grid = (Mp // tile_m,)
    vec_spec = pl.BlockSpec((1, Cp), lambda i: (0, 0))

    def row_spec(k):
        return pl.BlockSpec((tile_m, k), lambda i: (i, 0))

    in_specs = [row_spec(Cp), vec_spec, vec_spec]
    inputs = [y, scale, shift]
    flops = 2 * Mp * Cp
    nbytes = (y.size * y.dtype.itemsize
              + Mp * Cp * jnp.dtype(out_dtype).itemsize)

    if shortcut is not None:
        xs, ws, scs, shs = shortcut
        Ksp = xs.shape[1]
        in_specs += [row_spec(Ksp), pl.BlockSpec((Ksp, Cp), lambda i: (0, 0)),
                     vec_spec, vec_spec]
        inputs += [xs, ws, scs, shs]
        mode = "conv_shortcut"
        flops += 2 * Mp * Ksp * Cp
        nbytes += xs.size * xs.dtype.itemsize + ws.size * ws.dtype.itemsize
    elif residual is not None:
        in_specs += [row_spec(Cp)]
        inputs += [residual]
        mode = "identity_residual"
        nbytes += residual.size * residual.dtype.itemsize
    else:
        mode = "plain"

    return pl.pallas_call(
        _make_apply_kernel(mode, relu),
        out_shape=jax.ShapeDtypeStruct((Mp, Cp), out_dtype),
        grid_spec=pltpu.PrefetchScalarGridSpec(
            num_scalar_prefetch=0, grid=grid,
            in_specs=in_specs,
            out_specs=pl.BlockSpec((tile_m, Cp), lambda i: (i, 0))),
        compiler_params=pltpu.CompilerParams(
            dimension_semantics=("parallel",),
            vmem_limit_bytes=vmem_limit),
        cost_estimate=pl.CostEstimate(flops=int(flops), transcendentals=0,
                                      bytes_accessed=int(nbytes)),
    )(*inputs)


# --------------------------------- host glue --------------------------------- #

def _im2col(x_nhwc, ksize, stride, padding):
    """Rows ordered (n, ho, wo) row-major; cols ordered (kh, kw, c_in)."""
    N, H, W, C = x_nhwc.shape
    xp = jnp.pad(x_nhwc, ((0, 0), (padding, padding), (padding, padding), (0, 0)))
    Ho = (H + 2 * padding - ksize) // stride + 1
    Wo = (W + 2 * padding - ksize) // stride + 1
    cols = []
    for kh in range(ksize):
        for kw in range(ksize):
            cols.append(xp[:, kh:kh + stride * Ho:stride,
                           kw:kw + stride * Wo:stride, :])
    patches = jnp.concatenate(cols, axis=-1)             # (N, Ho, Wo, k*k*C)
    return patches.reshape(N * Ho * Wo, ksize * ksize * C), (Ho, Wo)


def _w_to_mat(w_oihw, dtype):
    """PyTorch conv weight (O, I, kH, kW) -> im2col matmul weight (kH*kW*I, O)."""
    O, I, kH, kW = w_oihw.shape
    return jnp.transpose(w_oihw, (2, 3, 1, 0)).reshape(kH * kW * I, O).astype(dtype)


def _pad2d(a, rows, cols):
    r, c = a.shape
    return jnp.pad(a, ((0, rows - r), (0, cols - c)))


def _finalize_bn(sum_parts, sq_parts, gamma, beta, m_real, cp):
    """Tiny (Cp,) XLA epilogue: combine per-core / per-sublane partials and
    produce BN scale = g*rsqrt(var+eps), shift = b - mean*scale (all f32)."""
    total = jnp.sum(sum_parts, axis=(0, 1))
    total_sq = jnp.sum(sq_parts, axis=(0, 1))
    mean = total / float(m_real)
    var = jnp.maximum(total_sq / float(m_real) - mean * mean, 0.0)
    g = jnp.zeros((cp,), jnp.float32).at[:gamma.shape[0]].set(gamma.astype(jnp.float32))
    b = jnp.zeros((cp,), jnp.float32).at[:beta.shape[0]].set(beta.astype(jnp.float32))
    scale = g * jax.lax.rsqrt(var + _EPS)
    shift = b - mean * scale
    return scale.reshape(1, cp), shift.reshape(1, cp)


def residual_block_forward(x_nchw, params, *, stride, compute_dtype=jnp.bfloat16):
    vmem_limit = _vmem_limit_bytes()
    cdsz = jnp.dtype(compute_dtype).itemsize

    x = jnp.transpose(x_nchw, (0, 2, 3, 1))               # NCHW -> NHWC
    N, H, W, C_in = x.shape
    C_out = params["w1"].shape[0]
    Cp = _round_up(C_out, _LANE)
    xc = x.astype(compute_dtype)

    # ---------------- cnn1: Conv3x3(stride, pad=1) + BN + ReLU ----------------
    p1, (Ho, Wo) = _im2col(xc, 3, stride, 1)
    M = N * Ho * Wo
    K1p = _round_up(p1.shape[1], _LANE)

    stream1 = max((K1p + Cp) * cdsz,                      # stats: patches in + y out
                  2 * Cp * cdsz)                          # apply: y in + y1 out
    resident1 = 2 * K1p * Cp * cdsz + 8 * _SUBLANE * Cp * 4
    tile1, tpp1, Mp1 = _plan_tiles(M, stream1, resident1, vmem_limit)

    p1p = _pad2d(p1, Mp1, K1p).astype(compute_dtype)
    w1p = _pad2d(_w_to_mat(params["w1"], compute_dtype), K1p, Cp)

    y1_raw, s1, q1 = _conv_stats_call(p1p, w1p, tile1, tpp1,
                                      y_dtype=compute_dtype, vmem_limit=vmem_limit)
    sc1, sh1 = _finalize_bn(s1, q1, params["g1"], params["b1"], M, Cp)
    y1 = _bn_apply_call(y1_raw, sc1, sh1, tile1, relu=True,
                        out_dtype=compute_dtype, vmem_limit=vmem_limit)
    y1_nhwc = y1[:M, :C_out].reshape(N, Ho, Wo, C_out)

    # -------------- cnn2: Conv3x3(1, pad=1) + BN (+ shortcut) + ReLU --------------
    p2, _ = _im2col(y1_nhwc, 3, 1, 1)
    K2p = _round_up(p2.shape[1], _LANE)

    if stride != 1 or C_in != C_out:
        # Conv1x1(stride) + BN shortcut, fused into the cnn2 stats + apply kernels.
        Ksp = _round_up(C_in, _LANE)
        stream2 = max((K2p + Ksp + Cp) * cdsz,                       # stats pass
                      (Cp + Ksp) * cdsz + Cp * 4)                    # apply pass
        resident2 = 2 * (K2p + Ksp) * Cp * cdsz + 16 * _SUBLANE * Cp * 4
        tile2, tpp2, Mp2 = _plan_tiles(M, stream2, resident2, vmem_limit)

        p2p = _pad2d(p2, Mp2, K2p).astype(compute_dtype)
        w2p = _pad2d(_w_to_mat(params["w2"], compute_dtype), K2p, Cp)
        xs = xc[:, ::stride, ::stride, :][:, :Ho, :Wo, :].reshape(M, C_in)
        xsp = _pad2d(xs, Mp2, Ksp)
        wsp = _pad2d(_w_to_mat(params["ws"], compute_dtype), Ksp, Cp)

        y2_raw, s2, q2, ss, qs = _conv_stats_call(
            p2p, w2p, tile2, tpp2, shortcut=(xsp, wsp),
            y_dtype=compute_dtype, vmem_limit=vmem_limit)
        sc2, sh2 = _finalize_bn(s2, q2, params["g2"], params["b2"], M, Cp)
        scs, shs = _finalize_bn(ss, qs, params["gs"], params["bs"], M, Cp)
        out = _bn_apply_call(y2_raw, sc2, sh2, tile2,
                             shortcut=(xsp, wsp, scs, shs), relu=True,
                             out_dtype=jnp.float32, vmem_limit=vmem_limit)
    else:
        # Identity shortcut: rows share the (n, h, w) row-major order of p2.
        stream2 = max((K2p + Cp) * cdsz, 2 * Cp * cdsz + Cp * 4)
        resident2 = 2 * K2p * Cp * cdsz + 8 * _SUBLANE * Cp * 4
        tile2, tpp2, Mp2 = _plan_tiles(M, stream2, resident2, vmem_limit)

        p2p = _pad2d(p2, Mp2, K2p).astype(compute_dtype)
        w2p = _pad2d(_w_to_mat(params["w2"], compute_dtype), K2p, Cp)
        rp = _pad2d(xc.reshape(M, C_in), Mp2, Cp)          # residual in compute dtype

        y2_raw, s2, q2 = _conv_stats_call(p2p, w2p, tile2, tpp2,
                                          y_dtype=compute_dtype,
                                          vmem_limit=vmem_limit)
        sc2, sh2 = _finalize_bn(s2, q2, params["g2"], params["b2"], M, Cp)
        out = _bn_apply_call(y2_raw, sc2, sh2, tile2, residual=rp, relu=True,
                             out_dtype=jnp.float32, vmem_limit=vmem_limit)

    out_nhwc = out[:M, :C_out].reshape(N, Ho, Wo, C_out)
    return jnp.transpose(out_nhwc, (0, 3, 1, 2))           # back to NCHW


# ----------------------------- pure-JAX reference ----------------------------- #

def _ref_conv(x_nchw, w_oihw, stride, padding):
    return jax.lax.conv_general_dilated(
        x_nchw, w_oihw, window_strides=(stride, stride),
        padding=[(padding, padding), (padding, padding)],
        dimension_numbers=("NCHW", "OIHW", "NCHW"))


def _ref_bn(x_nchw, gamma, beta):
    mean = jnp.mean(x_nchw, axis=(0, 2, 3), keepdims=True)
    var = jnp.mean((x_nchw - mean) ** 2, axis=(0, 2, 3), keepdims=True)
    return ((x_nchw - mean) * jax.lax.rsqrt(var + _EPS)
            * gamma.reshape(1, -1, 1, 1) + beta.reshape(1, -1, 1, 1))


def reference_forward(x, params, stride):
    y = jnp.maximum(_ref_bn(_ref_conv(x, params["w1"], stride, 1),
                            params["g1"], params["b1"]), 0.0)
    y = _ref_bn(_ref_conv(y, params["w2"], 1, 1), params["g2"], params["b2"])
    C_in, C_out = x.shape[1], params["w1"].shape[0]
    if stride != 1 or C_in != C_out:
        s = _ref_bn(_ref_conv(x, params["ws"], stride, 0), params["gs"], params["bs"])
    else:
        s = x
    return jnp.maximum(y + s, 0.0)


# ------------------------------------ main ------------------------------------ #

def _make_params(key, c_in, c_out, with_shortcut):
    ks = jax.random.split(key, 9)
    p = dict(
        w1=0.1 * jax.random.normal(ks[0], (c_out, c_in, 3, 3), jnp.float32),
        g1=1.0 + 0.1 * jax.random.normal(ks[1], (c_out,), jnp.float32),
        b1=0.1 * jax.random.normal(ks[2], (c_out,), jnp.float32),
        w2=0.1 * jax.random.normal(ks[3], (c_out, c_out, 3, 3), jnp.float32),
        g2=1.0 + 0.1 * jax.random.normal(ks[4], (c_out,), jnp.float32),
        b2=0.1 * jax.random.normal(ks[5], (c_out,), jnp.float32),
    )
    if with_shortcut:
        p.update(
            ws=0.1 * jax.random.normal(ks[6], (c_out, c_in, 1, 1), jnp.float32),
            gs=1.0 + 0.1 * jax.random.normal(ks[7], (c_out,), jnp.float32),
            bs=0.1 * jax.random.normal(ks[8], (c_out,), jnp.float32),
        )
    return p


if __name__ == "__main__":
    key = jax.random.PRNGKey(0)
    k_x1, k_p1, k_x2, k_p2 = jax.random.split(key, 4)

    # Case 1: stride=2, C_in != C_out  ->  fused conv+BN shortcut path.
    N, C_in, H, W = 2, 4, 16, 16
    C_out, stride1 = 8, 2
    x1 = jax.random.normal(k_x1, (N, C_in, H, W), jnp.float32)
    params1 = _make_params(k_p1, C_in, C_out, with_shortcut=True)

    # Case 2: stride=1, C_in == C_out  ->  identity shortcut path.
    C2 = 8
    x2 = jax.random.normal(k_x2, (N, C2, H, W), jnp.float32)
    params2 = _make_params(k_p2, C2, C2, with_shortcut=False)

    cases = [
        ("conv_shortcut", x1, params1, stride1, (N, C_out, H // stride1, W // stride1)),
        ("identity", x2, params2, 1, (N, C2, H, W)),
    ]

    for name, x, params, s, expect_shape in cases:
        ref = reference_forward(x, params, s)

        # Exact-logic check: f32 operands, tight tolerance vs f32 reference.
        fwd_f32 = jax.jit(functools.partial(residual_block_forward, stride=s,
                                            compute_dtype=jnp.float32))
        out_f32 = jax.block_until_ready(fwd_f32(x, params))
        assert out_f32.shape == expect_shape, (name, out_f32.shape)
        err_f32 = float(jnp.max(jnp.abs(out_f32 - ref)))
        assert jnp.allclose(out_f32, ref, atol=1e-3, rtol=1e-3), (name, "f32", err_f32)

        # Production path: bf16 operands / f32 accumulation+stats. Looser
        # tolerance accounts only for bf16 input/intermediate rounding; kernel
        # logic is validated by the f32 run above.
        fwd_bf16 = jax.jit(functools.partial(residual_block_forward, stride=s,
                                             compute_dtype=jnp.bfloat16))
        out_bf16 = jax.block_until_ready(fwd_bf16(x, params))
        assert out_bf16.shape == expect_shape, (name, out_bf16.shape)
        err_bf16 = float(jnp.max(jnp.abs(out_bf16 - ref)))
        assert bool(jnp.all(jnp.isfinite(out_bf16))), (name, "bf16 non-finite")
        assert jnp.allclose(out_bf16, ref, atol=1e-1, rtol=1e-1), (name, "bf16", err_bf16)

    print("KERNEL_OK")
</pallas_src>

<mosaic_0001>
module attributes {stable_mosaic.version = 11 : i64} {
  func.func @kernel(%arg0: i32, %arg1: i32, %arg2: memref<64x128xf32, #tpu.memory_space<vmem>>, %arg3: memref<128x128xf32, #tpu.memory_space<vmem>>, %arg4: memref<64x128xf32, #tpu.memory_space<vmem>>, %arg5: memref<1x8x128xf32, #tpu.memory_space<vmem>>, %arg6: memref<1x8x128xf32, #tpu.memory_space<vmem>>) attributes {dimension_semantics = [#tpu.dimension_semantics<parallel>, #tpu.dimension_semantics<arbitrary>], iteration_bounds = array<i64: 2, 1>, scalar_prefetch = 0 : i64, scratch_operands = 0 : i64, tpu.core_type = #tpu.core_type<tc>, window_params = [{transform_indices = @transform_0, window_bounds = array<i64: 64, 128>}, {pipeline_mode = #tpu.pipeline_mode<synchronous>, transform_indices = @transform_1, window_bounds = array<i64: 128, 128>}, {transform_indices = @transform_2, window_bounds = array<i64: 64, 128>}, {transform_indices = @transform_3, window_bounds = array<i64: 1, 8, 128>}, {transform_indices = @transform_4, window_bounds = array<i64: 1, 8, 128>}]} {
    %c0_i32 = arith.constant 0 : i32
    %0 = arith.cmpi eq, %arg1, %c0_i32 : i32
    %1 = arith.extui %0 : i1 to i32
    %c0_i32_0 = arith.constant 0 : i32
    %2 = arith.cmpi ne, %1, %c0_i32_0 : i32
    scf.if %2 {
      %cst_20 = arith.constant 0.000000e+00 : f32
      %19 = vector.broadcast %cst_20 : f32 to vector<1x8x128xf32>
      %c0_21 = arith.constant 0 : index
      %c0_22 = arith.constant 0 : index
      %c0_23 = arith.constant 0 : index
      %20 = vector.load %arg5[%c0_21, %c0_22, %c0_23] : memref<1x8x128xf32, #tpu.memory_space<vmem>>, vector<1x8x128xf32>
      tpu.vector_store %arg5[%c0_21, %c0_22, %c0_23], %19 {strides = array<i32>} : memref<1x8x128xf32, #tpu.memory_space<vmem>>, vector<1x8x128xf32>,
      %cst_24 = arith.constant 0.000000e+00 : f32
      %21 = vector.broadcast %cst_24 : f32 to vector<1x8x128xf32>
      %c0_25 = arith.constant 0 : index
      %c0_26 = arith.constant 0 : index
      %c0_27 = arith.constant 0 : index
      %22 = vector.load %arg6[%c0_25, %c0_26, %c0_27] : memref<1x8x128xf32, #tpu.memory_space<vmem>>, vector<1x8x128xf32>
      tpu.vector_store %arg6[%c0_25, %c0_26, %c0_27], %21 {strides = array<i32>} : memref<1x8x128xf32, #tpu.memory_space<vmem>>, vector<1x8x128xf32>,
    } else {
    }
    %c0 = arith.constant 0 : index
    %c0_1 = arith.constant 0 : index
    %3 = vector.load %arg2[%c0, %c0_1] : memref<64x128xf32, #tpu.memory_space<vmem>>, vector<64x128xf32>
    %c0_2 = arith.constant 0 : index
    %c0_3 = arith.constant 0 : index
    %4 = vector.load %arg3[%c0_2, %c0_3] : memref<128x128xf32, #tpu.memory_space<vmem>>, vector<128x128xf32>
    %cst = arith.constant dense<0.000000e+00> : vector<64x128xf32>
    %5 = tpu.matmul %3, %4, %cst {dimension_numbers = #tpu.dot_dimension_numbers<[1], [0], [0], [1], [0, 0, 1, 1], [], []>} : vector<64x128xf32>, vector<128x128xf32>, vector<64x128xf32> -> vector<64x128xf32>
    %c0_4 = arith.constant 0 : index
    %c0_5 = arith.constant 0 : index
    %6 = vector.load %arg4[%c0_4, %c0_5] : memref<64x128xf32, #tpu.memory_space<vmem>>, vector<64x128xf32>
    tpu.vector_store %arg4[%c0_4, %c0_5], %5 {strides = array<i32>} : memref<64x128xf32, #tpu.memory_space<vmem>>, vector<64x128xf32>,
    %7 = vector.shape_cast %5 : vector<64x128xf32> to vector<8x8x128xf32>
    %c0_6 = arith.constant 0 : index
    %c0_7 = arith.constant 0 : index
    %c0_8 = arith.constant 0 : index
    %8 = vector.load %arg5[%c0_6, %c0_7, %c0_8] : memref<1x8x128xf32, #tpu.memory_space<vmem>>, vector<1x8x128xf32>
    %cst_9 = arith.constant dense<0.000000e+00> : vector<8x128xf32>
    %9 = vector.multi_reduction <add>, %7, %cst_9 [0] : vector<8x8x128xf32> to vector<8x128xf32>
    %10 = vector.shape_cast %9 : vector<8x128xf32> to vector<1x8x128xf32>
    %11 = arith.addf %8, %10 : vector<1x8x128xf32>
    %c0_10 = arith.constant 0 : index
    %c0_11 = arith.constant 0 : index
    %c0_12 = arith.constant 0 : index
    %12 = vector.load %arg5[%c0_10, %c0_11, %c0_12] : memref<1x8x128xf32, #tpu.memory_space<vmem>>, vector<1x8x128xf32>
    tpu.vector_store %arg5[%c0_10, %c0_11, %c0_12], %11 {strides = array<i32>} : memref<1x8x128xf32, #tpu.memory_space<vmem>>, vector<1x8x128xf32>,
    %c0_13 = arith.constant 0 : index
    %c0_14 = arith.constant 0 : index
    %c0_15 = arith.constant 0 : index
    %13 = vector.load %arg6[%c0_13, %c0_14, %c0_15] : memref<1x8x128xf32, #tpu.memory_space<vmem>>, vector<1x8x128xf32>
    %14 = arith.mulf %7, %7 : vector<8x8x128xf32>
    %cst_16 = arith.constant dense<0.000000e+00> : vector<8x128xf32>
    %15 = vector.multi_reduction <add>, %14, %cst_16 [0] : vector<8x8x128xf32> to vector<8x128xf32>
    %16 = vector.shape_cast %15 : vector<8x128xf32> to vector<1x8x128xf32>
    %17 = arith.addf %13, %16 : vector<1x8x128xf32>
    %c0_17 = arith.constant 0 : index
    %c0_18 = arith.constant 0 : index
    %c0_19 = arith.constant 0 : index
    %18 = vector.load %arg6[%c0_17, %c0_18, %c0_19] : memref<1x8x128xf32, #tpu.memory_space<vmem>>, vector<1x8x128xf32>
    tpu.vector_store %arg6[%c0_17, %c0_18, %c0_19], %17 {strides = array<i32>} : memref<1x8x128xf32, #tpu.memory_space<vmem>>, vector<1x8x128xf32>,
    return
  }
  func.func @transform_0(%arg0: i32, %arg1: i32) -> (i32, i32) {
    %c1_i32 = arith.constant 1 : i32
    %0 = arith.muli %arg0, %c1_i32 : i32
    %1 = arith.addi %0, %arg1 : i32
    %c0_i32 = arith.constant 0 : i32
    %c0_i32_0 = arith.constant 0 : i32
    return %1, %c0_i32 : i32, i32
  }
  func.func @transform_1(%arg0: i32, %arg1: i32) -> (i32, i32) {
    %c0_i32 = arith.constant 0 : i32
    %c0_i32_0 = arith.constant 0 : i32
    %c0_i32_1 = arith.constant 0 : i32
    return %c0_i32, %c0_i32_0 : i32, i32
  }
  func.func @transform_2(%arg0: i32, %arg1: i32) -> (i32, i32) {
    %c1_i32 = arith.constant 1 : i32
    %0 = arith.muli %arg0, %c1_i32 : i32
    %1 = arith.addi %0, %arg1 : i32
    %c0_i32 = arith.constant 0 : i32
    %c0_i32_0 = arith.constant 0 : i32
    return %1, %c0_i32 : i32, i32
  }
  func.func @transform_3(%arg0: i32, %arg1: i32) -> (i32, i32, i32) {
    %c0_i32 = arith.constant 0 : i32
    %c0_i32_0 = arith.constant 0 : i32
    %c0_i32_1 = arith.constant 0 : i32
    return %arg0, %c0_i32, %c0_i32_0 : i32, i32, i32
  }
  func.func @transform_4(%arg0: i32, %arg1: i32) -> (i32, i32, i32) {
    %c0_i32 = arith.constant 0 : i32
    %c0_i32_0 = arith.constant 0 : i32
    %c0_i32_1 = arith.constant 0 : i32
    return %arg0, %c0_i32, %c0_i32_0 : i32, i32, i32
  }
}

module attributes {stable_mosaic.version = 11 : i64} {
  func.func @kernel(%arg0: i32, %arg1: memref<64x128xf32, #tpu.memory_space<vmem>>, %arg2: memref<1x128xf32, #tpu.memory_space<vmem>>, %arg3: memref<1x128xf32, #tpu.memory_space<vmem>>, %arg4: memref<64x128xf32, #tpu.memory_space<vmem>>) attributes {dimension_semantics = [#tpu.dimension_semantics<parallel>], iteration_bounds = array<i64: 2>, scalar_prefetch = 0 : i64, scratch_operands = 0 : i64, tpu.core_type = #tpu.core_type<tc>, window_params = [{transform_indices = @transform_0, window_bounds = array<i64: 64, 128>}, {pipeline_mode = #tpu.pipeline_mode<synchronous>, transform_indices = @transform_1, window_bounds = array<i64: 1, 128>}, {pipeline_mode = #tpu.pipeline_mode<synchronous>, transform_indices = @transform_2, window_bounds = array<i64: 1, 128>}, {transform_indices = @transform_3, window_bounds = array<i64: 64, 128>}]} {
    %c0 = arith.constant 0 : index
    %c0_0 = arith.constant 0 : index
    %0 = vector.load %arg1[%c0, %c0_0] : memref<64x128xf32, #tpu.memory_space<vmem>>, vector<64x128xf32>
    %c0_1 = arith.constant 0 : index
    %c0_2 = arith.constant 0 : index
    %1 = vector.load %arg2[%c0_1, %c0_2] : memref<1x128xf32, #tpu.memory_space<vmem>>, vector<1x128xf32>
    %2 = vector.broadcast %1 : vector<1x128xf32> to vector<64x128xf32>
    %3 = arith.mulf %0, %2 : vector<64x128xf32>
    %c0_3 = arith.constant 0 : index
    %c0_4 = arith.constant 0 : index
    %4 = vector.load %arg3[%c0_3, %c0_4] : memref<1x128xf32, #tpu.memory_space<vmem>>, vector<1x128xf32>
    %5 = vector.broadcast %4 : vector<1x128xf32> to vector<64x128xf32>
    %6 = arith.addf %3, %5 : vector<64x128xf32>
    %cst = arith.constant 0.000000e+00 : f32
    %7 = vector.broadcast %cst : f32 to vector<64x128xf32>
    %8 = arith.maximumf %6, %7 : vector<64x128xf32>
    %c0_5 = arith.constant 0 : index
    %c0_6 = arith.constant 0 : index
    %9 = vector.load %arg4[%c0_5, %c0_6] : memref<64x128xf32, #tpu.memory_space<vmem>>, vector<64x128xf32>
    tpu.vector_store %arg4[%c0_5, %c0_6], %8 {strides = array<i32>} : memref<64x128xf32, #tpu.memory_space<vmem>>, vector<64x128xf32>,
    return
  }
  func.func @transform_0(%arg0: i32) -> (i32, i32) {
    %c0_i32 = arith.constant 0 : i32
    %c0_i32_0 = arith.constant 0 : i32
    return %arg0, %c0_i32 : i32, i32
  }
  func.func @transform_1(%arg0: i32) -> (i32, i32) {
    %c0_i32 = arith.constant 0 : i32
    %c0_i32_0 = arith.constant 0 : i32
    %c0_i32_1 = arith.constant 0 : i32
    return %c0_i32, %c0_i32_0 : i32, i32
  }
  func.func @transform_2(%arg0: i32) -> (i32, i32) {
    %c0_i32 = arith.constant 0 : i32
    %c0_i32_0 = arith.constant 0 : i32
    %c0_i32_1 = arith.constant 0 : i32
    return %c0_i32, %c0_i32_0 : i32, i32
  }
  func.func @transform_3(%arg0: i32) -> (i32, i32) {
    %c0_i32 = arith.constant 0 : i32
    %c0_i32_0 = arith.constant 0 : i32
    return %arg0, %c0_i32 : i32, i32
  }
}

module attributes {stable_mosaic.version = 11 : i64} {
  func.func @kernel(%arg0: i32, %arg1: memref<64x128xf32, #tpu.memory_space<vmem>>, %arg2: memref<1x128xf32, #tpu.memory_space<vmem>>, %arg3: memref<1x128xf32, #tpu.memory_space<vmem>>, %arg4: memref<64x128xf32, #tpu.memory_space<vmem>>, %arg5: memref<128x128xf32, #tpu.memory_space<vmem>>, %arg6: memref<1x128xf32, #tpu.memory_space<vmem>>, %arg7: memref<1x128xf32, #tpu.memory_space<vmem>>, %arg8: memref<64x128xf32, #tpu.memory_space<vmem>>) attributes {dimension_semantics = [#tpu.dimension_semantics<parallel>], iteration_bounds = array<i64: 2>, scalar_prefetch = 0 : i64, scratch_operands = 0 : i64, tpu.core_type = #tpu.core_type<tc>, window_params = [{transform_indices = @transform_0, window_bounds = array<i64: 64, 128>}, {pipeline_mode = #tpu.pipeline_mode<synchronous>, transform_indices = @transform_1, window_bounds = array<i64: 1, 128>}, {pipeline_mode = #tpu.pipeline_mode<synchronous>, transform_indices = @transform_2, window_bounds = array<i64: 1, 128>}, {transform_indices = @transform_3, window_bounds = array<i64: 64, 128>}, {pipeline_mode = #tpu.pipeline_mode<synchronous>, transform_indices = @transform_4, window_bounds = array<i64: 128, 128>}, {pipeline_mode = #tpu.pipeline_mode<synchronous>, transform_indices = @transform_5, window_bounds = array<i64: 1, 128>}, {pipeline_mode = #tpu.pipeline_mode<synchronous>, transform_indices = @transform_6, window_bounds = array<i64: 1, 128>}, {transform_indices = @transform_7, window_bounds = array<i64: 64, 128>}]} {
    %c0 = arith.constant 0 : index
    %c0_0 = arith.constant 0 : index
    %0 = vector.load %arg1[%c0, %c0_0] : memref<64x128xf32, #tpu.memory_space<vmem>>, vector<64x128xf32>
    %c0_1 = arith.constant 0 : index
    %c0_2 = arith.constant 0 : index
    %1 = vector.load %arg2[%c0_1, %c0_2] : memref<1x128xf32, #tpu.memory_space<vmem>>, vector<1x128xf32>
    %2 = vector.broadcast %1 : vector<1x128xf32> to vector<64x128xf32>
    %3 = arith.mulf %0, %2 : vector<64x128xf32>
    %c0_3 = arith.constant 0 : index
    %c0_4 = arith.constant 0 : index
    %4 = vector.load %arg3[%c0_3, %c0_4] : memref<1x128xf32, #tpu.memory_space<vmem>>, vector<1x128xf32>
    %5 = vector.broadcast %4 : vector<1x128xf32> to vector<64x128xf32>
    %6 = arith.addf %3, %5 : vector<64x128xf32>
    %c0_5 = arith.constant 0 : index
    %c0_6 = arith.constant 0 : index
    %7 = vector.load %arg4[%c0_5, %c0_6] : memref<64x128xf32, #tpu.memory_space<vmem>>, vector<64x128xf32>
    %c0_7 = arith.constant 0 : index
    %c0_8 = arith.constant 0 : index
    %8 = vector.load %arg5[%c0_7, %c0_8] : memref<128x128xf32, #tpu.memory_space<vmem>>, vector<128x128xf32>
    %cst = arith.constant dense<0.000000e+00> : vector<64x128xf32>
    %9 = tpu.matmul %7, %8, %cst {dimension_numbers = #tpu.dot_dimension_numbers<[1], [0], [0], [1], [0, 0, 1, 1], [], []>} : vector<64x128xf32>, vector<128x128xf32>, vector<64x128xf32> -> vector<64x128xf32>
    %c0_9 = arith.constant 0 : index
    %c0_10 = arith.constant 0 : index
    %10 = vector.load %arg6[%c0_9, %c0_10] : memref<1x128xf32, #tpu.memory_space<vmem>>, vector<1x128xf32>
    %11 = vector.broadcast %10 : vector<1x128xf32> to vector<64x128xf32>
    %12 = arith.mulf %9, %11 : vector<64x128xf32>
    %13 = arith.addf %6, %12 : vector<64x128xf32>
    %c0_11 = arith.constant 0 : index
    %c0_12 = arith.constant 0 : index
    %14 = vector.load %arg7[%c0_11, %c0_12] : memref<1x128xf32, #tpu.memory_space<vmem>>, vector<1x128xf32>
    %15 = vector.broadcast %14 : vector<1x128xf32> to vector<64x128xf32>
    %16 = arith.addf %13, %15 : vector<64x128xf32>
    %cst_13 = arith.constant 0.000000e+00 : f32
    %17 = vector.broadcast %cst_13 : f32 to vector<64x128xf32>
    %18 = arith.maximumf %16, %17 : vector<64x128xf32>
    %c0_14 = arith.constant 0 : index
    %c0_15 = arith.constant 0 : index
    %19 = vector.load %arg8[%c0_14, %c0_15] : memref<64x128xf32, #tpu.memory_space<vmem>>, vector<64x128xf32>
    tpu.vector_store %arg8[%c0_14, %c0_15], %18 {strides = array<i32>} : memref<64x128xf32, #tpu.memory_space<vmem>>, vector<64x128xf32>,
    return
  }
  func.func @transform_0(%arg0: i32) -> (i32, i32) {
    %c0_i32 = arith.constant 0 : i32
    %c0_i32_0 = arith.constant 0 : i32
    return %arg0, %c0_i32 : i32, i32
  }
  func.func @transform_1(%arg0: i32) -> (i32, i32) {
    %c0_i32 = arith.constant 0 : i32
    %c0_i32_0 = arith.constant 0 : i32
    %c0_i32_1 = arith.constant 0 : i32
    return %c0_i32, %c0_i32_0 : i32, i32
  }
  func.func @transform_2(%arg0: i32) -> (i32, i32) {
    %c0_i32 = arith.constant 0 : i32
    %c0_i32_0 = arith.constant 0 : i32
    %c0_i32_1 = arith.constant 0 : i32
    return %c0_i32, %c0_i32_0 : i32, i32
  }
  func.func @transform_3(%arg0: i32) -> (i32, i32) {
    %c0_i32 = arith.constant 0 : i32
    %c0_i32_0 = arith.constant 0 : i32
    return %arg0, %c0_i32 : i32, i32
  }
  func.func @transform_4(%arg0: i32) -> (i32, i32) {
    %c0_i32 = arith.constant 0 : i32
    %c0_i32_0 = arith.constant 0 : i32
    %c0_i32_1 = arith.constant 0 : i32
    return %c0_i32, %c0_i32_0 : i32, i32
  }
  func.func @transform_5(%arg0: i32) -> (i32, i32) {
    %c0_i32 = arith.constant 0 : i32
    %c0_i32_0 = arith.constant 0 : i32
    %c0_i32_1 = arith.constant 0 : i32
    return %c0_i32, %c0_i32_0 : i32, i32
  }
  func.func @transform_6(%arg0: i32) -> (i32, i32) {
    %c0_i32 = arith.constant 0 : i32
    %c0_i32_0 = arith.constant 0 : i32
    %c0_i32_1 = arith.constant 0 : i32
    return %c0_i32, %c0_i32_0 : i32, i32
  }
  func.func @transform_7(%arg0: i32) -> (i32, i32) {
    %c0_i32 = arith.constant 0 : i32
    %c0_i32_0 = arith.constant 0 : i32
    return %arg0, %c0_i32 : i32, i32
  }
}

module attributes {stable_mosaic.version = 11 : i64} {
  func.func @kernel(%arg0: i32, %arg1: i32, %arg2: memref<64x128xf32, #tpu.memory_space<vmem>>, %arg3: memref<128x128xf32, #tpu.memory_space<vmem>>, %arg4: memref<64x128xf32, #tpu.memory_space<vmem>>, %arg5: memref<128x128xf32, #tpu.memory_space<vmem>>, %arg6: memref<64x128xf32, #tpu.memory_space<vmem>>, %arg7: memref<1x8x128xf32, #tpu.memory_space<vmem>>, %arg8: memref<1x8x128xf32, #tpu.memory_space<vmem>>, %arg9: memref<1x8x128xf32, #tpu.memory_space<vmem>>, %arg10: memref<1x8x128xf32, #tpu.memory_space<vmem>>) attributes {dimension_semantics = [#tpu.dimension_semantics<parallel>, #tpu.dimension_semantics<arbitrary>], iteration_bounds = array<i64: 2, 1>, scalar_prefetch = 0 : i64, scratch_operands = 0 : i64, tpu.core_type = #tpu.core_type<tc>, window_params = [{transform_indices = @transform_0, window_bounds = array<i64: 64, 128>}, {pipeline_mode = #tpu.pipeline_mode<synchronous>, transform_indices = @transform_1, window_bounds = array<i64: 128, 128>}, {transform_indices = @transform_2, window_bounds = array<i64: 64, 128>}, {pipeline_mode = #tpu.pipeline_mode<synchronous>, transform_indices = @transform_3, window_bounds = array<i64: 128, 128>}, {transform_indices = @transform_4, window_bounds = array<i64: 64, 128>}, {transform_indices = @transform_5, window_bounds = array<i64: 1, 8, 128>}, {transform_indices = @transform_6, window_bounds = array<i64: 1, 8, 128>}, {transform_indices = @transform_7, window_bounds = array<i64: 1, 8, 128>}, {transform_indices = @transform_8, window_bounds = array<i64: 1, 8, 128>}]} {
    %c0_i32 = arith.constant 0 : i32
    %0 = arith.cmpi eq, %arg1, %c0_i32 : i32
    %1 = arith.extui %0 : i1 to i32
    %c0_i32_0 = arith.constant 0 : i32
    %2 = arith.cmpi ne, %1, %c0_i32_0 : i32
    scf.if %2 {
      %cst_39 = arith.constant 0.000000e+00 : f32
      %34 = vector.broadcast %cst_39 : f32 to vector<1x8x128xf32>
      %c0_40 = arith.constant 0 : index
      %c0_41 = arith.constant 0 : index
      %c0_42 = arith.constant 0 : index
      %35 = vector.load %arg7[%c0_40, %c0_41, %c0_42] : memref<1x8x128xf32, #tpu.memory_space<vmem>>, vector<1x8x128xf32>
      tpu.vector_store %arg7[%c0_40, %c0_41, %c0_42], %34 {strides = array<i32>} : memref<1x8x128xf32, #tpu.memory_space<vmem>>, vector<1x8x128xf32>,
      %cst_43 = arith.constant 0.000000e+00 : f32
      %36 = vector.broadcast %cst_43 : f32 to vector<1x8x128xf32>
      %c0_44 = arith.constant 0 : index
      %c0_45 = arith.constant 0 : index
      %c0_46 = arith.constant 0 : index
      %37 = vector.load %arg8[%c0_44, %c0_45, %c0_46] : memref<1x8x128xf32, #tpu.memory_space<vmem>>, vector<1x8x128xf32>
      tpu.vector_store %arg8[%c0_44, %c0_45, %c0_46], %36 {strides = array<i32>} : memref<1x8x128xf32, #tpu.memory_space<vmem>>, vector<1x8x128xf32>,
      %cst_47 = arith.constant 0.000000e+00 : f32
      %38 = vector.broadcast %cst_47 : f32 to vector<1x8x128xf32>
      %c0_48 = arith.constant 0 : index
      %c0_49 = arith.constant 0 : index
      %c0_50 = arith.constant 0 : index
      %39 = vector.load %arg9[%c0_48, %c0_49, %c0_50] : memref<1x8x128xf32, #tpu.memory_space<vmem>>, vector<1x8x128xf32>
      tpu.vector_store %arg9[%c0_48, %c0_49, %c0_50], %38 {strides = array<i32>} : memref<1x8x128xf32, #tpu.memory_space<vmem>>, vector<1x8x128xf32>,
      %cst_51 = arith.constant 0.000000e+00 : f32
      %40 = vector.broadcast %cst_51 : f32 to vector<1x8x128xf32>
      %c0_52 = arith.constant 0 : index
      %c0_53 = arith.constant 0 : index
      %c0_54 = arith.constant 0 : index
      %41 = vector.load %arg10[%c0_52, %c0_53, %c0_54] : memref<1x8x128xf32, #tpu.memory_space<vmem>>, vector<1x8x128xf32>
      tpu.vector_store %arg10[%c0_52, %c0_53, %c0_54], %40 {strides = array<i32>} : memref<1x8x128xf32, #tpu.memory_space<vmem>>, vector<1x8x128xf32>,
    } else {
    }
    %c0 = arith.constant 0 : index
    %c0_1 = arith.constant 0 : index
    %3 = vector.load %arg2[%c0, %c0_1] : memref<64x128xf32, #tpu.memory_space<vmem>>, vector<64x128xf32>
    %c0_2 = arith.constant 0 : index
    %c0_3 = arith.constant 0 : index
    %4 = vector.load %arg3[%c0_2, %c0_3] : memref<128x128xf32, #tpu.memory_space<vmem>>, vector<128x128xf32>
    %cst = arith.constant dense<0.000000e+00> : vector<64x128xf32>
    %5 = tpu.matmul %3, %4, %cst {dimension_numbers = #tpu.dot_dimension_numbers<[1], [0], [0], [1], [0, 0, 1, 1], [], []>} : vector<64x128xf32>, vector<128x128xf32>, vector<64x128xf32> -> vector<64x128xf32>
    %c0_4 = arith.constant 0 : index
    %c0_5 = arith.constant 0 : index
    %6 = vector.load %arg6[%c0_4, %c0_5] : memref<64x128xf32, #tpu.memory_space<vmem>>, vector<64x128xf32>
    tpu.vector_store %arg6[%c0_4, %c0_5], %5 {strides = array<i32>} : memref<64x128xf32, #tpu.memory_space<vmem>>, vector<64x128xf32>,
    %7 = vector.shape_cast %5 : vector<64x128xf32> to vector<8x8x128xf32>
    %c0_6 = arith.constant 0 : index
    %c0_7 = arith.constant 0 : index
    %c0_8 = arith.constant 0 : index
    %8 = vector.load %arg7[%c0_6, %c0_7, %c0_8] : memref<1x8x128xf32, #tpu.memory_space<vmem>>, vector<1x8x128xf32>
    %cst_9 = arith.constant dense<0.000000e+00> : vector<8x128xf32>
    %9 = vector.multi_reduction <add>, %7, %cst_9 [0] : vector<8x8x128xf32> to vector<8x128xf32>
    %10 = vector.shape_cast %9 : vector<8x128xf32> to vector<1x8x128xf32>
    %11 = arith.addf %8, %10 : vector<1x8x128xf32>
    %c0_10 = arith.constant 0 : index
    %c0_11 = arith.constant 0 : index
    %c0_12 = arith.constant 0 : index
    %12 = vector.load %arg7[%c0_10, %c0_11, %c0_12] : memref<1x8x128xf32, #tpu.memory_space<vmem>>, vector<1x8x128xf32>
    tpu.vector_store %arg7[%c0_10, %c0_11, %c0_12], %11 {strides = array<i32>} : memref<1x8x128xf32, #tpu.memory_space<vmem>>, vector<1x8x128xf32>,
    %c0_13 = arith.constant 0 : index
    %c0_14 = arith.constant 0 : index
    %c0_15 = arith.constant 0 : index
    %13 = vector.load %arg8[%c0_13, %c0_14, %c0_15] : memref<1x8x128xf32, #tpu.memory_space<vmem>>, vector<1x8x128xf32>
    %14 = arith.mulf %7, %7 : vector<8x8x128xf32>
    %cst_16 = arith.constant dense<0.000000e+00> : vector<8x128xf32>
    %15 = vector.multi_reduction <add>, %14, %cst_16 [0] : vector<8x8x128xf32> to vector<8x128xf32>
    %16 = vector.shape_cast %15 : vector<8x128xf32> to vector<1x8x128xf32>
    %17 = arith.addf %13, %16 : vector<1x8x128xf32>
    %c0_17 = arith.constant 0 : index
    %c0_18 = arith.constant 0 : index
    %c0_19 = arith.constant 0 : index
    %18 = vector.load %arg8[%c0_17, %c0_18, %c0_19] : memref<1x8x128xf32, #tpu.memory_space<vmem>>, vector<1x8x128xf32>
    tpu.vector_store %arg8[%c0_17, %c0_18, %c0_19], %17 {strides = array<i32>} : memref<1x8x128xf32, #tpu.memory_space<vmem>>, vector<1x8x128xf32>,
    %c0_20 = arith.constant 0 : index
    %c0_21 = arith.constant 0 : index
    %19 = vector.load %arg4[%c0_20, %c0_21] : memref<64x128xf32, #tpu.memory_space<vmem>>, vector<64x128xf32>
    %c0_22 = arith.constant 0 : index
    %c0_23 = arith.constant 0 : index
    %20 = vector.load %arg5[%c0_22, %c0_23] : memref<128x128xf32, #tpu.memory_space<vmem>>, vector<128x128xf32>
    %cst_24 = arith.constant dense<0.000000e+00> : vector<64x128xf32>
    %21 = tpu.matmul %19, %20, %cst_24 {dimension_numbers = #tpu.dot_dimension_numbers<[1], [0], [0], [1], [0, 0, 1, 1], [], []>} : vector<64x128xf32>, vector<128x128xf32>, vector<64x128xf32> -> vector<64x128xf32>
    %22 = vector.shape_cast %21 : vector<64x128xf32> to vector<8x8x128xf32>
    %c0_25 = arith.constant 0 : index
    %c0_26 = arith.constant 0 : index
    %c0_27 = arith.constant 0 : index
    %23 = vector.load %arg9[%c0_25, %c0_26, %c0_27] : memref<1x8x128xf32, #tpu.memory_space<vmem>>, vector<1x8x128xf32>
    %cst_28 = arith.constant dense<0.000000e+00> : vector<8x128xf32>
    %24 = vector.multi_reduction <add>, %22, %cst_28 [0] : vector<8x8x128xf32> to vector<8x128xf32>
    %25 = vector.shape_cast %24 : vector<8x128xf32> to vector<1x8x128xf32>
    %26 = arith.addf %23, %25 : vector<1x8x128xf32>
    %c0_29 = arith.constant 0 : index
    %c0_30 = arith.constant 0 : index
    %c0_31 = arith.constant 0 : index
    %27 = vector.load %arg9[%c0_29, %c0_30, %c0_31] : memref<1x8x128xf32, #tpu.memory_space<vmem>>, vector<1x8x128xf32>
    tpu.vector_store %arg9[%c0_29, %c0_30, %c0_31], %26 {strides = array<i32>} : memref<1x8x128xf32, #tpu.memory_space<vmem>>, vector<1x8x128xf32>,
    %c0_32 = arith.constant 0 : index
    %c0_33 = arith.constant 0 : index
    %c0_34 = arith.constant 0 : index
    %28 = vector.load %arg10[%c0_32, %c0_33, %c0_34] : memref<1x8x128xf32, #tpu.memory_space<vmem>>, vector<1x8x128xf32>
    %29 = arith.mulf %22, %22 : vector<8x8x128xf32>
    %cst_35 = arith.constant dense<0.000000e+00> : vector<8x128xf32>
    %30 = vector.multi_reduction <add>, %29, %cst_35 [0] : vector<8x8x128xf32> to vector<8x128xf32>
    %31 = vector.shape_cast %30 : vector<8x128xf32> to vector<1x8x128xf32>
    %32 = arith.addf %28, %31 : vector<1x8x128xf32>
    %c0_36 = arith.constant 0 : index
    %c0_37 = arith.constant 0 : index
    %c0_38 = arith.constant 0 : index
    %33 = vector.load %arg10[%c0_36, %c0_37, %c0_38] : memref<1x8x128xf32, #tpu.memory_space<vmem>>, vector<1x8x128xf32>
    tpu.vector_store %arg10[%c0_36, %c0_37, %c0_38], %32 {strides = array<i32>} : memref<1x8x128xf32, #tpu.memory_space<vmem>>, vector<1x8x128xf32>,
    return
  }
  func.func @transform_0(%arg0: i32, %arg1: i32) -> (i32, i32) {
    %c1_i32 = arith.constant 1 : i32
    %0 = arith.muli %arg0, %c1_i32 : i32
    %1 = arith.addi %0, %arg1 : i32
    %c0_i32 = arith.constant 0 : i32
    %c0_i32_0 = arith.constant 0 : i32
    return %1, %c0_i32 : i32, i32
  }
  func.func @transform_1(%arg0: i32, %arg1: i32) -> (i32, i32) {
    %c0_i32 = arith.constant 0 : i32
    %c0_i32_0 = arith.constant 0 : i32
    %c0_i32_1 = arith.constant 0 : i32
    return %c0_i32, %c0_i32_0 : i32, i32
  }
  func.func @transform_2(%arg0: i32, %arg1: i32) -> (i32, i32) {
    %c1_i32 = arith.constant 1 : i32
    %0 = arith.muli %arg0, %c1_i32 : i32
    %1 = arith.addi %0, %arg1 : i32
    %c0_i32 = arith.constant 0 : i32
    %c0_i32_0 = arith.constant 0 : i32
    return %1, %c0_i32 : i32, i32
  }
  func.func @transform_3(%arg0: i32, %arg1: i32) -> (i32, i32) {
    %c0_i32 = arith.constant 0 : i32
    %c0_i32_0 = arith.constant 0 : i32
    %c0_i32_1 = arith.constant 0 : i32
    return %c0_i32, %c0_i32_0 : i32, i32
  }
  func.func @transform_4(%arg0: i32, %arg1: i32) -> (i32, i32) {
    %c1_i32 = arith.constant 1 : i32
    %0 = arith.muli %arg0, %c1_i32 : i32
    %1 = arith.addi %0, %arg1 : i32
    %c0_i32 = arith.constant 0 : i32
    %c0_i32_0 = arith.constant 0 : i32
    return %1, %c0_i32 : i32, i32
  }
  func.func @transform_5(%arg0: i32, %arg1: i32) -> (i32, i32, i32) {
    %c0_i32 = arith.constant 0 : i32
    %c0_i32_0 = arith.constant 0 : i32
    %c0_i32_1 = arith.constant 0 : i32
    return %arg0, %c0_i32, %c0_i32_0 : i32, i32, i32
  }
  func.func @transform_6(%arg0: i32, %arg1: i32) -> (i32, i32, i32) {
    %c0_i32 = arith.constant 0 : i32
    %c0_i32_0 = arith.constant 0 : i32
    %c0_i32_1 = arith.constant 0 : i32
    return %arg0, %c0_i32, %c0_i32_0 : i32, i32, i32
  }
  func.func @transform_7(%arg0: i32, %arg1: i32) -> (i32, i32, i32) {
    %c0_i32 = arith.constant 0 : i32
    %c0_i32_0 = arith.constant 0 : i32
    %c0_i32_1 = arith.constant 0 : i32
    return %arg0, %c0_i32, %c0_i32_0 : i32, i32, i32
  }
  func.func @transform_8(%arg0: i32, %arg1: i32) -> (i32, i32, i32) {
    %c0_i32 = arith.constant 0 : i32
    %c0_i32_0 = arith.constant 0 : i32
    %c0_i32_1 = arith.constant 0 : i32
    return %arg0, %c0_i32, %c0_i32_0 : i32, i32, i32
  }
}

</mosaic_0001>

<llo_original>
// kernel: residual_block_forward.4
$region0: #{residual_block_forward.4}
  #allocation0 [shape = 'u32[]', space=smem, size = 0x4, offset = 0x4, fixed_abs, tag = 'smem constant byte address 0x4 - core index']
  #allocation1 [shape = 'u32[144,128]{1,0:T(1,128)}', space=vmem, size = 0x12000, scoped, tag = 'internal scratch']
  %s0 = inlined_call_operand.hbm [shape: f32[128,128], index: 0, kind: input, shape index: {}]
  %s1 = inlined_call_operand.hbm [shape: f32[128,128], index: 1, kind: input, shape index: {}]
  %s2 = inlined_call_operand.hbm [shape: f32[128,128], index: 2, kind: output, shape index: {0}]
  %s3 = inlined_call_operand.hbm [shape: f32[2,8,128], index: 3, kind: output, shape index: {1}]
  %s4 = inlined_call_operand.hbm [shape: f32[2,8,128], index: 4, kind: output, shape index: {2}]
  %5 = xla_tuple %s2, %s3, %s4
  %s6 = sld [smem:[#allocation0]]
  $region69: #{residual_block_forward.4} parent=0
    _
  %s8 = ssub.s32 1, %s6
  %s9 = scalar_select 0, %s8, %s6
  $region1: #{residual_block_forward.4} parent=0
    #allocation2 [shape = 'u8[65536]{0}', space=vmem, size = 0x10000, scoped, tag = 'input window, operand 0']
    #allocation3 [shape = 's32[2]{0}', space=sflag, size = 0x8, scoped, tag = 'scoped memory for residual_block_forward.4']
    #allocation4 [shape = 's32[2]{0}', space=sflag, size = 0x8, scoped, tag = 'scoped memory for residual_block_forward.4']
    #allocation5 [shape = 'u8[65536]{0}', space=vmem, size = 0x10000, scoped, tag = 'input window, operand 1, single buffered']
    #allocation6 [shape = 's32[1]{0}', space=sflag, size = 0x4, scoped, tag = 'scoped memory for residual_block_forward.4']
    #allocation7 [shape = 'u8[65536]{0}', space=vmem, size = 0x10000, scoped, tag = 'output window, operand 0']
    #allocation8 [shape = 'u8[8192]{0}', space=vmem, size = 0x2000, scoped, tag = 'output window, operand 1']
    #allocation9 [shape = 's32[2]{0}', space=sflag, size = 0x8, scoped, tag = 'scoped memory for residual_block_forward.4']
    #allocation10 [shape = 'u8[8192]{0}', space=vmem, size = 0x2000, scoped, tag = 'output window, operand 2']
    %10 = vsyncpa [#allocation3], 0
    %s11 = scalar_lea.sflag [#allocation3], 1
    %12 = vsyncpa %s11, 0
    %13 = vsyncpa [#allocation6], 0
    %14 = vsyncpa [#allocation4], 0
    %s15 = scalar_lea.sflag [#allocation4], 1
    %16 = vsyncpa %s15, 0
    %17 = vsyncpa [#allocation9], 0
    %s18 = scalar_lea.sflag [#allocation9], 1
    %19 = vsyncpa %s18, 0
    loop: start=0, step=1, limit=4
    $region2: #{residual_block_forward.4} parent=1 // loop_pre_header
      _
    $region3: #{residual_block_forward.4} parent=1 // loop_header
      %s21 = sphi 0, %s25
      %p22 = scmp.ge.s32.totalorder %s21, 4
      %s28 = sphi 0, %s40
      %s29 = sphi 0, %s36
      %s30 = sphi 0, %s28
      %s31 = sphi 0, %s29
      %s32 = sphi 0, %s30
      %s33 = sphi 0, %s31
      %s45 = sphi 0, %s47
      %s48 = sphi 0, %s45
      %s49 = sphi 0, %s48
      %s65 = sphi 0, %s49
      %s69 = sphi 0, %s69
      %s71 = sphi 0, %s69
      %s72 = sphi 0, %s71
      %s86 = sphi 0, %s72
      %s94 = sphi 0, %s96
      %s97 = sphi 0, %s94
      %s98 = sphi 0, %s97
      %s114 = sphi 0, %s98
      %s120 = sphi 0, %s122
      %s123 = sphi 0, %s120
      %s124 = sphi 0, %s123
      %s140 = sphi 0, %s124
      %s146 = sphi 0, %s148
      %s149 = sphi 0, %s146
      %s150 = sphi 0, %s149
      %s166 = sphi 0, %s150
    $region4: #{residual_block_forward.4} parent=1 // loop_header_branch
      %24 = sbr.rel (%p22) target = $region8
    $region5: #{residual_block_forward.4} parent=1 // loop_body
      %s26 = ssub.s32 %s21, 1
      %s27 = ssub.s32 %s21, 2
      %s34 = sadd.s32 1, %s29
      %p35 = scmp.ge.s32.totalorder %s34, 1
      %s36 = scalar_select %p35, 0, %s34
      %s37 = sadd.s32 1, %s28
      %s38 = scalar_select %p35, %s37, %s28
      %p39 = scmp.ge.s32.totalorder %s38, 2
      %s40 = scalar_select %p39, 0, %s38
      %s41 = sadd.s32 %s28, %s29
      %s42 = sadd.s32 %s40, %s36
      %s43 = ssub.s32 %s41, %s42
      %p44 = scmp.eq.s32.totalorder %s43, 0
      %s46 = sadd.s32 %s45, 1
      %s47 = scalar_select %p44, %s45, %s46
      %p50 = pneg %p44
      %p51 = scmp.eq.s32.totalorder %s21, 1
      %p52 = por %p50, %p51
      %p53 = scmp.ne.s32.totalorder %s45, %s48
      %p54 = scmp.eq.s32.totalorder %s21, 0
      %p55 = por %p53, %p54
      %p56 = scmp.ne.s32.totalorder %s45, %s48
      %p57 = scmp.eq.s32.totalorder %s26, 1
      %p58 = por %p56, %p57
      %p59 = scmp.ne.s32.totalorder %s48, %s49
      %p60 = scmp.eq.s32.totalorder %s26, 0
      %p61 = por %p59, %p60
      %p62 = scmp.ne.s32.totalorder %s48, %s49
      %p63 = scmp.eq.s32.totalorder %s27, 1
      %p64 = por %p62, %p63
      %p66 = scmp.ne.s32.totalorder %s49, %s65
      %p67 = scmp.eq.s32.totalorder %s27, 0
      %p68 = por %p66, %p67
      %s70 = sadd.s32 %s69, 1
      %p73 = scmp.eq.s32.totalorder %s21, 1
      %p74 = scmp.ne.s32.totalorder %s69, %s71
      %p75 = scmp.eq.s32.totalorder %s21, 0
      %p76 = por %p74, %p75
      %p77 = scmp.ne.s32.totalorder %s69, %s71
      %p78 = scmp.eq.s32.totalorder %s26, 1
      %p79 = por %p77, %p78
      %p80 = scmp.ne.s32.totalorder %s71, %s72
      %p81 = scmp.eq.s32.totalorder %s26, 0
      %p82 = por %p80, %p81
      %p83 = scmp.ne.s32.totalorder %s71, %s72
      %p84 = scmp.eq.s32.totalorder %s27, 1
      %p85 = por %p83, %p84
      %p87 = scmp.ne.s32.totalorder %s72, %s86
      %p88 = scmp.eq.s32.totalorder %s27, 0
      %p89 = por %p87, %p88
      %s90 = sadd.s32 %s28, %s29
      %s91 = sadd.s32 %s40, %s36
      %s92 = ssub.s32 %s90, %s91
      %p93 = scmp.eq.s32.totalorder %s92, 0
      %s95 = sadd.s32 %s94, 1
      %s96 = scalar_select %p93, %s94, %s95
      %p99 = pneg %p93
      %p100 = scmp.eq.s32.totalorder %s21, 1
      %p101 = por %p99, %p100
      %p102 = scmp.ne.s32.totalorder %s94, %s97
      %p103 = scmp.eq.s32.totalorder %s21, 0
      %p104 = por %p102, %p103
      %p105 = scmp.ne.s32.totalorder %s94, %s97
      %p106 = scmp.eq.s32.totalorder %s26, 1
      %p107 = por %p105, %p106
      %p108 = scmp.ne.s32.totalorder %s97, %s98
      %p109 = scmp.eq.s32.totalorder %s26, 0
      %p110 = por %p108, %p109
      %p111 = scmp.ne.s32.totalorder %s97, %s98
      %p112 = scmp.eq.s32.totalorder %s27, 1
      %p113 = por %p111, %p112
      %p115 = scmp.ne.s32.totalorder %s98, %s114
      %p116 = scmp.eq.s32.totalorder %s27, 0
      %p117 = por %p115, %p116
      %s118 = ssub.s32 %s28, %s40
      %p119 = scmp.eq.s32.totalorder %s118, 0
      %s121 = sadd.s32 %s120, 1
      %s122 = scalar_select %p119, %s120, %s121
      %p125 = pneg %p119
      %p126 = scmp.eq.s32.totalorder %s21, 1
      %p127 = por %p125, %p126
      %p128 = scmp.ne.s32.totalorder %s120, %s123
      %p129 = scmp.eq.s32.totalorder %s21, 0
      %p130 = por %p128, %p129
      %p131 = scmp.ne.s32.totalorder %s120, %s123
      %p132 = scmp.eq.s32.totalorder %s26, 1
      %p133 = por %p131, %p132
      %p134 = scmp.ne.s32.totalorder %s123, %s124
      %p135 = scmp.eq.s32.totalorder %s26, 0
      %p136 = por %p134, %p135
      %p137 = scmp.ne.s32.totalorder %s123, %s124
      %p138 = scmp.eq.s32.totalorder %s27, 1
      %p139 = por %p137, %p138
      %p141 = scmp.ne.s32.totalorder %s124, %s140
      %p142 = scmp.eq.s32.totalorder %s27, 0
      %p143 = por %p141, %p142
      %s144 = ssub.s32 %s28, %s40
      %p145 = scmp.eq.s32.totalorder %s144, 0
      %s147 = sadd.s32 %s146, 1
      %s148 = scalar_select %p145, %s146, %s147
      %p151 = pneg %p145
      %p152 = scmp.eq.s32.totalorder %s21, 1
      %p153 = por %p151, %p152
      %p154 = scmp.ne.s32.totalorder %s146, %s149
      %p155 = scmp.eq.s32.totalorder %s21, 0
      %p156 = por %p154, %p155
      %p157 = scmp.ne.s32.totalorder %s146, %s149
      %p158 = scmp.eq.s32.totalorder %s26, 1
      %p159 = por %p157, %p158
      %p160 = scmp.ne.s32.totalorder %s149, %s150
      %p161 = scmp.eq.s32.totalorder %s26, 0
      %p162 = por %p160, %p161
      %p163 = scmp.ne.s32.totalorder %s149, %s150
      %p164 = scmp.eq.s32.totalorder %s27, 1
      %p165 = por %p163, %p164
      %p167 = scmp.ne.s32.totalorder %s150, %s166
      %p168 = scmp.eq.s32.totalorder %s27, 0
      %p169 = por %p167, %p168
      %p170 = scmp.le.s32.totalorder 1, %s21
      %p171 = scmp.lt.s32.totalorder %s21, 3
      %p172 = pnand %p170, %p171
      %p173 = pneg %p172
      // Predicated region
      $region9: #{residual_block_forward.4} parent=5 // pred_check
        _
      $region10: #{residual_block_forward.4} parent=5 // pred_check_branch
        %175 = sbr.rel (%p172) target = $region12
      $region11: #{residual_block_forward.4} parent=5 // pred_region
        %s176 = ssub.s32 %s21, 1
        // Predicated region
        $region13: #{residual_block_forward.4} parent=11 // pred_check
          %p177 = pneg %p82
        $region14: #{residual_block_forward.4} parent=11 // pred_check_branch
          %179 = sbr.rel (%p177) target = $region16
        $region15: #{residual_block_forward.4} parent=11 // pred_region
          %s181 = ssub.s32 2048, 2048
          %182 = vsyncadd [#allocation6], %s181
          %s183 = sshll.u32 [#allocation5], 4
          %s184 = int_to_ptr.vmem [resolvable:$true] %s183
          %189 = dma.hbm_to_vmem [thread:$0]  %s1, 2048, %s184, [#allocation6], 128, 128, 8
        $region16: #{residual_block_forward.4} parent=11 // pred_fallthru
          _
      $region12: #{residual_block_forward.4} parent=5 // pred_fallthru
        _
      %p190 = scmp.lt.s32.totalorder %s21, 2
      // Predicated region
      $region17: #{residual_block_forward.4} parent=5 // pred_check
        %p191 = pneg %p190
      $region18: #{residual_block_forward.4} parent=5 // pred_check_branch
        %193 = sbr.rel (%p191) target = $region20
      $region19: #{residual_block_forward.4} parent=5 // pred_region
        // Predicated region
        $region21: #{residual_block_forward.4} parent=19 // pred_check
          %p194 = pneg %p55
        $region22: #{residual_block_forward.4} parent=19 // pred_check_branch
          %196 = sbr.rel (%p194) target = $region24
        $region23: #{residual_block_forward.4} parent=19 // pred_region
          %s197 = sand.u32 %s45, 1
          %s198 = scalar_lea.sflag [#allocation3], %s197
          %s199 = sand.u32 %s45, 1
          %s200 = smul.addr %s199, 64
          %s201 = scalar_lea.vmem [#allocation2], %s200
          %s202 = sadd.s32 %s28, %s29
          %s203 = smul.u32 8, %s202
          %s205 = ssub.s32 1024, 1024
          %206 = vsyncadd %s198, %s205
          %s207 = smul.addr %s203, 128
          %s208 = scalar_lea.hbm %s0, %s207
          %s209 = sshll.u32 %s201, 4
          %s210 = int_to_ptr.vmem [resolvable:$true] %s209
          %215 = dma.hbm_to_vmem [thread:$0]  %s208, 1024, %s210, %s198, 128, 128, 8
        $region24: #{residual_block_forward.4} parent=19 // pred_fallthru
          _
      $region20: #{residual_block_forward.4} parent=5 // pred_fallthru
        _
      %p216 = scmp.le.s32.totalorder 1, %s21
      %p217 = scmp.lt.s32.totalorder %s21, 3
      %p218 = pnand %p216, %p217
      %p219 = pneg %p218
      // Predicated region
      $region25: #{residual_block_forward.4} parent=5 // pred_check
        _
      $region26: #{residual_block_forward.4} parent=5 // pred_check_branch
        %221 = sbr.rel (%p218) target = $region28
      $region27: #{residual_block_forward.4} parent=5 // pred_region
        %s222 = ssub.s32 %s21, 1
        %s223 = sand.u32 %s48, 1
        %s224 = scalar_lea.sflag [#allocation3], %s223
        %s225 = sand.u32 %s48, 1
        %s226 = smul.addr %s225, 64
        %s227 = scalar_lea.vmem [#allocation2], %s226
        // Predicated region
        $region29: #{residual_block_forward.4} parent=27 // pred_check
          %p228 = pneg %p61
        $region30: #{residual_block_forward.4} parent=27 // pred_check_branch
          %230 = sbr.rel (%p228) target = $region32
        $region31: #{residual_block_forward.4} parent=27 // pred_region
          %231 = dma.done %s224, 1024
        $region32: #{residual_block_forward.4} parent=27 // pred_fallthru
          _
        // Predicated region
        $region33: #{residual_block_forward.4} parent=27 // pred_check
          %p232 = pneg %p82
        $region34: #{residual_block_forward.4} parent=27 // pred_check_branch
          %234 = sbr.rel (%p232) target = $region36
        $region35: #{residual_block_forward.4} parent=27 // pred_region
          %235 = dma.done [#allocation6], 2048
        $region36: #{residual_block_forward.4} parent=27 // pred_fallthru
          _
        %s236 = sand.u32 %s48, 1
        %s237 = scalar_lea.sflag [#allocation3], %s236
        %s238 = sand.u32 %s48, 1
        %s239 = smul.addr %s238, 64
        %s240 = scalar_lea.vmem [#allocation2], %s239
        %p241 = pneg %p61
        %p242 = pneg %p58
        %p243 = pneg %p82
        %p244 = pneg %p79
        %p245 = pneg %p110
        %p246 = pneg %p107
        %s247 = sand.u32 %s97, 1
        %s248 = scalar_lea.sflag [#allocation4], %s247
        %s249 = sand.u32 %s97, 1
        %s250 = smul.addr %s249, 64
        %s251 = scalar_lea.vmem [#allocation7], %s250
        %p252 = pneg %p136
        %p253 = pneg %p133
        %s254 = sand.u32 %s26, 1
        %s255 = scalar_lea.sflag [#allocation9], %s254
        %s256 = sand.u32 %s123, 1
        %s257 = smul.addr %s256, 8
        %s258 = scalar_lea.vmem [#allocation8], %s257
        %p259 = pneg %p162
        %p260 = pneg %p159
        %s261 = sand.u32 %s26, 1
        %s262 = scalar_lea.sflag [#allocation9], %s261
        %s263 = sand.u32 %s149, 1
        %s264 = smul.addr %s263, 8
        %s265 = scalar_lea.vmem [#allocation10], %s264
        %s266 = sadd.s32 %s30, %s31
        %s267 = smul.u32 8, %s266
        %s268 = sadd.s32 %s30, %s31
        %s269 = smul.u32 8, %s268
        %p270 = scmp.eq.s32.totalorder %s31, 0
        // Predicated region
        $region37: #{residual_block_forward.4} parent=27 // pred_check
          %p271 = pneg %p270
        $region38: #{residual_block_forward.4} parent=27 // pred_check_branch
          %273 = sbr.rel (%p271) target = $region40
        $region39: #{residual_block_forward.4} parent=27 // pred_region
          %274 = vst [vmem:[%s258] sm:$0xff] 0.0
          %275 = vst [vmem:[%s265] sm:$0xff] 0.0
        $region40: #{residual_block_forward.4} parent=27 // pred_fallthru
          _
        %v276 = vld [vmem:[%s227] sm:$0xff]
        %v277 = vld [vmem:[%s227 + $0x8] sm:$0xff]
        %v278 = vld [vmem:[%s227 + $0x10] sm:$0xff]
        %v279 = vld [vmem:[%s227 + $0x18] sm:$0xff]
        %v280 = vld [vmem:[%s227 + $0x20] sm:$0xff]
        %v281 = vld [vmem:[%s227 + $0x28] sm:$0xff]
        %v282 = vld [vmem:[%s227 + $0x30] sm:$0xff]
        %v283 = vld [vmem:[%s227 + $0x38] sm:$0xff]
        %v284 = vld [vmem:[#allocation5] sm:$0xff]
        %v285 = vld [vmem:[#allocation5 + $0x8] sm:$0xff]
        %v286 = vld [vmem:[#allocation5 + $0x10] sm:$0xff]
        %v287 = vld [vmem:[#allocation5 + $0x18] sm:$0xff]
        %v288 = vld [vmem:[#allocation5 + $0x20] sm:$0xff]
        %v289 = vld [vmem:[#allocation5 + $0x28] sm:$0xff]
        %v290 = vld [vmem:[#allocation5 + $0x30] sm:$0xff]
        %v291 = vld [vmem:[#allocation5 + $0x38] sm:$0xff]
        %v292 = vld [vmem:[#allocation5 + $0x40] sm:$0xff]
        %v293 = vld [vmem:[#allocation5 + $0x48] sm:$0xff]
        %v294 = vld [vmem:[#allocation5 + $0x50] sm:$0xff]
        %v295 = vld [vmem:[#allocation5 + $0x58] sm:$0xff]
        %v296 = vld [vmem:[#allocation5 + $0x60] sm:$0xff]
        %v297 = vld [vmem:[#allocation5 + $0x68] sm:$0xff]
        %v298 = vld [vmem:[#allocation5 + $0x70] sm:$0xff]
        %v299 = vld [vmem:[#allocation5 + $0x78] sm:$0xff]
        %300 = vmatprep.subr.mxu0 0.0
        %301 = vmatpush1.msra.mxu0 %v284
        %302 = vmatprep.subr.mxu0 0.0
        %303 = vmatpush1.msra.mxu0 %v285
        %304 = vmatprep.subr.mxu0 0.0
        %305 = vmatpush1.msra.mxu0 %v286
        %306 = vmatprep.subr.mxu0 0.0
        %307 = vmatpush1.msra.mxu0 %v287
        %308 = vmatprep.subr.mxu0 0.0
        %309 = vmatpush1.msra.mxu0 %v288
        %310 = vmatprep.subr.mxu0 0.0
        %311 = vmatpush1.msra.mxu0 %v289
        %312 = vmatprep.subr.mxu0 0.0
        %313 = vmatpush1.msra.mxu0 %v290
        %314 = vmatprep.subr.mxu0 0.0
        %315 = vmatpush1.msra.mxu0 %v291
        %316 = vmatprep.subr.mxu0 0.0
        %317 = vmatpush1.msra.mxu0 %v292
        %318 = vmatprep.subr.mxu0 0.0
        %319 = vmatpush1.msra.mxu0 %v293
        %320 = vmatprep.subr.mxu0 0.0
        %321 = vmatpush1.msra.mxu0 %v294
        %322 = vmatprep.subr.mxu0 0.0
        %323 = vmatpush1.msra.mxu0 %v295
        %324 = vmatprep.subr.mxu0 0.0
        %325 = vmatpush1.msra.mxu0 %v296
        %326 = vmatprep.subr.mxu0 0.0
        %327 = vmatpush1.msra.mxu0 %v297
        %328 = vmatprep.subr.mxu0 0.0
        %329 = vmatpush1.msra.mxu0 %v298
        %330 = vmatprep.subr.mxu0 0.0
        %331 = vmatpush1.msra.mxu0 %v299
        %332 = vmatprep.subr.mxu0 0.0
        %333 = vmatpush1.msra.mxu0 0.0
        %334 = vmatprep.subr.mxu0 0.0
        %335 = vmatpush1.msra.mxu0 0.0
        %336 = vmatprep.subr.mxu0 0.0
        %337 = vmatpush1.msra.mxu0 0.0
        %338 = vmatprep.subr.mxu0 0.0
        %339 = vmatpush1.msra.mxu0 0.0
        %340 = vmatprep.subr.mxu0 0.0
        %341 = vmatpush1.msra.mxu0 0.0
        %342 = vmatprep.subr.mxu0 0.0
        %343 = vmatpush1.msra.mxu0 0.0
        %344 = vmatprep.subr.mxu0 0.0
        %345 = vmatpush1.msra.mxu0 0.0
        %346 = vmatprep.subr.mxu0 0.0
        %347 = vmatpush1.msra.mxu0 0.0
        %348 = vmatprep.subr.mxu0 0.0
        %349 = vmatpush1.msra.mxu0 0.0
        %350 = vmatprep.subr.mxu0 0.0
        %351 = vmatpush1.msra.mxu0 0.0
        %352 = vmatprep.subr.mxu0 0.0
        %353 = vmatpush1.msra.mxu0 0.0
        %354 = vmatprep.subr.mxu0 0.0
        %355 = vmatpush1.msra.mxu0 0.0
        %356 = vmatprep.subr.mxu0 0.0
        %357 = vmatpush1.msra.mxu0 0.0
        %358 = vmatprep.subr.mxu0 0.0
        %359 = vmatpush1.msra.mxu0 0.0
        %360 = vmatprep.subr.mxu0 0.0
        %361 = vmatpush1.msra.mxu0 0.0
        %362 = vmatprep.subr.mxu0 0.0
        %363 = vmatpush1.msra.mxu0 0.0
        %364 = vmatprep.mubr.f32.mxu0 0.0
        %365 = vmatmul.mubr.f32.gmra.mrb[0].mxu0 %v276
        %v366 = vpop.f32.mrb[0].mxu0
        %v367 = vadd.f32 0.0, %v366
        %v368 = vpop.f32.mrb[0].mxu0
        %369 = vmatprep.mubr.f32.mxu0 0.0
        %370 = vmatmul.mubr.f32.gmra.mrb[0].mxu0 %v277
        %v371 = vpop.f32.mrb[0].mxu0
        %v372 = vadd.f32 0.0, %v371
        %v373 = vpop.f32.mrb[0].mxu0
        %374 = vmatprep.mubr.f32.mxu0 0.0
        %375 = vmatmul.mubr.f32.gmra.mrb[0].mxu0 %v278
        %v376 = vpop.f32.mrb[0].mxu0
        %v377 = vadd.f32 0.0, %v376
        %v378 = vpop.f32.mrb[0].mxu0
        %379 = vmatprep.mubr.f32.mxu0 0.0
        %380 = vmatmul.mubr.f32.gmra.mrb[0].mxu0 %v279
        %v381 = vpop.f32.mrb[0].mxu0
        %v382 = vadd.f32 0.0, %v381
        %v383 = vpop.f32.mrb[0].mxu0
        %384 = vmatprep.mubr.f32.mxu0 0.0
        %385 = vmatmul.mubr.f32.gmra.mrb[0].mxu0 %v280
        %v386 = vpop.f32.mrb[0].mxu0
        %v387 = vadd.f32 0.0, %v386
        %v388 = vpop.f32.mrb[0].mxu0
        %389 = vmatprep.mubr.f32.mxu0 0.0
        %390 = vmatmul.mubr.f32.gmra.mrb[0].mxu0 %v281
        %v391 = vpop.f32.mrb[0].mxu0
        %v392 = vadd.f32 0.0, %v391
        %v393 = vpop.f32.mrb[0].mxu0
        %394 = vmatprep.mubr.f32.mxu0 0.0
        %395 = vmatmul.mubr.f32.gmra.mrb[0].mxu0 %v282
        %v396 = vpop.f32.mrb[0].mxu0
        %v397 = vadd.f32 0.0, %v396
        %v398 = vpop.f32.mrb[0].mxu0
        %399 = vmatprep.mubr.f32.mxu0 0.0
        %400 = vmatmul.mubr.f32.gmra.mrb[0].mxu0 %v283
        %v401 = vpop.f32.mrb[0].mxu0
        %v402 = vadd.f32 0.0, %v401
        %v403 = vpop.f32.mrb[0].mxu0
        %404 = vdwg.mxu0
        %405 = vst [vmem:[%s251] sm:$0xff] %v367
        %406 = vst [vmem:[%s251 + $0x8] sm:$0xff] %v372
        %407 = vst [vmem:[%s251 + $0x10] sm:$0xff] %v377
        %408 = vst [vmem:[%s251 + $0x18] sm:$0xff] %v382
        %409 = vst [vmem:[%s251 + $0x20] sm:$0xff] %v387
        %410 = vst [vmem:[%s251 + $0x28] sm:$0xff] %v392
        %411 = vst [vmem:[%s251 + $0x30] sm:$0xff] %v397
        %412 = vst [vmem:[%s251 + $0x38] sm:$0xff] %v402
        %v413 = vld [vmem:[%s258] sm:$0xff]
        %v414 = vadd.f32 %v367, %v372
        %v415 = vadd.f32 %v414, %v377
        %v416 = vadd.f32 %v415, %v382
        %v417 = vadd.f32 %v416, %v387
        %v418 = vadd.f32 %v417, %v392
        %v419 = vadd.f32 %v418, %v397
        %v420 = vadd.f32 %v419, %v402
        %v421 = vadd.f32 %v413, %v420
        %422 = vst [vmem:[%s258] sm:$0xff] %v421
        %v423 = vld [vmem:[%s265] sm:$0xff]
        %v424 = vmul.f32 %v367, %v367
        %v425 = vmul.f32 %v372, %v372
        %v426 = vmul.f32 %v377, %v377
        %v427 = vmul.f32 %v382, %v382
        %v428 = vmul.f32 %v387, %v387
        %v429 = vmul.f32 %v392, %v392
        %v430 = vmul.f32 %v397, %v397
        %v431 = vmul.f32 %v402, %v402
        %v432 = vadd.f32 %v424, %v425
        %v433 = vadd.f32 %v432, %v426
        %v434 = vadd.f32 %v433, %v427
        %v435 = vadd.f32 %v434, %v428
        %v436 = vadd.f32 %v435, %v429
        %v437 = vadd.f32 %v436, %v430
        %v438 = vadd.f32 %v437, %v431
        %v439 = vadd.f32 %v423, %v438
        %440 = vst [vmem:[%s265] sm:$0xff] %v439
        %s441 = sand.u32 %s97, 1
        %s442 = scalar_lea.sflag [#allocation4], %s441
        %s443 = sand.u32 %s97, 1
        %s444 = smul.addr %s443, 64
        %s445 = scalar_lea.vmem [#allocation7], %s444
        %s446 = sand.u32 %s26, 1
        %s447 = scalar_lea.sflag [#allocation9], %s446
        %s448 = sand.u32 %s123, 1
        %s449 = smul.addr %s448, 8
        %s450 = scalar_lea.vmem [#allocation8], %s449
        %s451 = sand.u32 %s26, 1
        %s452 = scalar_lea.sflag [#allocation9], %s451
        %s453 = sand.u32 %s149, 1
        %s454 = smul.addr %s453, 8
        %s455 = scalar_lea.vmem [#allocation10], %s454
        // Predicated region
        $region41: #{residual_block_forward.4} parent=27 // pred_check
          %p456 = pneg %p107
        $region42: #{residual_block_forward.4} parent=27 // pred_check_branch
          %458 = sbr.rel (%p456) target = $region44
        $region43: #{residual_block_forward.4} parent=27 // pred_region
          %s459 = sadd.s32 %s30, %s31
          %s460 = smul.u32 8, %s459
          %s462 = ssub.s32 1024, 1024
          %463 = vsyncadd %s442, %s462
          %s464 = smul.addr %s460, 128
          %s465 = scalar_lea.hbm %s2, %s464
          %s466 = sshll.u32 %s445, 4
          %s467 = int_to_ptr.vmem [resolvable:$true] %s466
          %472 = dma.vmem_to_hbm [thread:$0]  %s467, 1024, %s465, %s442, 128, 128, 8
        $region44: #{residual_block_forward.4} parent=27 // pred_fallthru
          _
        // Predicated region
        $region45: #{residual_block_forward.4} parent=27 // pred_check
          %p473 = pneg %p133
        $region46: #{residual_block_forward.4} parent=27 // pred_check_branch
          %475 = sbr.rel (%p473) target = $region48
        $region47: #{residual_block_forward.4} parent=27 // pred_region
          %s477 = ssub.s32 128, 128
          %478 = vsyncadd %s447, %s477
          %s479 = smul.addr %s30, 128
          %s480 = scalar_lea.hbm %s3, %s479
          %s482 = sshll.u32 %s450, 4
          %s483 = int_to_ptr.vmem [resolvable:$true] %s482
          %485 = dma.vmem_to_hbm [thread:$0]  %s483, 128, %s480, %s447
        $region48: #{residual_block_forward.4} parent=27 // pred_fallthru
          _
        // Predicated region
        $region49: #{residual_block_forward.4} parent=27 // pred_check
          %p486 = pneg %p159
        $region50: #{residual_block_forward.4} parent=27 // pred_check_branch
          %488 = sbr.rel (%p486) target = $region52
        $region51: #{residual_block_forward.4} parent=27 // pred_region
          %s490 = ssub.s32 128, 128
          %491 = vsyncadd %s452, %s490
          %s492 = smul.addr %s30, 128
          %s493 = scalar_lea.hbm %s4, %s492
          %s495 = sshll.u32 %s455, 4
          %s496 = int_to_ptr.vmem [resolvable:$true] %s495
          %498 = dma.vmem_to_hbm [thread:$0]  %s496, 128, %s493, %s452
        $region52: #{residual_block_forward.4} parent=27 // pred_fallthru
          _
      $region28: #{residual_block_forward.4} parent=5 // pred_fallthru
        _
      %p499 = scmp.le.s32.totalorder 2, %s21
      // Predicated region
      $region53: #{residual_block_forward.4} parent=5 // pred_check
        %p500 = pneg %p499
      $region54: #{residual_block_forward.4} parent=5 // pred_check_branch
        %502 = sbr.rel (%p500) target = $region56
      $region55: #{residual_block_forward.4} parent=5 // pred_region
        %s503 = ssub.s32 %s21, 2
        // Predicated region
        $region57: #{residual_block_forward.4} parent=55 // pred_check
          %p504 = pneg %p113
        $region58: #{residual_block_forward.4} parent=55 // pred_check_branch
          %506 = sbr.rel (%p504) target = $region60
        $region59: #{residual_block_forward.4} parent=55 // pred_region
          %s507 = sand.u32 %s98, 1
          %s508 = scalar_lea.sflag [#allocation4], %s507
          %s509 = sand.u32 %s98, 1
          %s510 = smul.addr %s509, 64
          %s511 = scalar_lea.vmem [#allocation7], %s510
          %512 = dma.done %s508, 1024
        $region60: #{residual_block_forward.4} parent=55 // pred_fallthru
          _
        // Predicated region
        $region61: #{residual_block_forward.4} parent=55 // pred_check
          %p513 = pneg %p139
        $region62: #{residual_block_forward.4} parent=55 // pred_check_branch
          %515 = sbr.rel (%p513) target = $region64
        $region63: #{residual_block_forward.4} parent=55 // pred_region
          %s516 = sand.u32 %s27, 1
          %s517 = scalar_lea.sflag [#allocation9], %s516
          %s518 = sand.u32 %s124, 1
          %s519 = smul.addr %s518, 8
          %s520 = scalar_lea.vmem [#allocation8], %s519
          %521 = dma.done %s517, 128
        $region64: #{residual_block_forward.4} parent=55 // pred_fallthru
          _
        // Predicated region
        $region65: #{residual_block_forward.4} parent=55 // pred_check
          %p522 = pneg %p165
        $region66: #{residual_block_forward.4} parent=55 // pred_check_branch
          %524 = sbr.rel (%p522) target = $region68
        $region67: #{residual_block_forward.4} parent=55 // pred_region
          %s525 = sand.u32 %s27, 1
          %s526 = scalar_lea.sflag [#allocation9], %s525
          %s527 = sand.u32 %s150, 1
          %s528 = smul.addr %s527, 8
          %s529 = scalar_lea.vmem [#allocation10], %s528
          %530 = dma.done %s526, 128
        $region68: #{residual_block_forward.4} parent=55 // pred_fallthru
          _
      $region56: #{residual_block_forward.4} parent=5 // pred_fallthru
        _
    $region6: #{residual_block_forward.4} parent=1 // loop_footer
      %s25 = sadd.s32 1, %s21
    $region7: #{residual_block_forward.4} parent=1 // loop_footer_branch
      %20 = sbr.rel target = $region3
    $region8: #{residual_block_forward.4} parent=1 // loop_exit
      _
    %531 = vsyncpa [#allocation3], 1
    %s532 = scalar_lea.sflag [#allocation3], 1
    %533 = vsyncpa %s532, 1
    %534 = vsyncpa [#allocation6], 1
    %535 = vsyncpa [#allocation4], 1
    %s536 = scalar_lea.sflag [#allocation4], 1
    %537 = vsyncpa %s536, 1
    %538 = vsyncpa [#allocation9], 1
    %s539 = scalar_lea.sflag [#allocation9], 1
    %540 = vsyncpa %s539, 1

// kernel: residual_block_forward.5
$region0: #{residual_block_forward.5}
  #allocation0 [shape = 'u32[]', space=smem, size = 0x4, offset = 0x4, fixed_abs, tag = 'smem constant byte address 0x4 - core index']
  #allocation1 [shape = 'u32[144,128]{1,0:T(1,128)}', space=vmem, size = 0x12000, scoped, tag = 'internal scratch']
  %s0 = inlined_call_operand.hbm [shape: f32[128,128], index: 0, kind: input, shape index: {}]
  %s1 = inlined_call_operand.hbm [shape: f32[1,128], index: 1, kind: input, shape index: {}]
  %s2 = inlined_call_operand.hbm [shape: f32[1,128], index: 2, kind: input, shape index: {}]
  %s3 = inlined_call_operand.hbm [shape: f32[128,128], index: 3, kind: output, shape index: {}]
  %s4 = sld [smem:[#allocation0]]
  $region57: #{residual_block_forward.5} parent=0
    _
  %s6 = ssub.s32 1, %s4
  %s7 = scalar_select 0, %s6, %s4
  $region1: #{residual_block_forward.5} parent=0
    #allocation2 [shape = 'u8[65536]{0}', space=vmem, size = 0x10000, scoped, tag = 'input window, operand 0']
    #allocation3 [shape = 's32[2]{0}', space=sflag, size = 0x8, scoped, tag = 'scoped memory for residual_block_forward.5']
    #allocation4 [shape = 's32[2]{0}', space=sflag, size = 0x8, scoped, tag = 'scoped memory for residual_block_forward.5']
    #allocation5 [shape = 'u8[512]{0}', space=vmem, size = 0x400, scoped, tag = 'input window, operand 1, single buffered']
    #allocation6 [shape = 's32[1]{0}', space=sflag, size = 0x4, scoped, tag = 'scoped memory for residual_block_forward.5']
    #allocation7 [shape = 'u8[512]{0}', space=vmem, size = 0x400, scoped, tag = 'input window, operand 2, single buffered']
    #allocation8 [shape = 'u8[65536]{0}', space=vmem, size = 0x10000, scoped, tag = 'output window, operand 0']
    %8 = vsyncpa [#allocation3], 0
    %s9 = scalar_lea.sflag [#allocation3], 1
    %10 = vsyncpa %s9, 0
    %11 = vsyncpa [#allocation6], 0
    %12 = vsyncpa [#allocation4], 0
    %s13 = scalar_lea.sflag [#allocation4], 1
    %14 = vsyncpa %s13, 0
    loop: start=0, step=1, limit=4
    $region2: #{residual_block_forward.5} parent=1 // loop_pre_header
      _
    $region3: #{residual_block_forward.5} parent=1 // loop_header
      %s16 = sphi 0, %s20
      %p17 = scmp.ge.s32.totalorder %s16, 4
      %s26 = sphi 0, %s28
      %s29 = sphi 0, %s26
      %s30 = sphi 0, %s29
      %s46 = sphi 0, %s30
      %s50 = sphi 0, %s50
      %s52 = sphi 0, %s50
      %s53 = sphi 0, %s52
      %s67 = sphi 0, %s53
      %s71 = sphi 0, %s71
      %s73 = sphi 0, %s71
      %s74 = sphi 0, %s73
      %s88 = sphi 0, %s74
      %s94 = sphi 0, %s96
      %s97 = sphi 0, %s94
      %s98 = sphi 0, %s97
      %s114 = sphi 0, %s98
    $region4: #{residual_block_forward.5} parent=1 // loop_header_branch
      %19 = sbr.rel (%p17) target = $region8
    $region5: #{residual_block_forward.5} parent=1 // loop_body
      %s21 = ssub.s32 %s16, 1
      %s22 = ssub.s32 %s16, 2
      %s23 = sadd.s32 %s16, 1
      %s24 = ssub.s32 %s16, %s23
      %p25 = scmp.eq.s32.totalorder %s24, 0
      %s27 = sadd.s32 %s26, 1
      %s28 = scalar_select %p25, %s26, %s27
      %p31 = pneg %p25
      %p32 = scmp.eq.s32.totalorder %s16, 1
      %p33 = por %p31, %p32
      %p34 = scmp.ne.s32.totalorder %s26, %s29
      %p35 = scmp.eq.s32.totalorder %s16, 0
      %p36 = por %p34, %p35
      %p37 = scmp.ne.s32.totalorder %s26, %s29
      %p38 = scmp.eq.s32.totalorder %s21, 1
      %p39 = por %p37, %p38
      %p40 = scmp.ne.s32.totalorder %s29, %s30
      %p41 = scmp.eq.s32.totalorder %s21, 0
      %p42 = por %p40, %p41
      %p43 = scmp.ne.s32.totalorder %s29, %s30
      %p44 = scmp.eq.s32.totalorder %s22, 1
      %p45 = por %p43, %p44
      %p47 = scmp.ne.s32.totalorder %s30, %s46
      %p48 = scmp.eq.s32.totalorder %s22, 0
      %p49 = por %p47, %p48
      %s51 = sadd.s32 %s50, 1
      %p54 = scmp.eq.s32.totalorder %s16, 1
      %p55 = scmp.ne.s32.totalorder %s50, %s52
      %p56 = scmp.eq.s32.totalorder %s16, 0
      %p57 = por %p55, %p56
      %p58 = scmp.ne.s32.totalorder %s50, %s52
      %p59 = scmp.eq.s32.totalorder %s21, 1
      %p60 = por %p58, %p59
      %p61 = scmp.ne.s32.totalorder %s52, %s53
      %p62 = scmp.eq.s32.totalorder %s21, 0
      %p63 = por %p61, %p62
      %p64 = scmp.ne.s32.totalorder %s52, %s53
      %p65 = scmp.eq.s32.totalorder %s22, 1
      %p66 = por %p64, %p65
      %p68 = scmp.ne.s32.totalorder %s53, %s67
      %p69 = scmp.eq.s32.totalorder %s22, 0
      %p70 = por %p68, %p69
      %s72 = sadd.s32 %s71, 1
      %p75 = scmp.eq.s32.totalorder %s16, 1
      %p76 = scmp.ne.s32.totalorder %s71, %s73
      %p77 = scmp.eq.s32.totalorder %s16, 0
      %p78 = por %p76, %p77
      %p79 = scmp.ne.s32.totalorder %s71, %s73
      %p80 = scmp.eq.s32.totalorder %s21, 1
      %p81 = por %p79, %p80
      %p82 = scmp.ne.s32.totalorder %s73, %s74
      %p83 = scmp.eq.s32.totalorder %s21, 0
      %p84 = por %p82, %p83
      %p85 = scmp.ne.s32.totalorder %s73, %s74
      %p86 = scmp.eq.s32.totalorder %s22, 1
      %p87 = por %p85, %p86
      %p89 = scmp.ne.s32.totalorder %s74, %s88
      %p90 = scmp.eq.s32.totalorder %s22, 0
      %p91 = por %p89, %p90
      %s92 = ssub.s32 %s16, %s23
      %p93 = scmp.eq.s32.totalorder %s92, 0
      %s95 = sadd.s32 %s94, 1
      %s96 = scalar_select %p93, %s94, %s95
      %p99 = pneg %p93
      %p100 = scmp.eq.s32.totalorder %s16, 1
      %p101 = por %p99, %p100
      %p102 = scmp.ne.s32.totalorder %s94, %s97
      %p103 = scmp.eq.s32.totalorder %s16, 0
      %p104 = por %p102, %p103
      %p105 = scmp.ne.s32.totalorder %s94, %s97
      %p106 = scmp.eq.s32.totalorder %s21, 1
      %p107 = por %p105, %p106
      %p108 = scmp.ne.s32.totalorder %s97, %s98
      %p109 = scmp.eq.s32.totalorder %s21, 0
      %p110 = por %p108, %p109
      %p111 = scmp.ne.s32.totalorder %s97, %s98
      %p112 = scmp.eq.s32.totalorder %s22, 1
      %p113 = por %p111, %p112
      %p115 = scmp.ne.s32.totalorder %s98, %s114
      %p116 = scmp.eq.s32.totalorder %s22, 0
      %p117 = por %p115, %p116
      %p118 = scmp.le.s32.totalorder 1, %s16
      %p119 = scmp.lt.s32.totalorder %s16, 3
      %p120 = pnand %p118, %p119
      %p121 = pneg %p120
      // Predicated region
      $region9: #{residual_block_forward.5} parent=5 // pred_check
        _
      $region10: #{residual_block_forward.5} parent=5 // pred_check_branch
        %123 = sbr.rel (%p120) target = $region12
      $region11: #{residual_block_forward.5} parent=5 // pred_region
        %s124 = ssub.s32 %s16, 1
        // Predicated region
        $region13: #{residual_block_forward.5} parent=11 // pred_check
          %p125 = pneg %p63
        $region14: #{residual_block_forward.5} parent=11 // pred_check_branch
          %127 = sbr.rel (%p125) target = $region16
        $region15: #{residual_block_forward.5} parent=11 // pred_region
          %s129 = ssub.s32 16, 16
          %130 = vsyncadd [#allocation6], %s129
          %s132 = sshll.u32 [#allocation5], 4
          %s133 = int_to_ptr.vmem [resolvable:$true] %s132
          %135 = dma.hbm_to_vmem [thread:$0]  %s1, 16, %s133, [#allocation6]
        $region16: #{residual_block_forward.5} parent=11 // pred_fallthru
          _
        // Predicated region
        $region17: #{residual_block_forward.5} parent=11 // pred_check
          %p136 = pneg %p84
        $region18: #{residual_block_forward.5} parent=11 // pred_check_branch
          %138 = sbr.rel (%p136) target = $region20
        $region19: #{residual_block_forward.5} parent=11 // pred_region
          %s140 = ssub.s32 16, 16
          %141 = vsyncadd [#allocation6], %s140
          %s143 = sshll.u32 [#allocation7], 4
          %s144 = int_to_ptr.vmem [resolvable:$true] %s143
          %146 = dma.hbm_to_vmem [thread:$0]  %s2, 16, %s144, [#allocation6]
        $region20: #{residual_block_forward.5} parent=11 // pred_fallthru
          _
      $region12: #{residual_block_forward.5} parent=5 // pred_fallthru
        _
      %p147 = scmp.lt.s32.totalorder %s16, 2
      // Predicated region
      $region21: #{residual_block_forward.5} parent=5 // pred_check
        %p148 = pneg %p147
      $region22: #{residual_block_forward.5} parent=5 // pred_check_branch
        %150 = sbr.rel (%p148) target = $region24
      $region23: #{residual_block_forward.5} parent=5 // pred_region
        // Predicated region
        $region25: #{residual_block_forward.5} parent=23 // pred_check
          %p151 = pneg %p36
        $region26: #{residual_block_forward.5} parent=23 // pred_check_branch
          %153 = sbr.rel (%p151) target = $region28
        $region27: #{residual_block_forward.5} parent=23 // pred_region
          %s154 = sand.u32 %s26, 1
          %s155 = scalar_lea.sflag [#allocation3], %s154
          %s156 = sand.u32 %s26, 1
          %s157 = smul.addr %s156, 64
          %s158 = scalar_lea.vmem [#allocation2], %s157
          %s159 = smul.u32 8, %s16
          %s161 = ssub.s32 1024, 1024
          %162 = vsyncadd %s155, %s161
          %s163 = smul.addr %s159, 128
          %s164 = scalar_lea.hbm %s0, %s163
          %s165 = sshll.u32 %s158, 4
          %s166 = int_to_ptr.vmem [resolvable:$true] %s165
          %171 = dma.hbm_to_vmem [thread:$0]  %s164, 1024, %s166, %s155, 128, 128, 8
        $region28: #{residual_block_forward.5} parent=23 // pred_fallthru
          _
      $region24: #{residual_block_forward.5} parent=5 // pred_fallthru
        _
      %p172 = scmp.le.s32.totalorder 1, %s16
      %p173 = scmp.lt.s32.totalorder %s16, 3
      %p174 = pnand %p172, %p173
      %p175 = pneg %p174
      // Predicated region
      $region29: #{residual_block_forward.5} parent=5 // pred_check
        _
      $region30: #{residual_block_forward.5} parent=5 // pred_check_branch
        %177 = sbr.rel (%p174) target = $region32
      $region31: #{residual_block_forward.5} parent=5 // pred_region
        %s178 = ssub.s32 %s16, 1
        %s179 = sand.u32 %s29, 1
        %s180 = scalar_lea.sflag [#allocation3], %s179
        %s181 = sand.u32 %s29, 1
        %s182 = smul.addr %s181, 64
        %s183 = scalar_lea.vmem [#allocation2], %s182
        // Predicated region
        $region33: #{residual_block_forward.5} parent=31 // pred_check
          %p184 = pneg %p42
        $region34: #{residual_block_forward.5} parent=31 // pred_check_branch
          %186 = sbr.rel (%p184) target = $region36
        $region35: #{residual_block_forward.5} parent=31 // pred_region
          %187 = dma.done %s180, 1024
        $region36: #{residual_block_forward.5} parent=31 // pred_fallthru
          _
        // Predicated region
        $region37: #{residual_block_forward.5} parent=31 // pred_check
          %p188 = pneg %p63
        $region38: #{residual_block_forward.5} parent=31 // pred_check_branch
          %190 = sbr.rel (%p188) target = $region40
        $region39: #{residual_block_forward.5} parent=31 // pred_region
          %191 = dma.done [#allocation6], 16
        $region40: #{residual_block_forward.5} parent=31 // pred_fallthru
          _
        // Predicated region
        $region41: #{residual_block_forward.5} parent=31 // pred_check
          %p192 = pneg %p84
        $region42: #{residual_block_forward.5} parent=31 // pred_check_branch
          %194 = sbr.rel (%p192) target = $region44
        $region43: #{residual_block_forward.5} parent=31 // pred_region
          %195 = dma.done [#allocation6], 16
        $region44: #{residual_block_forward.5} parent=31 // pred_fallthru
          _
        %s196 = sand.u32 %s29, 1
        %s197 = scalar_lea.sflag [#allocation3], %s196
        %s198 = sand.u32 %s29, 1
        %s199 = smul.addr %s198, 64
        %s200 = scalar_lea.vmem [#allocation2], %s199
        %p201 = pneg %p42
        %p202 = pneg %p39
        %p203 = pneg %p63
        %p204 = pneg %p60
        %p205 = pneg %p84
        %p206 = pneg %p81
        %p207 = pneg %p110
        %p208 = pneg %p107
        %s209 = sand.u32 %s97, 1
        %s210 = scalar_lea.sflag [#allocation4], %s209
        %s211 = sand.u32 %s97, 1
        %s212 = smul.addr %s211, 64
        %s213 = scalar_lea.vmem [#allocation8], %s212
        %s214 = smul.u32 8, %s21
        %s215 = smul.u32 8, %s21
        %v216 = vld [vmem:[%s183] sm:$0xff]
        %v217 = vld [vmem:[%s183 + $0x8] sm:$0xff]
        %v218 = vld [vmem:[%s183 + $0x10] sm:$0xff]
        %v219 = vld [vmem:[%s183 + $0x18] sm:$0xff]
        %v220 = vld [vmem:[%s183 + $0x20] sm:$0xff]
        %v221 = vld [vmem:[%s183 + $0x28] sm:$0xff]
        %v222 = vld [vmem:[%s183 + $0x30] sm:$0xff]
        %v223 = vld [vmem:[%s183 + $0x38] sm:$0xff]
        %v224 = vld [vmem:[#allocation5] sm:$0x1]
        %v226 = vlaneseq
        %v227 = vshrl.u32 %v226, 7
        %v228 = vsub.s32 0, %v227
        %v229 = vrot.slane %v224, %v228
        %v231 = vmul.f32 %v216, %v229
        %v232 = vmul.f32 %v217, %v229
        %v233 = vmul.f32 %v218, %v229
        %v234 = vmul.f32 %v219, %v229
        %v235 = vmul.f32 %v220, %v229
        %v236 = vmul.f32 %v221, %v229
        %v237 = vmul.f32 %v222, %v229
        %v238 = vmul.f32 %v223, %v229
        %v239 = vld [vmem:[#allocation7] sm:$0x1]
        %v241 = vlaneseq
        %v242 = vshrl.u32 %v241, 7
        %v243 = vsub.s32 0, %v242
        %v244 = vrot.slane %v239, %v243
        %v246 = vadd.f32 %v231, %v244
        %v247 = vadd.f32 %v232, %v244
        %v248 = vadd.f32 %v233, %v244
        %v249 = vadd.f32 %v234, %v244
        %v250 = vadd.f32 %v235, %v244
        %v251 = vadd.f32 %v236, %v244
        %v252 = vadd.f32 %v237, %v244
        %v253 = vadd.f32 %v238, %v244
        %v254 = vmax.f32 %v246, 0.0
        %v255 = vmax.f32 %v247, 0.0
        %v256 = vmax.f32 %v248, 0.0
        %v257 = vmax.f32 %v249, 0.0
        %v258 = vmax.f32 %v250, 0.0
        %v259 = vmax.f32 %v251, 0.0
        %v260 = vmax.f32 %v252, 0.0
        %v261 = vmax.f32 %v253, 0.0
        %262 = vst [vmem:[%s213] sm:$0xff] %v254
        %263 = vst [vmem:[%s213 + $0x8] sm:$0xff] %v255
        %264 = vst [vmem:[%s213 + $0x10] sm:$0xff] %v256
        %265 = vst [vmem:[%s213 + $0x18] sm:$0xff] %v257
        %266 = vst [vmem:[%s213 + $0x20] sm:$0xff] %v258
        %267 = vst [vmem:[%s213 + $0x28] sm:$0xff] %v259
        %268 = vst [vmem:[%s213 + $0x30] sm:$0xff] %v260
        %269 = vst [vmem:[%s213 + $0x38] sm:$0xff] %v261
        %s270 = sand.u32 %s97, 1
        %s271 = scalar_lea.sflag [#allocation4], %s270
        %s272 = sand.u32 %s97, 1
        %s273 = smul.addr %s272, 64
        %s274 = scalar_lea.vmem [#allocation8], %s273
        // Predicated region
        $region45: #{residual_block_forward.5} parent=31 // pred_check
          %p275 = pneg %p107
        $region46: #{residual_block_forward.5} parent=31 // pred_check_branch
          %277 = sbr.rel (%p275) target = $region48
        $region47: #{residual_block_forward.5} parent=31 // pred_region
          %s278 = smul.u32 8, %s21
          %s280 = ssub.s32 1024, 1024
          %281 = vsyncadd %s271, %s280
          %s282 = smul.addr %s278, 128
          %s283 = scalar_lea.hbm %s3, %s282
          %s284 = sshll.u32 %s274, 4
          %s285 = int_to_ptr.vmem [resolvable:$true] %s284
          %290 = dma.vmem_to_hbm [thread:$0]  %s285, 1024, %s283, %s271, 128, 128, 8
        $region48: #{residual_block_forward.5} parent=31 // pred_fallthru
          _
      $region32: #{residual_block_forward.5} parent=5 // pred_fallthru
        _
      %p291 = scmp.le.s32.totalorder 2, %s16
      // Predicated region
      $region49: #{residual_block_forward.5} parent=5 // pred_check
        %p292 = pneg %p291
      $region50: #{residual_block_forward.5} parent=5 // pred_check_branch
        %294 = sbr.rel (%p292) target = $region52
      $region51: #{residual_block_forward.5} parent=5 // pred_region
        %s295 = ssub.s32 %s16, 2
        // Predicated region
        $region53: #{residual_block_forward.5} parent=51 // pred_check
          %p296 = pneg %p113
        $region54: #{residual_block_forward.5} parent=51 // pred_check_branch
          %298 = sbr.rel (%p296) target = $region56
        $region55: #{residual_block_forward.5} parent=51 // pred_region
          %s299 = sand.u32 %s98, 1
          %s300 = scalar_lea.sflag [#allocation4], %s299
          %s301 = sand.u32 %s98, 1
          %s302 = smul.addr %s301, 64
          %s303 = scalar_lea.vmem [#allocation8], %s302
          %304 = dma.done %s300, 1024
        $region56: #{residual_block_forward.5} parent=51 // pred_fallthru
          _
      $region52: #{residual_block_forward.5} parent=5 // pred_fallthru
        _
    $region6: #{residual_block_forward.5} parent=1 // loop_footer
      %s20 = sadd.s32 1, %s16
    $region7: #{residual_block_forward.5} parent=1 // loop_footer_branch
      %15 = sbr.rel target = $region3
    $region8: #{residual_block_forward.5} parent=1 // loop_exit
      _
    %305 = vsyncpa [#allocation3], 1
    %s306 = scalar_lea.sflag [#allocation3], 1
    %307 = vsyncpa %s306, 1
    %308 = vsyncpa [#allocation6], 1
    %309 = vsyncpa [#allocation4], 1
    %s310 = scalar_lea.sflag [#allocation4], 1
    %311 = vsyncpa %s310, 1

// kernel: residual_block_forward.7
$region0: #{residual_block_forward.7}
  #allocation0 [shape = 'u32[]', space=smem, size = 0x4, offset = 0x4, fixed_abs, tag = 'smem constant byte address 0x4 - core index']
  #allocation1 [shape = 'u32[144,128]{1,0:T(1,128)}', space=vmem, size = 0x12000, scoped, tag = 'internal scratch']
  %s0 = inlined_call_operand.hbm [shape: f32[128,128], index: 0, kind: input, shape index: {}]
  %s1 = inlined_call_operand.hbm [shape: f32[1,128], index: 1, kind: input, shape index: {}]
  %s2 = inlined_call_operand.hbm [shape: f32[1,128], index: 2, kind: input, shape index: {}]
  %s3 = inlined_call_operand.hbm [shape: f32[128,128], index: 3, kind: input, shape index: {}]
  %s4 = inlined_call_operand.hbm [shape: f32[128,128], index: 4, kind: input, shape index: {}]
  %s5 = inlined_call_operand.hbm [shape: f32[1,128], index: 5, kind: input, shape index: {}]
  %s6 = inlined_call_operand.hbm [shape: f32[1,128], index: 6, kind: input, shape index: {}]
  %s7 = inlined_call_operand.hbm [shape: f32[128,128], index: 7, kind: output, shape index: {}]
  %s8 = sld [smem:[#allocation0]]
  $region89: #{residual_block_forward.7} parent=0
    _
  %s10 = ssub.s32 1, %s8
  %s11 = scalar_select 0, %s10, %s8
  $region1: #{residual_block_forward.7} parent=0
    #allocation2 [shape = 'u8[65536]{0}', space=vmem, size = 0x10000, scoped, tag = 'input window, operand 0']
    #allocation3 [shape = 's32[2]{0}', space=sflag, size = 0x8, scoped, tag = 'scoped memory for residual_block_forward.7']
    #allocation4 [shape = 's32[2]{0}', space=sflag, size = 0x8, scoped, tag = 'scoped memory for residual_block_forward.7']
    #allocation5 [shape = 'u8[512]{0}', space=vmem, size = 0x400, scoped, tag = 'input window, operand 1, single buffered']
    #allocation6 [shape = 's32[1]{0}', space=sflag, size = 0x4, scoped, tag = 'scoped memory for residual_block_forward.7']
    #allocation7 [shape = 'u8[512]{0}', space=vmem, size = 0x400, scoped, tag = 'input window, operand 2, single buffered']
    #allocation8 [shape = 'u8[65536]{0}', space=vmem, size = 0x10000, scoped, tag = 'input window, operand 3']
    #allocation9 [shape = 's32[2]{0}', space=sflag, size = 0x8, scoped, tag = 'scoped memory for residual_block_forward.7']
    #allocation10 [shape = 'u8[65536]{0}', space=vmem, size = 0x10000, scoped, tag = 'input window, operand 4, single buffered']
    #allocation11 [shape = 'u8[512]{0}', space=vmem, size = 0x400, scoped, tag = 'input window, operand 5, single buffered']
    #allocation12 [shape = 's32[1]{0}', space=sflag, size = 0x4, scoped, tag = 'scoped memory for residual_block_forward.7']
    #allocation13 [shape = 'u8[512]{0}', space=vmem, size = 0x400, scoped, tag = 'input window, operand 6, single buffered']
    #allocation14 [shape = 'u8[65536]{0}', space=vmem, size = 0x10000, scoped, tag = 'output window, operand 0']
    %12 = vsyncpa [#allocation3], 0
    %s13 = scalar_lea.sflag [#allocation3], 1
    %14 = vsyncpa %s13, 0
    %15 = vsyncpa [#allocation6], 0
    %16 = vsyncpa [#allocation9], 0
    %s17 = scalar_lea.sflag [#allocation9], 1
    %18 = vsyncpa %s17, 0
    %19 = vsyncpa [#allocation12], 0
    %20 = vsyncpa [#allocation4], 0
    %s21 = scalar_lea.sflag [#allocation4], 1
    %22 = vsyncpa %s21, 0
    loop: start=0, step=1, limit=4
    $region2: #{residual_block_forward.7} parent=1 // loop_pre_header
      _
    $region3: #{residual_block_forward.7} parent=1 // loop_header
      %s24 = sphi 0, %s28
      %p25 = scmp.ge.s32.totalorder %s24, 4
      %s34 = sphi 0, %s36
      %s37 = sphi 0, %s34
      %s38 = sphi 0, %s37
      %s54 = sphi 0, %s38
      %s58 = sphi 0, %s58
      %s60 = sphi 0, %s58
      %s61 = sphi 0, %s60
      %s75 = sphi 0, %s61
      %s79 = sphi 0, %s79
      %s81 = sphi 0, %s79
      %s82 = sphi 0, %s81
      %s96 = sphi 0, %s82
      %s102 = sphi 0, %s104
      %s105 = sphi 0, %s102
      %s106 = sphi 0, %s105
      %s122 = sphi 0, %s106
      %s126 = sphi 0, %s126
      %s128 = sphi 0, %s126
      %s129 = sphi 0, %s128
      %s143 = sphi 0, %s129
      %s147 = sphi 0, %s147
      %s149 = sphi 0, %s147
      %s150 = sphi 0, %s149
      %s164 = sphi 0, %s150
      %s168 = sphi 0, %s168
      %s170 = sphi 0, %s168
      %s171 = sphi 0, %s170
      %s185 = sphi 0, %s171
      %s191 = sphi 0, %s193
      %s194 = sphi 0, %s191
      %s195 = sphi 0, %s194
      %s211 = sphi 0, %s195
    $region4: #{residual_block_forward.7} parent=1 // loop_header_branch
      %27 = sbr.rel (%p25) target = $region8
    $region5: #{residual_block_forward.7} parent=1 // loop_body
      %s29 = ssub.s32 %s24, 1
      %s30 = ssub.s32 %s24, 2
      %s31 = sadd.s32 %s24, 1
      %s32 = ssub.s32 %s24, %s31
      %p33 = scmp.eq.s32.totalorder %s32, 0
      %s35 = sadd.s32 %s34, 1
      %s36 = scalar_select %p33, %s34, %s35
      %p39 = pneg %p33
      %p40 = scmp.eq.s32.totalorder %s24, 1
      %p41 = por %p39, %p40
      %p42 = scmp.ne.s32.totalorder %s34, %s37
      %p43 = scmp.eq.s32.totalorder %s24, 0
      %p44 = por %p42, %p43
      %p45 = scmp.ne.s32.totalorder %s34, %s37
      %p46 = scmp.eq.s32.totalorder %s29, 1
      %p47 = por %p45, %p46
      %p48 = scmp.ne.s32.totalorder %s37, %s38
      %p49 = scmp.eq.s32.totalorder %s29, 0
      %p50 = por %p48, %p49
      %p51 = scmp.ne.s32.totalorder %s37, %s38
      %p52 = scmp.eq.s32.totalorder %s30, 1
      %p53 = por %p51, %p52
      %p55 = scmp.ne.s32.totalorder %s38, %s54
      %p56 = scmp.eq.s32.totalorder %s30, 0
      %p57 = por %p55, %p56
      %s59 = sadd.s32 %s58, 1
      %p62 = scmp.eq.s32.totalorder %s24, 1
      %p63 = scmp.ne.s32.totalorder %s58, %s60
      %p64 = scmp.eq.s32.totalorder %s24, 0
      %p65 = por %p63, %p64
      %p66 = scmp.ne.s32.totalorder %s58, %s60
      %p67 = scmp.eq.s32.totalorder %s29, 1
      %p68 = por %p66, %p67
      %p69 = scmp.ne.s32.totalorder %s60, %s61
      %p70 = scmp.eq.s32.totalorder %s29, 0
      %p71 = por %p69, %p70
      %p72 = scmp.ne.s32.totalorder %s60, %s61
      %p73 = scmp.eq.s32.totalorder %s30, 1
      %p74 = por %p72, %p73
      %p76 = scmp.ne.s32.totalorder %s61, %s75
      %p77 = scmp.eq.s32.totalorder %s30, 0
      %p78 = por %p76, %p77
      %s80 = sadd.s32 %s79, 1
      %p83 = scmp.eq.s32.totalorder %s24, 1
      %p84 = scmp.ne.s32.totalorder %s79, %s81
      %p85 = scmp.eq.s32.totalorder %s24, 0
      %p86 = por %p84, %p85
      %p87 = scmp.ne.s32.totalorder %s79, %s81
      %p88 = scmp.eq.s32.totalorder %s29, 1
      %p89 = por %p87, %p88
      %p90 = scmp.ne.s32.totalorder %s81, %s82
      %p91 = scmp.eq.s32.totalorder %s29, 0
      %p92 = por %p90, %p91
      %p93 = scmp.ne.s32.totalorder %s81, %s82
      %p94 = scmp.eq.s32.totalorder %s30, 1
      %p95 = por %p93, %p94
      %p97 = scmp.ne.s32.totalorder %s82, %s96
      %p98 = scmp.eq.s32.totalorder %s30, 0
      %p99 = por %p97, %p98
      %s100 = ssub.s32 %s24, %s31
      %p101 = scmp.eq.s32.totalorder %s100, 0
      %s103 = sadd.s32 %s102, 1
      %s104 = scalar_select %p101, %s102, %s103
      %p107 = pneg %p101
      %p108 = scmp.eq.s32.totalorder %s24, 1
      %p109 = por %p107, %p108
      %p110 = scmp.ne.s32.totalorder %s102, %s105
      %p111 = scmp.eq.s32.totalorder %s24, 0
      %p112 = por %p110, %p111
      %p113 = scmp.ne.s32.totalorder %s102, %s105
      %p114 = scmp.eq.s32.totalorder %s29, 1
      %p115 = por %p113, %p114
      %p116 = scmp.ne.s32.totalorder %s105, %s106
      %p117 = scmp.eq.s32.totalorder %s29, 0
      %p118 = por %p116, %p117
      %p119 = scmp.ne.s32.totalorder %s105, %s106
      %p120 = scmp.eq.s32.totalorder %s30, 1
      %p121 = por %p119, %p120
      %p123 = scmp.ne.s32.totalorder %s106, %s122
      %p124 = scmp.eq.s32.totalorder %s30, 0
      %p125 = por %p123, %p124
      %s127 = sadd.s32 %s126, 1
      %p130 = scmp.eq.s32.totalorder %s24, 1
      %p131 = scmp.ne.s32.totalorder %s126, %s128
      %p132 = scmp.eq.s32.totalorder %s24, 0
      %p133 = por %p131, %p132
      %p134 = scmp.ne.s32.totalorder %s126, %s128
      %p135 = scmp.eq.s32.totalorder %s29, 1
      %p136 = por %p134, %p135
      %p137 = scmp.ne.s32.totalorder %s128, %s129
      %p138 = scmp.eq.s32.totalorder %s29, 0
      %p139 = por %p137, %p138
      %p140 = scmp.ne.s32.totalorder %s128, %s129
      %p141 = scmp.eq.s32.totalorder %s30, 1
      %p142 = por %p140, %p141
      %p144 = scmp.ne.s32.totalorder %s129, %s143
      %p145 = scmp.eq.s32.totalorder %s30, 0
      %p146 = por %p144, %p145
      %s148 = sadd.s32 %s147, 1
      %p151 = scmp.eq.s32.totalorder %s24, 1
      %p152 = scmp.ne.s32.totalorder %s147, %s149
      %p153 = scmp.eq.s32.totalorder %s24, 0
      %p154 = por %p152, %p153
      %p155 = scmp.ne.s32.totalorder %s147, %s149
      %p156 = scmp.eq.s32.totalorder %s29, 1
      %p157 = por %p155, %p156
      %p158 = scmp.ne.s32.totalorder %s149, %s150
      %p159 = scmp.eq.s32.totalorder %s29, 0
      %p160 = por %p158, %p159
      %p161 = scmp.ne.s32.totalorder %s149, %s150
      %p162 = scmp.eq.s32.totalorder %s30, 1
      %p163 = por %p161, %p162
      %p165 = scmp.ne.s32.totalorder %s150, %s164
      %p166 = scmp.eq.s32.totalorder %s30, 0
      %p167 = por %p165, %p166
      %s169 = sadd.s32 %s168, 1
      %p172 = scmp.eq.s32.totalorder %s24, 1
      %p173 = scmp.ne.s32.totalorder %s168, %s170
      %p174 = scmp.eq.s32.totalorder %s24, 0
      %p175 = por %p173, %p174
      %p176 = scmp.ne.s32.totalorder %s168, %s170
      %p177 = scmp.eq.s32.totalorder %s29, 1
      %p178 = por %p176, %p177
      %p179 = scmp.ne.s32.totalorder %s170, %s171
      %p180 = scmp.eq.s32.totalorder %s29, 0
      %p181 = por %p179, %p180
      %p182 = scmp.ne.s32.totalorder %s170, %s171
      %p183 = scmp.eq.s32.totalorder %s30, 1
      %p184 = por %p182, %p183
      %p186 = scmp.ne.s32.totalorder %s171, %s185
      %p187 = scmp.eq.s32.totalorder %s30, 0
      %p188 = por %p186, %p187
      %s189 = ssub.s32 %s24, %s31
      %p190 = scmp.eq.s32.totalorder %s189, 0
      %s192 = sadd.s32 %s191, 1
      %s193 = scalar_select %p190, %s191, %s192
      %p196 = pneg %p190
      %p197 = scmp.eq.s32.totalorder %s24, 1
      %p198 = por %p196, %p197
      %p199 = scmp.ne.s32.totalorder %s191, %s194
      %p200 = scmp.eq.s32.totalorder %s24, 0
      %p201 = por %p199, %p200
      %p202 = scmp.ne.s32.totalorder %s191, %s194
      %p203 = scmp.eq.s32.totalorder %s29, 1
      %p204 = por %p202, %p203
      %p205 = scmp.ne.s32.totalorder %s194, %s195
      %p206 = scmp.eq.s32.totalorder %s29, 0
      %p207 = por %p205, %p206
      %p208 = scmp.ne.s32.totalorder %s194, %s195
      %p209 = scmp.eq.s32.totalorder %s30, 1
      %p210 = por %p208, %p209
      %p212 = scmp.ne.s32.totalorder %s195, %s211
      %p213 = scmp.eq.s32.totalorder %s30, 0
      %p214 = por %p212, %p213
      %p215 = scmp.le.s32.totalorder 1, %s24
      %p216 = scmp.lt.s32.totalorder %s24, 3
      %p217 = pnand %p215, %p216
      %p218 = pneg %p217
      // Predicated region
      $region9: #{residual_block_forward.7} parent=5 // pred_check
        _
      $region10: #{residual_block_forward.7} parent=5 // pred_check_branch
        %220 = sbr.rel (%p217) target = $region12
      $region11: #{residual_block_forward.7} parent=5 // pred_region
        %s221 = ssub.s32 %s24, 1
        // Predicated region
        $region13: #{residual_block_forward.7} parent=11 // pred_check
          %p222 = pneg %p71
        $region14: #{residual_block_forward.7} parent=11 // pred_check_branch
          %224 = sbr.rel (%p222) target = $region16
        $region15: #{residual_block_forward.7} parent=11 // pred_region
          %s226 = ssub.s32 16, 16
          %227 = vsyncadd [#allocation6], %s226
          %s229 = sshll.u32 [#allocation5], 4
          %s230 = int_to_ptr.vmem [resolvable:$true] %s229
          %232 = dma.hbm_to_vmem [thread:$0]  %s1, 16, %s230, [#allocation6]
        $region16: #{residual_block_forward.7} parent=11 // pred_fallthru
          _
        // Predicated region
        $region17: #{residual_block_forward.7} parent=11 // pred_check
          %p233 = pneg %p92
        $region18: #{residual_block_forward.7} parent=11 // pred_check_branch
          %235 = sbr.rel (%p233) target = $region20
        $region19: #{residual_block_forward.7} parent=11 // pred_region
          %s237 = ssub.s32 16, 16
          %238 = vsyncadd [#allocation6], %s237
          %s240 = sshll.u32 [#allocation7], 4
          %s241 = int_to_ptr.vmem [resolvable:$true] %s240
          %243 = dma.hbm_to_vmem [thread:$0]  %s2, 16, %s241, [#allocation6]
        $region20: #{residual_block_forward.7} parent=11 // pred_fallthru
          _
        // Predicated region
        $region21: #{residual_block_forward.7} parent=11 // pred_check
          %p244 = pneg %p139
        $region22: #{residual_block_forward.7} parent=11 // pred_check_branch
          %246 = sbr.rel (%p244) target = $region24
        $region23: #{residual_block_forward.7} parent=11 // pred_region
          %s248 = ssub.s32 2048, 2048
          %249 = vsyncadd [#allocation9], %s248
          %s250 = sshll.u32 [#allocation10], 4
          %s251 = int_to_ptr.vmem [resolvable:$true] %s250
          %256 = dma.hbm_to_vmem [thread:$0]  %s4, 2048, %s251, [#allocation9], 128, 128, 8
        $region24: #{residual_block_forward.7} parent=11 // pred_fallthru
          _
        // Predicated region
        $region25: #{residual_block_forward.7} parent=11 // pred_check
          %p257 = pneg %p160
        $region26: #{residual_block_forward.7} parent=11 // pred_check_branch
          %259 = sbr.rel (%p257) target = $region28
        $region27: #{residual_block_forward.7} parent=11 // pred_region
          %s261 = ssub.s32 16, 16
          %262 = vsyncadd [#allocation12], %s261
          %s264 = sshll.u32 [#allocation11], 4
          %s265 = int_to_ptr.vmem [resolvable:$true] %s264
          %267 = dma.hbm_to_vmem [thread:$0]  %s5, 16, %s265, [#allocation12]
        $region28: #{residual_block_forward.7} parent=11 // pred_fallthru
          _
        // Predicated region
        $region29: #{residual_block_forward.7} parent=11 // pred_check
          %p268 = pneg %p181
        $region30: #{residual_block_forward.7} parent=11 // pred_check_branch
          %270 = sbr.rel (%p268) target = $region32
        $region31: #{residual_block_forward.7} parent=11 // pred_region
          %s272 = ssub.s32 16, 16
          %273 = vsyncadd [#allocation12], %s272
          %s275 = sshll.u32 [#allocation13], 4
          %s276 = int_to_ptr.vmem [resolvable:$true] %s275
          %278 = dma.hbm_to_vmem [thread:$0]  %s6, 16, %s276, [#allocation12]
        $region32: #{residual_block_forward.7} parent=11 // pred_fallthru
          _
      $region12: #{residual_block_forward.7} parent=5 // pred_fallthru
        _
      %p279 = scmp.lt.s32.totalorder %s24, 2
      // Predicated region
      $region33: #{residual_block_forward.7} parent=5 // pred_check
        %p280 = pneg %p279
      $region34: #{residual_block_forward.7} parent=5 // pred_check_branch
        %282 = sbr.rel (%p280) target = $region36
      $region35: #{residual_block_forward.7} parent=5 // pred_region
        // Predicated region
        $region37: #{residual_block_forward.7} parent=35 // pred_check
          %p283 = pneg %p44
        $region38: #{residual_block_forward.7} parent=35 // pred_check_branch
          %285 = sbr.rel (%p283) target = $region40
        $region39: #{residual_block_forward.7} parent=35 // pred_region
          %s286 = sand.u32 %s34, 1
          %s287 = scalar_lea.sflag [#allocation3], %s286
          %s288 = sand.u32 %s34, 1
          %s289 = smul.addr %s288, 64
          %s290 = scalar_lea.vmem [#allocation2], %s289
          %s291 = smul.u32 8, %s24
          %s293 = ssub.s32 1024, 1024
          %294 = vsyncadd %s287, %s293
          %s295 = smul.addr %s291, 128
          %s296 = scalar_lea.hbm %s0, %s295
          %s297 = sshll.u32 %s290, 4
          %s298 = int_to_ptr.vmem [resolvable:$true] %s297
          %303 = dma.hbm_to_vmem [thread:$0]  %s296, 1024, %s298, %s287, 128, 128, 8
        $region40: #{residual_block_forward.7} parent=35 // pred_fallthru
          _
        // Predicated region
        $region41: #{residual_block_forward.7} parent=35 // pred_check
          %p304 = pneg %p112
        $region42: #{residual_block_forward.7} parent=35 // pred_check_branch
          %306 = sbr.rel (%p304) target = $region44
        $region43: #{residual_block_forward.7} parent=35 // pred_region
          %s307 = sand.u32 %s24, 1
          %s308 = scalar_lea.sflag [#allocation9], %s307
          %s309 = sand.u32 %s102, 1
          %s310 = smul.addr %s309, 64
          %s311 = scalar_lea.vmem [#allocation8], %s310
          %s312 = smul.u32 8, %s24
          %s314 = ssub.s32 1024, 1024
          %315 = vsyncadd %s308, %s314
          %s316 = smul.addr %s312, 128
          %s317 = scalar_lea.hbm %s3, %s316
          %s318 = sshll.u32 %s311, 4
          %s319 = int_to_ptr.vmem [resolvable:$true] %s318
          %324 = dma.hbm_to_vmem [thread:$0]  %s317, 1024, %s319, %s308, 128, 128, 8
        $region44: #{residual_block_forward.7} parent=35 // pred_fallthru
          _
      $region36: #{residual_block_forward.7} parent=5 // pred_fallthru
        _
      %p325 = scmp.le.s32.totalorder 1, %s24
      %p326 = scmp.lt.s32.totalorder %s24, 3
      %p327 = pnand %p325, %p326
      %p328 = pneg %p327
      // Predicated region
      $region45: #{residual_block_forward.7} parent=5 // pred_check
        _
      $region46: #{residual_block_forward.7} parent=5 // pred_check_branch
        %330 = sbr.rel (%p327) target = $region48
      $region47: #{residual_block_forward.7} parent=5 // pred_region
        %s331 = ssub.s32 %s24, 1
        %s332 = sand.u32 %s37, 1
        %s333 = scalar_lea.sflag [#allocation3], %s332
        %s334 = sand.u32 %s37, 1
        %s335 = smul.addr %s334, 64
        %s336 = scalar_lea.vmem [#allocation2], %s335
        // Predicated region
        $region49: #{residual_block_forward.7} parent=47 // pred_check
          %p337 = pneg %p50
        $region50: #{residual_block_forward.7} parent=47 // pred_check_branch
          %339 = sbr.rel (%p337) target = $region52
        $region51: #{residual_block_forward.7} parent=47 // pred_region
          %340 = dma.done %s333, 1024
        $region52: #{residual_block_forward.7} parent=47 // pred_fallthru
          _
        // Predicated region
        $region53: #{residual_block_forward.7} parent=47 // pred_check
          %p341 = pneg %p71
        $region54: #{residual_block_forward.7} parent=47 // pred_check_branch
          %343 = sbr.rel (%p341) target = $region56
        $region55: #{residual_block_forward.7} parent=47 // pred_region
          %344 = dma.done [#allocation6], 16
        $region56: #{residual_block_forward.7} parent=47 // pred_fallthru
          _
        // Predicated region
        $region57: #{residual_block_forward.7} parent=47 // pred_check
          %p345 = pneg %p92
        $region58: #{residual_block_forward.7} parent=47 // pred_check_branch
          %347 = sbr.rel (%p345) target = $region60
        $region59: #{residual_block_forward.7} parent=47 // pred_region
          %348 = dma.done [#allocation6], 16
        $region60: #{residual_block_forward.7} parent=47 // pred_fallthru
          _
        %s349 = sand.u32 %s29, 1
        %s350 = scalar_lea.sflag [#allocation9], %s349
        %s351 = sand.u32 %s105, 1
        %s352 = smul.addr %s351, 64
        %s353 = scalar_lea.vmem [#allocation8], %s352
        // Predicated region
        $region61: #{residual_block_forward.7} parent=47 // pred_check
          %p354 = pneg %p118
        $region62: #{residual_block_forward.7} parent=47 // pred_check_branch
          %356 = sbr.rel (%p354) target = $region64
        $region63: #{residual_block_forward.7} parent=47 // pred_region
          %357 = dma.done %s350, 1024
        $region64: #{residual_block_forward.7} parent=47 // pred_fallthru
          _
        // Predicated region
        $region65: #{residual_block_forward.7} parent=47 // pred_check
          %p358 = pneg %p139
        $region66: #{residual_block_forward.7} parent=47 // pred_check_branch
          %360 = sbr.rel (%p358) target = $region68
        $region67: #{residual_block_forward.7} parent=47 // pred_region
          %361 = dma.done [#allocation9], 2048
        $region68: #{residual_block_forward.7} parent=47 // pred_fallthru
          _
        // Predicated region
        $region69: #{residual_block_forward.7} parent=47 // pred_check
          %p362 = pneg %p160
        $region70: #{residual_block_forward.7} parent=47 // pred_check_branch
          %364 = sbr.rel (%p362) target = $region72
        $region71: #{residual_block_forward.7} parent=47 // pred_region
          %365 = dma.done [#allocation12], 16
        $region72: #{residual_block_forward.7} parent=47 // pred_fallthru
          _
        // Predicated region
        $region73: #{residual_block_forward.7} parent=47 // pred_check
          %p366 = pneg %p181
        $region74: #{residual_block_forward.7} parent=47 // pred_check_branch
          %368 = sbr.rel (%p366) target = $region76
        $region75: #{residual_block_forward.7} parent=47 // pred_region
          %369 = dma.done [#allocation12], 16
        $region76: #{residual_block_forward.7} parent=47 // pred_fallthru
          _
        %s370 = sand.u32 %s37, 1
        %s371 = scalar_lea.sflag [#allocation3], %s370
        %s372 = sand.u32 %s37, 1
        %s373 = smul.addr %s372, 64
        %s374 = scalar_lea.vmem [#allocation2], %s373
        %p375 = pneg %p50
        %p376 = pneg %p47
        %p377 = pneg %p71
        %p378 = pneg %p68
        %p379 = pneg %p92
        %p380 = pneg %p89
        %s381 = sand.u32 %s29, 1
        %s382 = scalar_lea.sflag [#allocation9], %s381
        %s383 = sand.u32 %s105, 1
        %s384 = smul.addr %s383, 64
        %s385 = scalar_lea.vmem [#allocation8], %s384
        %p386 = pneg %p118
        %p387 = pneg %p115
        %p388 = pneg %p139
        %p389 = pneg %p136
        %p390 = pneg %p160
        %p391 = pneg %p157
        %p392 = pneg %p181
        %p393 = pneg %p178
        %p394 = pneg %p207
        %p395 = pneg %p204
        %s396 = sand.u32 %s194, 1
        %s397 = scalar_lea.sflag [#allocation4], %s396
        %s398 = sand.u32 %s194, 1
        %s399 = smul.addr %s398, 64
        %s400 = scalar_lea.vmem [#allocation14], %s399
        %s401 = smul.u32 8, %s29
        %s402 = smul.u32 8, %s29
        %s403 = smul.u32 8, %s29
        %v404 = vld [vmem:[%s336] sm:$0xff]
        %v405 = vld [vmem:[%s336 + $0x8] sm:$0xff]
        %v406 = vld [vmem:[%s336 + $0x10] sm:$0xff]
        %v407 = vld [vmem:[%s336 + $0x18] sm:$0xff]
        %v408 = vld [vmem:[%s336 + $0x20] sm:$0xff]
        %v409 = vld [vmem:[%s336 + $0x28] sm:$0xff]
        %v410 = vld [vmem:[%s336 + $0x30] sm:$0xff]
        %v411 = vld [vmem:[%s336 + $0x38] sm:$0xff]
        %v412 = vld [vmem:[#allocation5] sm:$0x1]
        %v414 = vlaneseq
        %v415 = vshrl.u32 %v414, 7
        %v416 = vsub.s32 0, %v415
        %v417 = vrot.slane %v412, %v416
        %v419 = vmul.f32 %v404, %v417
        %v420 = vmul.f32 %v405, %v417
        %v421 = vmul.f32 %v406, %v417
        %v422 = vmul.f32 %v407, %v417
        %v423 = vmul.f32 %v408, %v417
        %v424 = vmul.f32 %v409, %v417
        %v425 = vmul.f32 %v410, %v417
        %v426 = vmul.f32 %v411, %v417
        %v427 = vld [vmem:[#allocation7] sm:$0x1]
        %v429 = vlaneseq
        %v430 = vshrl.u32 %v429, 7
        %v431 = vsub.s32 0, %v430
        %v432 = vrot.slane %v427, %v431
        %v434 = vadd.f32 %v419, %v432
        %v435 = vadd.f32 %v420, %v432
        %v436 = vadd.f32 %v421, %v432
        %v437 = vadd.f32 %v422, %v432
        %v438 = vadd.f32 %v423, %v432
        %v439 = vadd.f32 %v424, %v432
        %v440 = vadd.f32 %v425, %v432
        %v441 = vadd.f32 %v426, %v432
        %v442 = vld [vmem:[%s353] sm:$0xff]
        %v443 = vld [vmem:[%s353 + $0x8] sm:$0xff]
        %v444 = vld [vmem:[%s353 + $0x10] sm:$0xff]
        %v445 = vld [vmem:[%s353 + $0x18] sm:$0xff]
        %v446 = vld [vmem:[%s353 + $0x20] sm:$0xff]
        %v447 = vld [vmem:[%s353 + $0x28] sm:$0xff]
        %v448 = vld [vmem:[%s353 + $0x30] sm:$0xff]
        %v449 = vld [vmem:[%s353 + $0x38] sm:$0xff]
        %v450 = vld [vmem:[#allocation10] sm:$0xff]
        %v451 = vld [vmem:[#allocation10 + $0x8] sm:$0xff]
        %v452 = vld [vmem:[#allocation10 + $0x10] sm:$0xff]
        %v453 = vld [vmem:[#allocation10 + $0x18] sm:$0xff]
        %v454 = vld [vmem:[#allocation10 + $0x20] sm:$0xff]
        %v455 = vld [vmem:[#allocation10 + $0x28] sm:$0xff]
        %v456 = vld [vmem:[#allocation10 + $0x30] sm:$0xff]
        %v457 = vld [vmem:[#allocation10 + $0x38] sm:$0xff]
        %v458 = vld [vmem:[#allocation10 + $0x40] sm:$0xff]
        %v459 = vld [vmem:[#allocation10 + $0x48] sm:$0xff]
        %v460 = vld [vmem:[#allocation10 + $0x50] sm:$0xff]
        %v461 = vld [vmem:[#allocation10 + $0x58] sm:$0xff]
        %v462 = vld [vmem:[#allocation10 + $0x60] sm:$0xff]
        %v463 = vld [vmem:[#allocation10 + $0x68] sm:$0xff]
        %v464 = vld [vmem:[#allocation10 + $0x70] sm:$0xff]
        %v465 = vld [vmem:[#allocation10 + $0x78] sm:$0xff]
        %466 = vmatprep.subr.mxu0 0.0
        %467 = vmatpush1.msra.mxu0 %v450
        %468 = vmatprep.subr.mxu0 0.0
        %469 = vmatpush1.msra.mxu0 %v451
        %470 = vmatprep.subr.mxu0 0.0
        %471 = vmatpush1.msra.mxu0 %v452
        %472 = vmatprep.subr.mxu0 0.0
        %473 = vmatpush1.msra.mxu0 %v453
        %474 = vmatprep.subr.mxu0 0.0
        %475 = vmatpush1.msra.mxu0 %v454
        %476 = vmatprep.subr.mxu0 0.0
        %477 = vmatpush1.msra.mxu0 %v455
        %478 = vmatprep.subr.mxu0 0.0
        %479 = vmatpush1.msra.mxu0 %v456
        %480 = vmatprep.subr.mxu0 0.0
        %481 = vmatpush1.msra.mxu0 %v457
        %482 = vmatprep.subr.mxu0 0.0
        %483 = vmatpush1.msra.mxu0 %v458
        %484 = vmatprep.subr.mxu0 0.0
        %485 = vmatpush1.msra.mxu0 %v459
        %486 = vmatprep.subr.mxu0 0.0
        %487 = vmatpush1.msra.mxu0 %v460
        %488 = vmatprep.subr.mxu0 0.0
        %489 = vmatpush1.msra.mxu0 %v461
        %490 = vmatprep.subr.mxu0 0.0
        %491 = vmatpush1.msra.mxu0 %v462
        %492 = vmatprep.subr.mxu0 0.0
        %493 = vmatpush1.msra.mxu0 %v463
        %494 = vmatprep.subr.mxu0 0.0
        %495 = vmatpush1.msra.mxu0 %v464
        %496 = vmatprep.subr.mxu0 0.0
        %497 = vmatpush1.msra.mxu0 %v465
        %498 = vmatprep.subr.mxu0 0.0
        %499 = vmatpush1.msra.mxu0 0.0
        %500 = vmatprep.subr.mxu0 0.0
        %501 = vmatpush1.msra.mxu0 0.0
        %502 = vmatprep.subr.mxu0 0.0
        %503 = vmatpush1.msra.mxu0 0.0
        %504 = vmatprep.subr.mxu0 0.0
        %505 = vmatpush1.msra.mxu0 0.0
        %506 = vmatprep.subr.mxu0 0.0
        %507 = vmatpush1.msra.mxu0 0.0
        %508 = vmatprep.subr.mxu0 0.0
        %509 = vmatpush1.msra.mxu0 0.0
        %510 = vmatprep.subr.mxu0 0.0
        %511 = vmatpush1.msra.mxu0 0.0
        %512 = vmatprep.subr.mxu0 0.0
        %513 = vmatpush1.msra.mxu0 0.0
        %514 = vmatprep.subr.mxu0 0.0
        %515 = vmatpush1.msra.mxu0 0.0
        %516 = vmatprep.subr.mxu0 0.0
        %517 = vmatpush1.msra.mxu0 0.0
        %518 = vmatprep.subr.mxu0 0.0
        %519 = vmatpush1.msra.mxu0 0.0
        %520 = vmatprep.subr.mxu0 0.0
        %521 = vmatpush1.msra.mxu0 0.0
        %522 = vmatprep.subr.mxu0 0.0
        %523 = vmatpush1.msra.mxu0 0.0
        %524 = vmatprep.subr.mxu0 0.0
        %525 = vmatpush1.msra.mxu0 0.0
        %526 = vmatprep.subr.mxu0 0.0
        %527 = vmatpush1.msra.mxu0 0.0
        %528 = vmatprep.subr.mxu0 0.0
        %529 = vmatpush1.msra.mxu0 0.0
        %530 = vmatprep.mubr.f32.mxu0 0.0
        %531 = vmatmul.mubr.f32.gmra.mrb[0].mxu0 %v442
        %v532 = vpop.f32.mrb[0].mxu0
        %v533 = vadd.f32 0.0, %v532
        %v534 = vpop.f32.mrb[0].mxu0
        %535 = vmatprep.mubr.f32.mxu0 0.0
        %536 = vmatmul.mubr.f32.gmra.mrb[0].mxu0 %v443
        %v537 = vpop.f32.mrb[0].mxu0
        %v538 = vadd.f32 0.0, %v537
        %v539 = vpop.f32.mrb[0].mxu0
        %540 = vmatprep.mubr.f32.mxu0 0.0
        %541 = vmatmul.mubr.f32.gmra.mrb[0].mxu0 %v444
        %v542 = vpop.f32.mrb[0].mxu0
        %v543 = vadd.f32 0.0, %v542
        %v544 = vpop.f32.mrb[0].mxu0
        %545 = vmatprep.mubr.f32.mxu0 0.0
        %546 = vmatmul.mubr.f32.gmra.mrb[0].mxu0 %v445
        %v547 = vpop.f32.mrb[0].mxu0
        %v548 = vadd.f32 0.0, %v547
        %v549 = vpop.f32.mrb[0].mxu0
        %550 = vmatprep.mubr.f32.mxu0 0.0
        %551 = vmatmul.mubr.f32.gmra.mrb[0].mxu0 %v446
        %v552 = vpop.f32.mrb[0].mxu0
        %v553 = vadd.f32 0.0, %v552
        %v554 = vpop.f32.mrb[0].mxu0
        %555 = vmatprep.mubr.f32.mxu0 0.0
        %556 = vmatmul.mubr.f32.gmra.mrb[0].mxu0 %v447
        %v557 = vpop.f32.mrb[0].mxu0
        %v558 = vadd.f32 0.0, %v557
        %v559 = vpop.f32.mrb[0].mxu0
        %560 = vmatprep.mubr.f32.mxu0 0.0
        %561 = vmatmul.mubr.f32.gmra.mrb[0].mxu0 %v448
        %v562 = vpop.f32.mrb[0].mxu0
        %v563 = vadd.f32 0.0, %v562
        %v564 = vpop.f32.mrb[0].mxu0
        %565 = vmatprep.mubr.f32.mxu0 0.0
        %566 = vmatmul.mubr.f32.gmra.mrb[0].mxu0 %v449
        %v567 = vpop.f32.mrb[0].mxu0
        %v568 = vadd.f32 0.0, %v567
        %v569 = vpop.f32.mrb[0].mxu0
        %570 = vdwg.mxu0
        %v571 = vld [vmem:[#allocation11] sm:$0x1]
        %v573 = vlaneseq
        %v574 = vshrl.u32 %v573, 7
        %v575 = vsub.s32 0, %v574
        %v576 = vrot.slane %v571, %v575
        %v578 = vmul.f32 %v533, %v576
        %v579 = vmul.f32 %v538, %v576
        %v580 = vmul.f32 %v543, %v576
        %v581 = vmul.f32 %v548, %v576
        %v582 = vmul.f32 %v553, %v576
        %v583 = vmul.f32 %v558, %v576
        %v584 = vmul.f32 %v563, %v576
        %v585 = vmul.f32 %v568, %v576
        %v586 = vadd.f32 %v434, %v578
        %v587 = vadd.f32 %v435, %v579
        %v588 = vadd.f32 %v436, %v580
        %v589 = vadd.f32 %v437, %v581
        %v590 = vadd.f32 %v438, %v582
        %v591 = vadd.f32 %v439, %v583
        %v592 = vadd.f32 %v440, %v584
        %v593 = vadd.f32 %v441, %v585
        %v594 = vld [vmem:[#allocation13] sm:$0x1]
        %v596 = vlaneseq
        %v597 = vshrl.u32 %v596, 7
        %v598 = vsub.s32 0, %v597
        %v599 = vrot.slane %v594, %v598
        %v601 = vadd.f32 %v586, %v599
        %v602 = vadd.f32 %v587, %v599
        %v603 = vadd.f32 %v588, %v599
        %v604 = vadd.f32 %v589, %v599
        %v605 = vadd.f32 %v590, %v599
        %v606 = vadd.f32 %v591, %v599
        %v607 = vadd.f32 %v592, %v599
        %v608 = vadd.f32 %v593, %v599
        %v609 = vmax.f32 %v601, 0.0
        %v610 = vmax.f32 %v602, 0.0
        %v611 = vmax.f32 %v603, 0.0
        %v612 = vmax.f32 %v604, 0.0
        %v613 = vmax.f32 %v605, 0.0
        %v614 = vmax.f32 %v606, 0.0
        %v615 = vmax.f32 %v607, 0.0
        %v616 = vmax.f32 %v608, 0.0
        %617 = vst [vmem:[%s400] sm:$0xff] %v609
        %618 = vst [vmem:[%s400 + $0x8] sm:$0xff] %v610
        %619 = vst [vmem:[%s400 + $0x10] sm:$0xff] %v611
        %620 = vst [vmem:[%s400 + $0x18] sm:$0xff] %v612
        %621 = vst [vmem:[%s400 + $0x20] sm:$0xff] %v613
        %622 = vst [vmem:[%s400 + $0x28] sm:$0xff] %v614
        %623 = vst [vmem:[%s400 + $0x30] sm:$0xff] %v615
        %624 = vst [vmem:[%s400 + $0x38] sm:$0xff] %v616
        %s625 = sand.u32 %s194, 1
        %s626 = scalar_lea.sflag [#allocation4], %s625
        %s627 = sand.u32 %s194, 1
        %s628 = smul.addr %s627, 64
        %s629 = scalar_lea.vmem [#allocation14], %s628
        // Predicated region
        $region77: #{residual_block_forward.7} parent=47 // pred_check
          %p630 = pneg %p204
        $region78: #{residual_block_forward.7} parent=47 // pred_check_branch
          %632 = sbr.rel (%p630) target = $region80
        $region79: #{residual_block_forward.7} parent=47 // pred_region
          %s633 = smul.u32 8, %s29
          %s635 = ssub.s32 1024, 1024
          %636 = vsyncadd %s626, %s635
          %s637 = smul.addr %s633, 128
          %s638 = scalar_lea.hbm %s7, %s637
          %s639 = sshll.u32 %s629, 4
          %s640 = int_to_ptr.vmem [resolvable:$true] %s639
          %645 = dma.vmem_to_hbm [thread:$0]  %s640, 1024, %s638, %s626, 128, 128, 8
        $region80: #{residual_block_forward.7} parent=47 // pred_fallthru
          _
      $region48: #{residual_block_forward.7} parent=5 // pred_fallthru
        _
      %p646 = scmp.le.s32.totalorder 2, %s24
      // Predicated region
      $region81: #{residual_block_forward.7} parent=5 // pred_check
        %p647 = pneg %p646
      $region82: #{residual_block_forward.7} parent=5 // pred_check_branch
        %649 = sbr.rel (%p647) target = $region84
      $region83: #{residual_block_forward.7} parent=5 // pred_region
        %s650 = ssub.s32 %s24, 2
        // Predicated region
        $region85: #{residual_block_forward.7} parent=83 // pred_check
          %p651 = pneg %p210
        $region86: #{residual_block_forward.7} parent=83 // pred_check_branch
          %653 = sbr.rel (%p651) target = $region88
        $region87: #{residual_block_forward.7} parent=83 // pred_region
          %s654 = sand.u32 %s195, 1
          %s655 = scalar_lea.sflag [#allocation4], %s654
          %s656 = sand.u32 %s195, 1
          %s657 = smul.addr %s656, 64
          %s658 = scalar_lea.vmem [#allocation14], %s657
          %659 = dma.done %s655, 1024
        $region88: #{residual_block_forward.7} parent=83 // pred_fallthru
          _
      $region84: #{residual_block_forward.7} parent=5 // pred_fallthru
        _
    $region6: #{residual_block_forward.7} parent=1 // loop_footer
      %s28 = sadd.s32 1, %s24
    $region7: #{residual_block_forward.7} parent=1 // loop_footer_branch
      %23 = sbr.rel target = $region3
    $region8: #{residual_block_forward.7} parent=1 // loop_exit
      _
    %660 = vsyncpa [#allocation3], 1
    %s661 = scalar_lea.sflag [#allocation3], 1
    %662 = vsyncpa %s661, 1
    %663 = vsyncpa [#allocation6], 1
    %664 = vsyncpa [#allocation9], 1
    %s665 = scalar_lea.sflag [#allocation9], 1
    %666 = vsyncpa %s665, 1
    %667 = vsyncpa [#allocation12], 1
    %668 = vsyncpa [#allocation4], 1
    %s669 = scalar_lea.sflag [#allocation4], 1
    %670 = vsyncpa %s669, 1

// kernel: residual_block_forward.6
$region0: #{residual_block_forward.6}
  #allocation0 [shape = 'u32[]', space=smem, size = 0x4, offset = 0x4, fixed_abs, tag = 'smem constant byte address 0x4 - core index']
  #allocation1 [shape = 'u32[144,128]{1,0:T(1,128)}', space=vmem, size = 0x12000, scoped, tag = 'internal scratch']
  %s0 = inlined_call_operand.hbm [shape: f32[128,128], index: 0, kind: input, shape index: {}]
  %s1 = inlined_call_operand.hbm [shape: f32[128,128], index: 1, kind: input, shape index: {}]
  %s2 = inlined_call_operand.hbm [shape: f32[128,128], index: 2, kind: input, shape index: {}]
  %s3 = inlined_call_operand.hbm [shape: f32[128,128], index: 3, kind: input, shape index: {}]
  %s4 = inlined_call_operand.hbm [shape: f32[128,128], index: 4, kind: output, shape index: {0}]
  %s5 = inlined_call_operand.hbm [shape: f32[2,8,128], index: 5, kind: output, shape index: {1}]
  %s6 = inlined_call_operand.hbm [shape: f32[2,8,128], index: 6, kind: output, shape index: {2}]
  %s7 = inlined_call_operand.hbm [shape: f32[2,8,128], index: 7, kind: output, shape index: {3}]
  %s8 = inlined_call_operand.hbm [shape: f32[2,8,128], index: 8, kind: output, shape index: {4}]
  %9 = xla_tuple %s4, %s5, %s6, %s7, %s8
  %s10 = sld [smem:[#allocation0]]
  $region101: #{residual_block_forward.6} parent=0
    _
  %s12 = ssub.s32 1, %s10
  %s13 = scalar_select 0, %s12, %s10
  $region1: #{residual_block_forward.6} parent=0
    #allocation2 [shape = 'u8[65536]{0}', space=vmem, size = 0x10000, scoped, tag = 'input window, operand 0']
    #allocation3 [shape = 's32[2]{0}', space=sflag, size = 0x8, scoped, tag = 'scoped memory for residual_block_forward.6']
    #allocation4 [shape = 's32[2]{0}', space=sflag, size = 0x8, scoped, tag = 'scoped memory for residual_block_forward.6']
    #allocation5 [shape = 'u8[65536]{0}', space=vmem, size = 0x10000, scoped, tag = 'input window, operand 1, single buffered']
    #allocation6 [shape = 's32[1]{0}', space=sflag, size = 0x4, scoped, tag = 'scoped memory for residual_block_forward.6']
    #allocation7 [shape = 'u8[65536]{0}', space=vmem, size = 0x10000, scoped, tag = 'input window, operand 2']
    #allocation8 [shape = 'u8[65536]{0}', space=vmem, size = 0x10000, scoped, tag = 'input window, operand 3, single buffered']
    #allocation9 [shape = 'u8[65536]{0}', space=vmem, size = 0x10000, scoped, tag = 'output window, operand 0']
    #allocation10 [shape = 'u8[8192]{0}', space=vmem, size = 0x2000, scoped, tag = 'output window, operand 1']
    #allocation11 [shape = 's32[2]{0}', space=sflag, size = 0x8, scoped, tag = 'scoped memory for residual_block_forward.6']
    #allocation12 [shape = 'u8[8192]{0}', space=vmem, size = 0x2000, scoped, tag = 'output window, operand 2']
    #allocation13 [shape = 'u8[8192]{0}', space=vmem, size = 0x2000, scoped, tag = 'output window, operand 3']
    #allocation14 [shape = 's32[2]{0}', space=sflag, size = 0x8, scoped, tag = 'scoped memory for residual_block_forward.6']
    #allocation15 [shape = 'u8[8192]{0}', space=vmem, size = 0x2000, scoped, tag = 'output window, operand 4']
    %14 = vsyncpa [#allocation3], 0
    %s15 = scalar_lea.sflag [#allocation3], 1
    %16 = vsyncpa %s15, 0
    %17 = vsyncpa [#allocation6], 0
    %18 = vsyncpa [#allocation4], 0
    %s19 = scalar_lea.sflag [#allocation4], 1
    %20 = vsyncpa %s19, 0
    %21 = vsyncpa [#allocation11], 0
    %s22 = scalar_lea.sflag [#allocation11], 1
    %23 = vsyncpa %s22, 0
    %24 = vsyncpa [#allocation14], 0
    %s25 = scalar_lea.sflag [#allocation14], 1
    %26 = vsyncpa %s25, 0
    loop: start=0, step=1, limit=4
    $region2: #{residual_block_forward.6} parent=1 // loop_pre_header
      _
    $region3: #{residual_block_forward.6} parent=1 // loop_header
      %s28 = sphi 0, %s32
      %p29 = scmp.ge.s32.totalorder %s28, 4
      %s35 = sphi 0, %s47
      %s36 = sphi 0, %s43
      %s37 = sphi 0, %s35
      %s38 = sphi 0, %s36
      %s39 = sphi 0, %s37
      %s40 = sphi 0, %s38
      %s52 = sphi 0, %s54
      %s55 = sphi 0, %s52
      %s56 = sphi 0, %s55
      %s72 = sphi 0, %s56
      %s76 = sphi 0, %s76
      %s78 = sphi 0, %s76
      %s79 = sphi 0, %s78
      %s93 = sphi 0, %s79
      %s101 = sphi 0, %s103
      %s104 = sphi 0, %s101
      %s105 = sphi 0, %s104
      %s121 = sphi 0, %s105
      %s125 = sphi 0, %s125
      %s127 = sphi 0, %s125
      %s128 = sphi 0, %s127
      %s142 = sphi 0, %s128
      %s150 = sphi 0, %s152
      %s153 = sphi 0, %s150
      %s154 = sphi 0, %s153
      %s170 = sphi 0, %s154
      %s176 = sphi 0, %s178
      %s179 = sphi 0, %s176
      %s180 = sphi 0, %s179
      %s196 = sphi 0, %s180
      %s202 = sphi 0, %s204
      %s205 = sphi 0, %s202
      %s206 = sphi 0, %s205
      %s222 = sphi 0, %s206
      %s228 = sphi 0, %s230
      %s231 = sphi 0, %s228
      %s232 = sphi 0, %s231
      %s248 = sphi 0, %s232
      %s254 = sphi 0, %s256
      %s257 = sphi 0, %s254
      %s258 = sphi 0, %s257
      %s274 = sphi 0, %s258
    $region4: #{residual_block_forward.6} parent=1 // loop_header_branch
      %31 = sbr.rel (%p29) target = $region8
    $region5: #{residual_block_forward.6} parent=1 // loop_body
      %s33 = ssub.s32 %s28, 1
      %s34 = ssub.s32 %s28, 2
      %s41 = sadd.s32 1, %s36
      %p42 = scmp.ge.s32.totalorder %s41, 1
      %s43 = scalar_select %p42, 0, %s41
      %s44 = sadd.s32 1, %s35
      %s45 = scalar_select %p42, %s44, %s35
      %p46 = scmp.ge.s32.totalorder %s45, 2
      %s47 = scalar_select %p46, 0, %s45
      %s48 = sadd.s32 %s35, %s36
      %s49 = sadd.s32 %s47, %s43
      %s50 = ssub.s32 %s48, %s49
      %p51 = scmp.eq.s32.totalorder %s50, 0
      %s53 = sadd.s32 %s52, 1
      %s54 = scalar_select %p51, %s52, %s53
      %p57 = pneg %p51
      %p58 = scmp.eq.s32.totalorder %s28, 1
      %p59 = por %p57, %p58
      %p60 = scmp.ne.s32.totalorder %s52, %s55
      %p61 = scmp.eq.s32.totalorder %s28, 0
      %p62 = por %p60, %p61
      %p63 = scmp.ne.s32.totalorder %s52, %s55
      %p64 = scmp.eq.s32.totalorder %s33, 1
      %p65 = por %p63, %p64
      %p66 = scmp.ne.s32.totalorder %s55, %s56
      %p67 = scmp.eq.s32.totalorder %s33, 0
      %p68 = por %p66, %p67
      %p69 = scmp.ne.s32.totalorder %s55, %s56
      %p70 = scmp.eq.s32.totalorder %s34, 1
      %p71 = por %p69, %p70
      %p73 = scmp.ne.s32.totalorder %s56, %s72
      %p74 = scmp.eq.s32.totalorder %s34, 0
      %p75 = por %p73, %p74
      %s77 = sadd.s32 %s76, 1
      %p80 = scmp.eq.s32.totalorder %s28, 1
      %p81 = scmp.ne.s32.totalorder %s76, %s78
      %p82 = scmp.eq.s32.totalorder %s28, 0
      %p83 = por %p81, %p82
      %p84 = scmp.ne.s32.totalorder %s76, %s78
      %p85 = scmp.eq.s32.totalorder %s33, 1
      %p86 = por %p84, %p85
      %p87 = scmp.ne.s32.totalorder %s78, %s79
      %p88 = scmp.eq.s32.totalorder %s33, 0
      %p89 = por %p87, %p88
      %p90 = scmp.ne.s32.totalorder %s78, %s79
      %p91 = scmp.eq.s32.totalorder %s34, 1
      %p92 = por %p90, %p91
      %p94 = scmp.ne.s32.totalorder %s79, %s93
      %p95 = scmp.eq.s32.totalorder %s34, 0
      %p96 = por %p94, %p95
      %s97 = sadd.s32 %s35, %s36
      %s98 = sadd.s32 %s47, %s43
      %s99 = ssub.s32 %s97, %s98
      %p100 = scmp.eq.s32.totalorder %s99, 0
      %s102 = sadd.s32 %s101, 1
      %s103 = scalar_select %p100, %s101, %s102
      %p106 = pneg %p100
      %p107 = scmp.eq.s32.totalorder %s28, 1
      %p108 = por %p106, %p107
      %p109 = scmp.ne.s32.totalorder %s101, %s104
      %p110 = scmp.eq.s32.totalorder %s28, 0
      %p111 = por %p109, %p110
      %p112 = scmp.ne.s32.totalorder %s101, %s104
      %p113 = scmp.eq.s32.totalorder %s33, 1
      %p114 = por %p112, %p113
      %p115 = scmp.ne.s32.totalorder %s104, %s105
      %p116 = scmp.eq.s32.totalorder %s33, 0
      %p117 = por %p115, %p116
      %p118 = scmp.ne.s32.totalorder %s104, %s105
      %p119 = scmp.eq.s32.totalorder %s34, 1
      %p120 = por %p118, %p119
      %p122 = scmp.ne.s32.totalorder %s105, %s121
      %p123 = scmp.eq.s32.totalorder %s34, 0
      %p124 = por %p122, %p123
      %s126 = sadd.s32 %s125, 1
      %p129 = scmp.eq.s32.totalorder %s28, 1
      %p130 = scmp.ne.s32.totalorder %s125, %s127
      %p131 = scmp.eq.s32.totalorder %s28, 0
      %p132 = por %p130, %p131
      %p133 = scmp.ne.s32.totalorder %s125, %s127
      %p134 = scmp.eq.s32.totalorder %s33, 1
      %p135 = por %p133, %p134
      %p136 = scmp.ne.s32.totalorder %s127, %s128
      %p137 = scmp.eq.s32.totalorder %s33, 0
      %p138 = por %p136, %p137
      %p139 = scmp.ne.s32.totalorder %s127, %s128
      %p140 = scmp.eq.s32.totalorder %s34, 1
      %p141 = por %p139, %p140
      %p143 = scmp.ne.s32.totalorder %s128, %s142
      %p144 = scmp.eq.s32.totalorder %s34, 0
      %p145 = por %p143, %p144
      %s146 = sadd.s32 %s35, %s36
      %s147 = sadd.s32 %s47, %s43
      %s148 = ssub.s32 %s146, %s147
      %p149 = scmp.eq.s32.totalorder %s148, 0
      %s151 = sadd.s32 %s150, 1
      %s152 = scalar_select %p149, %s150, %s151
      %p155 = pneg %p149
      %p156 = scmp.eq.s32.totalorder %s28, 1
      %p157 = por %p155, %p156
      %p158 = scmp.ne.s32.totalorder %s150, %s153
      %p159 = scmp.eq.s32.totalorder %s28, 0
      %p160 = por %p158, %p159
      %p161 = scmp.ne.s32.totalorder %s150, %s153
      %p162 = scmp.eq.s32.totalorder %s33, 1
      %p163 = por %p161, %p162
      %p164 = scmp.ne.s32.totalorder %s153, %s154
      %p165 = scmp.eq.s32.totalorder %s33, 0
      %p166 = por %p164, %p165
      %p167 = scmp.ne.s32.totalorder %s153, %s154
      %p168 = scmp.eq.s32.totalorder %s34, 1
      %p169 = por %p167, %p168
      %p171 = scmp.ne.s32.totalorder %s154, %s170
      %p172 = scmp.eq.s32.totalorder %s34, 0
      %p173 = por %p171, %p172
      %s174 = ssub.s32 %s35, %s47
      %p175 = scmp.eq.s32.totalorder %s174, 0
      %s177 = sadd.s32 %s176, 1
      %s178 = scalar_select %p175, %s176, %s177
      %p181 = pneg %p175
      %p182 = scmp.eq.s32.totalorder %s28, 1
      %p183 = por %p181, %p182
      %p184 = scmp.ne.s32.totalorder %s176, %s179
      %p185 = scmp.eq.s32.totalorder %s28, 0
      %p186 = por %p184, %p185
      %p187 = scmp.ne.s32.totalorder %s176, %s179
      %p188 = scmp.eq.s32.totalorder %s33, 1
      %p189 = por %p187, %p188
      %p190 = scmp.ne.s32.totalorder %s179, %s180
      %p191 = scmp.eq.s32.totalorder %s33, 0
      %p192 = por %p190, %p191
      %p193 = scmp.ne.s32.totalorder %s179, %s180
      %p194 = scmp.eq.s32.totalorder %s34, 1
      %p195 = por %p193, %p194
      %p197 = scmp.ne.s32.totalorder %s180, %s196
      %p198 = scmp.eq.s32.totalorder %s34, 0
      %p199 = por %p197, %p198
      %s200 = ssub.s32 %s35, %s47
      %p201 = scmp.eq.s32.totalorder %s200, 0
      %s203 = sadd.s32 %s202, 1
      %s204 = scalar_select %p201, %s202, %s203
      %p207 = pneg %p201
      %p208 = scmp.eq.s32.totalorder %s28, 1
      %p209 = por %p207, %p208
      %p210 = scmp.ne.s32.totalorder %s202, %s205
      %p211 = scmp.eq.s32.totalorder %s28, 0
      %p212 = por %p210, %p211
      %p213 = scmp.ne.s32.totalorder %s202, %s205
      %p214 = scmp.eq.s32.totalorder %s33, 1
      %p215 = por %p213, %p214
      %p216 = scmp.ne.s32.totalorder %s205, %s206
      %p217 = scmp.eq.s32.totalorder %s33, 0
      %p218 = por %p216, %p217
      %p219 = scmp.ne.s32.totalorder %s205, %s206
      %p220 = scmp.eq.s32.totalorder %s34, 1
      %p221 = por %p219, %p220
      %p223 = scmp.ne.s32.totalorder %s206, %s222
      %p224 = scmp.eq.s32.totalorder %s34, 0
      %p225 = por %p223, %p224
      %s226 = ssub.s32 %s35, %s47
      %p227 = scmp.eq.s32.totalorder %s226, 0
      %s229 = sadd.s32 %s228, 1
      %s230 = scalar_select %p227, %s228, %s229
      %p233 = pneg %p227
      %p234 = scmp.eq.s32.totalorder %s28, 1
      %p235 = por %p233, %p234
      %p236 = scmp.ne.s32.totalorder %s228, %s231
      %p237 = scmp.eq.s32.totalorder %s28, 0
      %p238 = por %p236, %p237
      %p239 = scmp.ne.s32.totalorder %s228, %s231
      %p240 = scmp.eq.s32.totalorder %s33, 1
      %p241 = por %p239, %p240
      %p242 = scmp.ne.s32.totalorder %s231, %s232
      %p243 = scmp.eq.s32.totalorder %s33, 0
      %p244 = por %p242, %p243
      %p245 = scmp.ne.s32.totalorder %s231, %s232
      %p246 = scmp.eq.s32.totalorder %s34, 1
      %p247 = por %p245, %p246
      %p249 = scmp.ne.s32.totalorder %s232, %s248
      %p250 = scmp.eq.s32.totalorder %s34, 0
      %p251 = por %p249, %p250
      %s252 = ssub.s32 %s35, %s47
      %p253 = scmp.eq.s32.totalorder %s252, 0
      %s255 = sadd.s32 %s254, 1
      %s256 = scalar_select %p253, %s254, %s255
      %p259 = pneg %p253
      %p260 = scmp.eq.s32.totalorder %s28, 1
      %p261 = por %p259, %p260
      %p262 = scmp.ne.s32.totalorder %s254, %s257
      %p263 = scmp.eq.s32.totalorder %s28, 0
      %p264 = por %p262, %p263
      %p265 = scmp.ne.s32.totalorder %s254, %s257
      %p266 = scmp.eq.s32.totalorder %s33, 1
      %p267 = por %p265, %p266
      %p268 = scmp.ne.s32.totalorder %s257, %s258
      %p269 = scmp.eq.s32.totalorder %s33, 0
      %p270 = por %p268, %p269
      %p271 = scmp.ne.s32.totalorder %s257, %s258
      %p272 = scmp.eq.s32.totalorder %s34, 1
      %p273 = por %p271, %p272
      %p275 = scmp.ne.s32.totalorder %s258, %s274
      %p276 = scmp.eq.s32.totalorder %s34, 0
      %p277 = por %p275, %p276
      %p278 = scmp.le.s32.totalorder 1, %s28
      %p279 = scmp.lt.s32.totalorder %s28, 3
      %p280 = pnand %p278, %p279
      %p281 = pneg %p280
      // Predicated region
      $region9: #{residual_block_forward.6} parent=5 // pred_check
        _
      $region10: #{residual_block_forward.6} parent=5 // pred_check_branch
        %283 = sbr.rel (%p280) target = $region12
      $region11: #{residual_block_forward.6} parent=5 // pred_region
        %s284 = ssub.s32 %s28, 1
        // Predicated region
        $region13: #{residual_block_forward.6} parent=11 // pred_check
          %p285 = pneg %p89
        $region14: #{residual_block_forward.6} parent=11 // pred_check_branch
          %287 = sbr.rel (%p285) target = $region16
        $region15: #{residual_block_forward.6} parent=11 // pred_region
          %s289 = ssub.s32 2048, 2048
          %290 = vsyncadd [#allocation6], %s289
          %s291 = sshll.u32 [#allocation5], 4
          %s292 = int_to_ptr.vmem [resolvable:$true] %s291
          %297 = dma.hbm_to_vmem [thread:$0]  %s1, 2048, %s292, [#allocation6], 128, 128, 8
        $region16: #{residual_block_forward.6} parent=11 // pred_fallthru
          _
        // Predicated region
        $region17: #{residual_block_forward.6} parent=11 // pred_check
          %p298 = pneg %p138
        $region18: #{residual_block_forward.6} parent=11 // pred_check_branch
          %300 = sbr.rel (%p298) target = $region20
        $region19: #{residual_block_forward.6} parent=11 // pred_region
          %s302 = ssub.s32 2048, 2048
          %303 = vsyncadd [#allocation6], %s302
          %s304 = sshll.u32 [#allocation8], 4
          %s305 = int_to_ptr.vmem [resolvable:$true] %s304
          %310 = dma.hbm_to_vmem [thread:$0]  %s3, 2048, %s305, [#allocation6], 128, 128, 8
        $region20: #{residual_block_forward.6} parent=11 // pred_fallthru
          _
      $region12: #{residual_block_forward.6} parent=5 // pred_fallthru
        _
      %p311 = scmp.lt.s32.totalorder %s28, 2
      // Predicated region
      $region21: #{residual_block_forward.6} parent=5 // pred_check
        %p312 = pneg %p311
      $region22: #{residual_block_forward.6} parent=5 // pred_check_branch
        %314 = sbr.rel (%p312) target = $region24
      $region23: #{residual_block_forward.6} parent=5 // pred_region
        // Predicated region
        $region25: #{residual_block_forward.6} parent=23 // pred_check
          %p315 = pneg %p62
        $region26: #{residual_block_forward.6} parent=23 // pred_check_branch
          %317 = sbr.rel (%p315) target = $region28
        $region27: #{residual_block_forward.6} parent=23 // pred_region
          %s318 = sand.u32 %s28, 1
          %s319 = scalar_lea.sflag [#allocation3], %s318
          %s320 = sand.u32 %s52, 1
          %s321 = smul.addr %s320, 64
          %s322 = scalar_lea.vmem [#allocation2], %s321
          %s323 = sadd.s32 %s35, %s36
          %s324 = smul.u32 8, %s323
          %s326 = ssub.s32 1024, 1024
          %327 = vsyncadd %s319, %s326
          %s328 = smul.addr %s324, 128
          %s329 = scalar_lea.hbm %s0, %s328
          %s330 = sshll.u32 %s322, 4
          %s331 = int_to_ptr.vmem [resolvable:$true] %s330
          %336 = dma.hbm_to_vmem [thread:$0]  %s329, 1024, %s331, %s319, 128, 128, 8
        $region28: #{residual_block_forward.6} parent=23 // pred_fallthru
          _
        // Predicated region
        $region29: #{residual_block_forward.6} parent=23 // pred_check
          %p337 = pneg %p111
        $region30: #{residual_block_forward.6} parent=23 // pred_check_branch
          %339 = sbr.rel (%p337) target = $region32
        $region31: #{residual_block_forward.6} parent=23 // pred_region
          %s340 = sand.u32 %s28, 1
          %s341 = scalar_lea.sflag [#allocation3], %s340
          %s342 = sand.u32 %s101, 1
          %s343 = smul.addr %s342, 64
          %s344 = scalar_lea.vmem [#allocation7], %s343
          %s345 = sadd.s32 %s35, %s36
          %s346 = smul.u32 8, %s345
          %s348 = ssub.s32 1024, 1024
          %349 = vsyncadd %s341, %s348
          %s350 = smul.addr %s346, 128
          %s351 = scalar_lea.hbm %s2, %s350
          %s352 = sshll.u32 %s344, 4
          %s353 = int_to_ptr.vmem [resolvable:$true] %s352
          %358 = dma.hbm_to_vmem [thread:$0]  %s351, 1024, %s353, %s341, 128, 128, 8
        $region32: #{residual_block_forward.6} parent=23 // pred_fallthru
          _
      $region24: #{residual_block_forward.6} parent=5 // pred_fallthru
        _
      %p359 = scmp.le.s32.totalorder 1, %s28
      %p360 = scmp.lt.s32.totalorder %s28, 3
      %p361 = pnand %p359, %p360
      %p362 = pneg %p361
      // Predicated region
      $region33: #{residual_block_forward.6} parent=5 // pred_check
        _
      $region34: #{residual_block_forward.6} parent=5 // pred_check_branch
        %364 = sbr.rel (%p361) target = $region36
      $region35: #{residual_block_forward.6} parent=5 // pred_region
        %s365 = ssub.s32 %s28, 1
        %s366 = sand.u32 %s33, 1
        %s367 = scalar_lea.sflag [#allocation3], %s366
        %s368 = sand.u32 %s55, 1
        %s369 = smul.addr %s368, 64
        %s370 = scalar_lea.vmem [#allocation2], %s369
        // Predicated region
        $region37: #{residual_block_forward.6} parent=35 // pred_check
          %p371 = pneg %p68
        $region38: #{residual_block_forward.6} parent=35 // pred_check_branch
          %373 = sbr.rel (%p371) target = $region40
        $region39: #{residual_block_forward.6} parent=35 // pred_region
          %374 = dma.done %s367, 1024
        $region40: #{residual_block_forward.6} parent=35 // pred_fallthru
          _
        // Predicated region
        $region41: #{residual_block_forward.6} parent=35 // pred_check
          %p375 = pneg %p89
        $region42: #{residual_block_forward.6} parent=35 // pred_check_branch
          %377 = sbr.rel (%p375) target = $region44
        $region43: #{residual_block_forward.6} parent=35 // pred_region
          %378 = dma.done [#allocation6], 2048
        $region44: #{residual_block_forward.6} parent=35 // pred_fallthru
          _
        %s379 = sand.u32 %s33, 1
        %s380 = scalar_lea.sflag [#allocation3], %s379
        %s381 = sand.u32 %s104, 1
        %s382 = smul.addr %s381, 64
        %s383 = scalar_lea.vmem [#allocation7], %s382
        // Predicated region
        $region45: #{residual_block_forward.6} parent=35 // pred_check
          %p384 = pneg %p117
        $region46: #{residual_block_forward.6} parent=35 // pred_check_branch
          %386 = sbr.rel (%p384) target = $region48
        $region47: #{residual_block_forward.6} parent=35 // pred_region
          %387 = dma.done %s380, 1024
        $region48: #{residual_block_forward.6} parent=35 // pred_fallthru
          _
        // Predicated region
        $region49: #{residual_block_forward.6} parent=35 // pred_check
          %p388 = pneg %p138
        $region50: #{residual_block_forward.6} parent=35 // pred_check_branch
          %390 = sbr.rel (%p388) target = $region52
        $region51: #{residual_block_forward.6} parent=35 // pred_region
          %391 = dma.done [#allocation6], 2048
        $region52: #{residual_block_forward.6} parent=35 // pred_fallthru
          _
        %s392 = sand.u32 %s33, 1
        %s393 = scalar_lea.sflag [#allocation3], %s392
        %s394 = sand.u32 %s55, 1
        %s395 = smul.addr %s394, 64
        %s396 = scalar_lea.vmem [#allocation2], %s395
        %p397 = pneg %p68
        %p398 = pneg %p65
        %p399 = pneg %p89
        %p400 = pneg %p86
        %s401 = sand.u32 %s33, 1
        %s402 = scalar_lea.sflag [#allocation3], %s401
        %s403 = sand.u32 %s104, 1
        %s404 = smul.addr %s403, 64
        %s405 = scalar_lea.vmem [#allocation7], %s404
        %p406 = pneg %p117
        %p407 = pneg %p114
        %p408 = pneg %p138
        %p409 = pneg %p135
        %p410 = pneg %p166
        %p411 = pneg %p163
        %s412 = sand.u32 %s153, 1
        %s413 = scalar_lea.sflag [#allocation4], %s412
        %s414 = sand.u32 %s153, 1
        %s415 = smul.addr %s414, 64
        %s416 = scalar_lea.vmem [#allocation9], %s415
        %p417 = pneg %p192
        %p418 = pneg %p189
        %s419 = sand.u32 %s33, 1
        %s420 = scalar_lea.sflag [#allocation11], %s419
        %s421 = sand.u32 %s179, 1
        %s422 = smul.addr %s421, 8
        %s423 = scalar_lea.vmem [#allocation10], %s422
        %p424 = pneg %p218
        %p425 = pneg %p215
        %s426 = sand.u32 %s33, 1
        %s427 = scalar_lea.sflag [#allocation11], %s426
        %s428 = sand.u32 %s205, 1
        %s429 = smul.addr %s428, 8
        %s430 = scalar_lea.vmem [#allocation12], %s429
        %p431 = pneg %p244
        %p432 = pneg %p241
        %s433 = sand.u32 %s33, 1
        %s434 = scalar_lea.sflag [#allocation14], %s433
        %s435 = sand.u32 %s231, 1
        %s436 = smul.addr %s435, 8
        %s437 = scalar_lea.vmem [#allocation13], %s436
        %p438 = pneg %p270
        %p439 = pneg %p267
        %s440 = sand.u32 %s33, 1
        %s441 = scalar_lea.sflag [#allocation14], %s440
        %s442 = sand.u32 %s257, 1
        %s443 = smul.addr %s442, 8
        %s444 = scalar_lea.vmem [#allocation15], %s443
        %s445 = sadd.s32 %s37, %s38
        %s446 = smul.u32 8, %s445
        %s447 = sadd.s32 %s37, %s38
        %s448 = smul.u32 8, %s447
        %s449 = sadd.s32 %s37, %s38
        %s450 = smul.u32 8, %s449
        %p451 = scmp.eq.s32.totalorder %s38, 0
        // Predicated region
        $region53: #{residual_block_forward.6} parent=35 // pred_check
          %p452 = pneg %p451
        $region54: #{residual_block_forward.6} parent=35 // pred_check_branch
          %454 = sbr.rel (%p452) target = $region56
        $region55: #{residual_block_forward.6} parent=35 // pred_region
          %455 = vst [vmem:[%s423] sm:$0xff] 0.0
          %456 = vst [vmem:[%s430] sm:$0xff] 0.0
          %457 = vst [vmem:[%s437] sm:$0xff] 0.0
          %458 = vst [vmem:[%s444] sm:$0xff] 0.0
        $region56: #{residual_block_forward.6} parent=35 // pred_fallthru
          _
        %v459 = vld [vmem:[%s370] sm:$0xff]
        %v460 = vld [vmem:[%s370 + $0x8] sm:$0xff]
        %v461 = vld [vmem:[%s370 + $0x10] sm:$0xff]
        %v462 = vld [vmem:[%s370 + $0x18] sm:$0xff]
        %v463 = vld [vmem:[%s370 + $0x20] sm:$0xff]
        %v464 = vld [vmem:[%s370 + $0x28] sm:$0xff]
        %v465 = vld [vmem:[%s370 + $0x30] sm:$0xff]
        %v466 = vld [vmem:[%s370 + $0x38] sm:$0xff]
        %v467 = vld [vmem:[#allocation5] sm:$0xff]
        %v468 = vld [vmem:[#allocation5 + $0x8] sm:$0xff]
        %v469 = vld [vmem:[#allocation5 + $0x10] sm:$0xff]
        %v470 = vld [vmem:[#allocation5 + $0x18] sm:$0xff]
        %v471 = vld [vmem:[#allocation5 + $0x20] sm:$0xff]
        %v472 = vld [vmem:[#allocation5 + $0x28] sm:$0xff]
        %v473 = vld [vmem:[#allocation5 + $0x30] sm:$0xff]
        %v474 = vld [vmem:[#allocation5 + $0x38] sm:$0xff]
        %v475 = vld [vmem:[#allocation5 + $0x40] sm:$0xff]
        %v476 = vld [vmem:[#allocation5 + $0x48] sm:$0xff]
        %v477 = vld [vmem:[#allocation5 + $0x50] sm:$0xff]
        %v478 = vld [vmem:[#allocation5 + $0x58] sm:$0xff]
        %v479 = vld [vmem:[#allocation5 + $0x60] sm:$0xff]
        %v480 = vld [vmem:[#allocation5 + $0x68] sm:$0xff]
        %v481 = vld [vmem:[#allocation5 + $0x70] sm:$0xff]
        %v482 = vld [vmem:[#allocation5 + $0x78] sm:$0xff]
        %483 = vmatprep.subr.mxu0 0.0
        %484 = vmatpush1.msra.mxu0 %v467
        %485 = vmatprep.subr.mxu0 0.0
        %486 = vmatpush1.msra.mxu0 %v468
        %487 = vmatprep.subr.mxu0 0.0
        %488 = vmatpush1.msra.mxu0 %v469
        %489 = vmatprep.subr.mxu0 0.0
        %490 = vmatpush1.msra.mxu0 %v470
        %491 = vmatprep.subr.mxu0 0.0
        %492 = vmatpush1.msra.mxu0 %v471
        %493 = vmatprep.subr.mxu0 0.0
        %494 = vmatpush1.msra.mxu0 %v472
        %495 = vmatprep.subr.mxu0 0.0
        %496 = vmatpush1.msra.mxu0 %v473
        %497 = vmatprep.subr.mxu0 0.0
        %498 = vmatpush1.msra.mxu0 %v474
        %499 = vmatprep.subr.mxu0 0.0
        %500 = vmatpush1.msra.mxu0 %v475
        %501 = vmatprep.subr.mxu0 0.0
        %502 = vmatpush1.msra.mxu0 %v476
        %503 = vmatprep.subr.mxu0 0.0
        %504 = vmatpush1.msra.mxu0 %v477
        %505 = vmatprep.subr.mxu0 0.0
        %506 = vmatpush1.msra.mxu0 %v478
        %507 = vmatprep.subr.mxu0 0.0
        %508 = vmatpush1.msra.mxu0 %v479
        %509 = vmatprep.subr.mxu0 0.0
        %510 = vmatpush1.msra.mxu0 %v480
        %511 = vmatprep.subr.mxu0 0.0
        %512 = vmatpush1.msra.mxu0 %v481
        %513 = vmatprep.subr.mxu0 0.0
        %514 = vmatpush1.msra.mxu0 %v482
        %515 = vmatprep.subr.mxu0 0.0
        %516 = vmatpush1.msra.mxu0 0.0
        %517 = vmatprep.subr.mxu0 0.0
        %518 = vmatpush1.msra.mxu0 0.0
        %519 = vmatprep.subr.mxu0 0.0
        %520 = vmatpush1.msra.mxu0 0.0
        %521 = vmatprep.subr.mxu0 0.0
        %522 = vmatpush1.msra.mxu0 0.0
        %523 = vmatprep.subr.mxu0 0.0
        %524 = vmatpush1.msra.mxu0 0.0
        %525 = vmatprep.subr.mxu0 0.0
        %526 = vmatpush1.msra.mxu0 0.0
        %527 = vmatprep.subr.mxu0 0.0
        %528 = vmatpush1.msra.mxu0 0.0
        %529 = vmatprep.subr.mxu0 0.0
        %530 = vmatpush1.msra.mxu0 0.0
        %531 = vmatprep.subr.mxu0 0.0
        %532 = vmatpush1.msra.mxu0 0.0
        %533 = vmatprep.subr.mxu0 0.0
        %534 = vmatpush1.msra.mxu0 0.0
        %535 = vmatprep.subr.mxu0 0.0
        %536 = vmatpush1.msra.mxu0 0.0
        %537 = vmatprep.subr.mxu0 0.0
        %538 = vmatpush1.msra.mxu0 0.0
        %539 = vmatprep.subr.mxu0 0.0
        %540 = vmatpush1.msra.mxu0 0.0
        %541 = vmatprep.subr.mxu0 0.0
        %542 = vmatpush1.msra.mxu0 0.0
        %543 = vmatprep.subr.mxu0 0.0
        %544 = vmatpush1.msra.mxu0 0.0
        %545 = vmatprep.subr.mxu0 0.0
        %546 = vmatpush1.msra.mxu0 0.0
        %547 = vmatprep.mubr.f32.mxu0 0.0
        %548 = vmatmul.mubr.f32.gmra.mrb[0].mxu0 %v459
        %v549 = vpop.f32.mrb[0].mxu0
        %v550 = vadd.f32 0.0, %v549
        %v551 = vpop.f32.mrb[0].mxu0
        %552 = vmatprep.mubr.f32.mxu0 0.0
        %553 = vmatmul.mubr.f32.gmra.mrb[0].mxu0 %v460
        %v554 = vpop.f32.mrb[0].mxu0
        %v555 = vadd.f32 0.0, %v554
        %v556 = vpop.f32.mrb[0].mxu0
        %557 = vmatprep.mubr.f32.mxu0 0.0
        %558 = vmatmul.mubr.f32.gmra.mrb[0].mxu0 %v461
        %v559 = vpop.f32.mrb[0].mxu0
        %v560 = vadd.f32 0.0, %v559
        %v561 = vpop.f32.mrb[0].mxu0
        %562 = vmatprep.mubr.f32.mxu0 0.0
        %563 = vmatmul.mubr.f32.gmra.mrb[0].mxu0 %v462
        %v564 = vpop.f32.mrb[0].mxu0
        %v565 = vadd.f32 0.0, %v564
        %v566 = vpop.f32.mrb[0].mxu0
        %567 = vmatprep.mubr.f32.mxu0 0.0
        %568 = vmatmul.mubr.f32.gmra.mrb[0].mxu0 %v463
        %v569 = vpop.f32.mrb[0].mxu0
        %v570 = vadd.f32 0.0, %v569
        %v571 = vpop.f32.mrb[0].mxu0
        %572 = vmatprep.mubr.f32.mxu0 0.0
        %573 = vmatmul.mubr.f32.gmra.mrb[0].mxu0 %v464
        %v574 = vpop.f32.mrb[0].mxu0
        %v575 = vadd.f32 0.0, %v574
        %v576 = vpop.f32.mrb[0].mxu0
        %577 = vmatprep.mubr.f32.mxu0 0.0
        %578 = vmatmul.mubr.f32.gmra.mrb[0].mxu0 %v465
        %v579 = vpop.f32.mrb[0].mxu0
        %v580 = vadd.f32 0.0, %v579
        %v581 = vpop.f32.mrb[0].mxu0
        %582 = vmatprep.mubr.f32.mxu0 0.0
        %583 = vmatmul.mubr.f32.gmra.mrb[0].mxu0 %v466
        %v584 = vpop.f32.mrb[0].mxu0
        %v585 = vadd.f32 0.0, %v584
        %v586 = vpop.f32.mrb[0].mxu0
        %587 = vdwg.mxu0
        %588 = vst [vmem:[%s416] sm:$0xff] %v550
        %589 = vst [vmem:[%s416 + $0x8] sm:$0xff] %v555
        %590 = vst [vmem:[%s416 + $0x10] sm:$0xff] %v560
        %591 = vst [vmem:[%s416 + $0x18] sm:$0xff] %v565
        %592 = vst [vmem:[%s416 + $0x20] sm:$0xff] %v570
        %593 = vst [vmem:[%s416 + $0x28] sm:$0xff] %v575
        %594 = vst [vmem:[%s416 + $0x30] sm:$0xff] %v580
        %595 = vst [vmem:[%s416 + $0x38] sm:$0xff] %v585
        %v596 = vld [vmem:[%s423] sm:$0xff]
        %v597 = vadd.f32 %v550, %v555
        %v598 = vadd.f32 %v597, %v560
        %v599 = vadd.f32 %v598, %v565
        %v600 = vadd.f32 %v599, %v570
        %v601 = vadd.f32 %v600, %v575
        %v602 = vadd.f32 %v601, %v580
        %v603 = vadd.f32 %v602, %v585
        %v604 = vadd.f32 %v596, %v603
        %605 = vst [vmem:[%s423] sm:$0xff] %v604
        %v606 = vld [vmem:[%s430] sm:$0xff]
        %v607 = vmul.f32 %v550, %v550
        %v608 = vmul.f32 %v555, %v555
        %v609 = vmul.f32 %v560, %v560
        %v610 = vmul.f32 %v565, %v565
        %v611 = vmul.f32 %v570, %v570
        %v612 = vmul.f32 %v575, %v575
        %v613 = vmul.f32 %v580, %v580
        %v614 = vmul.f32 %v585, %v585
        %v615 = vadd.f32 %v607, %v608
        %v616 = vadd.f32 %v615, %v609
        %v617 = vadd.f32 %v616, %v610
        %v618 = vadd.f32 %v617, %v611
        %v619 = vadd.f32 %v618, %v612
        %v620 = vadd.f32 %v619, %v613
        %v621 = vadd.f32 %v620, %v614
        %v622 = vadd.f32 %v606, %v621
        %623 = vst [vmem:[%s430] sm:$0xff] %v622
        %v624 = vld [vmem:[%s383] sm:$0xff]
        %v625 = vld [vmem:[%s383 + $0x8] sm:$0xff]
        %v626 = vld [vmem:[%s383 + $0x10] sm:$0xff]
        %v627 = vld [vmem:[%s383 + $0x18] sm:$0xff]
        %v628 = vld [vmem:[%s383 + $0x20] sm:$0xff]
        %v629 = vld [vmem:[%s383 + $0x28] sm:$0xff]
        %v630 = vld [vmem:[%s383 + $0x30] sm:$0xff]
        %v631 = vld [vmem:[%s383 + $0x38] sm:$0xff]
        %v632 = vld [vmem:[#allocation8] sm:$0xff]
        %v633 = vld [vmem:[#allocation8 + $0x8] sm:$0xff]
        %v634 = vld [vmem:[#allocation8 + $0x10] sm:$0xff]
        %v635 = vld [vmem:[#allocation8 + $0x18] sm:$0xff]
        %v636 = vld [vmem:[#allocation8 + $0x20] sm:$0xff]
        %v637 = vld [vmem:[#allocation8 + $0x28] sm:$0xff]
        %v638 = vld [vmem:[#allocation8 + $0x30] sm:$0xff]
        %v639 = vld [vmem:[#allocation8 + $0x38] sm:$0xff]
        %v640 = vld [vmem:[#allocation8 + $0x40] sm:$0xff]
        %v641 = vld [vmem:[#allocation8 + $0x48] sm:$0xff]
        %v642 = vld [vmem:[#allocation8 + $0x50] sm:$0xff]
        %v643 = vld [vmem:[#allocation8 + $0x58] sm:$0xff]
        %v644 = vld [vmem:[#allocation8 + $0x60] sm:$0xff]
        %v645 = vld [vmem:[#allocation8 + $0x68] sm:$0xff]
        %v646 = vld [vmem:[#allocation8 + $0x70] sm:$0xff]
        %v647 = vld [vmem:[#allocation8 + $0x78] sm:$0xff]
        %648 = vmatprep.subr.mxu0 0.0
        %649 = vmatpush1.msra.mxu0 %v632
        %650 = vmatprep.subr.mxu0 0.0
        %651 = vmatpush1.msra.mxu0 %v633
        %652 = vmatprep.subr.mxu0 0.0
        %653 = vmatpush1.msra.mxu0 %v634
        %654 = vmatprep.subr.mxu0 0.0
        %655 = vmatpush1.msra.mxu0 %v635
        %656 = vmatprep.subr.mxu0 0.0
        %657 = vmatpush1.msra.mxu0 %v636
        %658 = vmatprep.subr.mxu0 0.0
        %659 = vmatpush1.msra.mxu0 %v637
        %660 = vmatprep.subr.mxu0 0.0
        %661 = vmatpush1.msra.mxu0 %v638
        %662 = vmatprep.subr.mxu0 0.0
        %663 = vmatpush1.msra.mxu0 %v639
        %664 = vmatprep.subr.mxu0 0.0
        %665 = vmatpush1.msra.mxu0 %v640
        %666 = vmatprep.subr.mxu0 0.0
        %667 = vmatpush1.msra.mxu0 %v641
        %668 = vmatprep.subr.mxu0 0.0
        %669 = vmatpush1.msra.mxu0 %v642
        %670 = vmatprep.subr.mxu0 0.0
        %671 = vmatpush1.msra.mxu0 %v643
        %672 = vmatprep.subr.mxu0 0.0
        %673 = vmatpush1.msra.mxu0 %v644
        %674 = vmatprep.subr.mxu0 0.0
        %675 = vmatpush1.msra.mxu0 %v645
        %676 = vmatprep.subr.mxu0 0.0
        %677 = vmatpush1.msra.mxu0 %v646
        %678 = vmatprep.subr.mxu0 0.0
        %679 = vmatpush1.msra.mxu0 %v647
        %680 = vmatprep.subr.mxu0 0.0
        %681 = vmatpush1.msra.mxu0 0.0
        %682 = vmatprep.subr.mxu0 0.0
        %683 = vmatpush1.msra.mxu0 0.0
        %684 = vmatprep.subr.mxu0 0.0
        %685 = vmatpush1.msra.mxu0 0.0
        %686 = vmatprep.subr.mxu0 0.0
        %687 = vmatpush1.msra.mxu0 0.0
        %688 = vmatprep.subr.mxu0 0.0
        %689 = vmatpush1.msra.mxu0 0.0
        %690 = vmatprep.subr.mxu0 0.0
        %691 = vmatpush1.msra.mxu0 0.0
        %692 = vmatprep.subr.mxu0 0.0
        %693 = vmatpush1.msra.mxu0 0.0
        %694 = vmatprep.subr.mxu0 0.0
        %695 = vmatpush1.msra.mxu0 0.0
        %696 = vmatprep.subr.mxu0 0.0
        %697 = vmatpush1.msra.mxu0 0.0
        %698 = vmatprep.subr.mxu0 0.0
        %699 = vmatpush1.msra.mxu0 0.0
        %700 = vmatprep.subr.mxu0 0.0
        %701 = vmatpush1.msra.mxu0 0.0
        %702 = vmatprep.subr.mxu0 0.0
        %703 = vmatpush1.msra.mxu0 0.0
        %704 = vmatprep.subr.mxu0 0.0
        %705 = vmatpush1.msra.mxu0 0.0
        %706 = vmatprep.subr.mxu0 0.0
        %707 = vmatpush1.msra.mxu0 0.0
        %708 = vmatprep.subr.mxu0 0.0
        %709 = vmatpush1.msra.mxu0 0.0
        %710 = vmatprep.subr.mxu0 0.0
        %711 = vmatpush1.msra.mxu0 0.0
        %712 = vmatprep.mubr.f32.mxu0 0.0
        %713 = vmatmul.mubr.f32.gmra.mrb[0].mxu0 %v624
        %v714 = vpop.f32.mrb[0].mxu0
        %v715 = vadd.f32 0.0, %v714
        %v716 = vpop.f32.mrb[0].mxu0
        %717 = vmatprep.mubr.f32.mxu0 0.0
        %718 = vmatmul.mubr.f32.gmra.mrb[0].mxu0 %v625
        %v719 = vpop.f32.mrb[0].mxu0
        %v720 = vadd.f32 0.0, %v719
        %v721 = vpop.f32.mrb[0].mxu0
        %722 = vmatprep.mubr.f32.mxu0 0.0
        %723 = vmatmul.mubr.f32.gmra.mrb[0].mxu0 %v626
        %v724 = vpop.f32.mrb[0].mxu0
        %v725 = vadd.f32 0.0, %v724
        %v726 = vpop.f32.mrb[0].mxu0
        %727 = vmatprep.mubr.f32.mxu0 0.0
        %728 = vmatmul.mubr.f32.gmra.mrb[0].mxu0 %v627
        %v729 = vpop.f32.mrb[0].mxu0
        %v730 = vadd.f32 0.0, %v729
        %v731 = vpop.f32.mrb[0].mxu0
        %732 = vmatprep.mubr.f32.mxu0 0.0
        %733 = vmatmul.mubr.f32.gmra.mrb[0].mxu0 %v628
        %v734 = vpop.f32.mrb[0].mxu0
        %v735 = vadd.f32 0.0, %v734
        %v736 = vpop.f32.mrb[0].mxu0
        %737 = vmatprep.mubr.f32.mxu0 0.0
        %738 = vmatmul.mubr.f32.gmra.mrb[0].mxu0 %v629
        %v739 = vpop.f32.mrb[0].mxu0
        %v740 = vadd.f32 0.0, %v739
        %v741 = vpop.f32.mrb[0].mxu0
        %742 = vmatprep.mubr.f32.mxu0 0.0
        %743 = vmatmul.mubr.f32.gmra.mrb[0].mxu0 %v630
        %v744 = vpop.f32.mrb[0].mxu0
        %v745 = vadd.f32 0.0, %v744
        %v746 = vpop.f32.mrb[0].mxu0
        %747 = vmatprep.mubr.f32.mxu0 0.0
        %748 = vmatmul.mubr.f32.gmra.mrb[0].mxu0 %v631
        %v749 = vpop.f32.mrb[0].mxu0
        %v750 = vadd.f32 0.0, %v749
        %v751 = vpop.f32.mrb[0].mxu0
        %752 = vdwg.mxu0
        %v753 = vld [vmem:[%s437] sm:$0xff]
        %v754 = vadd.f32 %v715, %v720
        %v755 = vadd.f32 %v754, %v725
        %v756 = vadd.f32 %v755, %v730
        %v757 = vadd.f32 %v756, %v735
        %v758 = vadd.f32 %v757, %v740
        %v759 = vadd.f32 %v758, %v745
        %v760 = vadd.f32 %v759, %v750
        %v761 = vadd.f32 %v753, %v760
        %762 = vst [vmem:[%s437] sm:$0xff] %v761
        %v763 = vld [vmem:[%s444] sm:$0xff]
        %v764 = vmul.f32 %v715, %v715
        %v765 = vmul.f32 %v720, %v720
        %v766 = vmul.f32 %v725, %v725
        %v767 = vmul.f32 %v730, %v730
        %v768 = vmul.f32 %v735, %v735
        %v769 = vmul.f32 %v740, %v740
        %v770 = vmul.f32 %v745, %v745
        %v771 = vmul.f32 %v750, %v750
        %v772 = vadd.f32 %v764, %v765
        %v773 = vadd.f32 %v772, %v766
        %v774 = vadd.f32 %v773, %v767
        %v775 = vadd.f32 %v774, %v768
        %v776 = vadd.f32 %v775, %v769
        %v777 = vadd.f32 %v776, %v770
        %v778 = vadd.f32 %v777, %v771
        %v779 = vadd.f32 %v763, %v778
        %780 = vst [vmem:[%s444] sm:$0xff] %v779
        %s781 = sand.u32 %s153, 1
        %s782 = scalar_lea.sflag [#allocation4], %s781
        %s783 = sand.u32 %s153, 1
        %s784 = smul.addr %s783, 64
        %s785 = scalar_lea.vmem [#allocation9], %s784
        %s786 = sand.u32 %s33, 1
        %s787 = scalar_lea.sflag [#allocation11], %s786
        %s788 = sand.u32 %s179, 1
        %s789 = smul.addr %s788, 8
        %s790 = scalar_lea.vmem [#allocation10], %s789
        %s791 = sand.u32 %s33, 1
        %s792 = scalar_lea.sflag [#allocation11], %s791
        %s793 = sand.u32 %s205, 1
        %s794 = smul.addr %s793, 8
        %s795 = scalar_lea.vmem [#allocation12], %s794
        %s796 = sand.u32 %s33, 1
        %s797 = scalar_lea.sflag [#allocation14], %s796
        %s798 = sand.u32 %s231, 1
        %s799 = smul.addr %s798, 8
        %s800 = scalar_lea.vmem [#allocation13], %s799
        %s801 = sand.u32 %s33, 1
        %s802 = scalar_lea.sflag [#allocation14], %s801
        %s803 = sand.u32 %s257, 1
        %s804 = smul.addr %s803, 8
        %s805 = scalar_lea.vmem [#allocation15], %s804
        // Predicated region
        $region57: #{residual_block_forward.6} parent=35 // pred_check
          %p806 = pneg %p163
        $region58: #{residual_block_forward.6} parent=35 // pred_check_branch
          %808 = sbr.rel (%p806) target = $region60
        $region59: #{residual_block_forward.6} parent=35 // pred_region
          %s809 = sadd.s32 %s37, %s38
          %s810 = smul.u32 8, %s809
          %s812 = ssub.s32 1024, 1024
          %813 = vsyncadd %s782, %s812
          %s814 = smul.addr %s810, 128
          %s815 = scalar_lea.hbm %s4, %s814
          %s816 = sshll.u32 %s785, 4
          %s817 = int_to_ptr.vmem [resolvable:$true] %s816
          %822 = dma.vmem_to_hbm [thread:$0]  %s817, 1024, %s815, %s782, 128, 128, 8
        $region60: #{residual_block_forward.6} parent=35 // pred_fallthru
          _
        // Predicated region
        $region61: #{residual_block_forward.6} parent=35 // pred_check
          %p823 = pneg %p189
        $region62: #{residual_block_forward.6} parent=35 // pred_check_branch
          %825 = sbr.rel (%p823) target = $region64
        $region63: #{residual_block_forward.6} parent=35 // pred_region
          %s827 = ssub.s32 128, 128
          %828 = vsyncadd %s787, %s827
          %s829 = smul.addr %s37, 128
          %s830 = scalar_lea.hbm %s5, %s829
          %s832 = sshll.u32 %s790, 4
          %s833 = int_to_ptr.vmem [resolvable:$true] %s832
          %835 = dma.vmem_to_hbm [thread:$0]  %s833, 128, %s830, %s787
        $region64: #{residual_block_forward.6} parent=35 // pred_fallthru
          _
        // Predicated region
        $region65: #{residual_block_forward.6} parent=35 // pred_check
          %p836 = pneg %p215
        $region66: #{residual_block_forward.6} parent=35 // pred_check_branch
          %838 = sbr.rel (%p836) target = $region68
        $region67: #{residual_block_forward.6} parent=35 // pred_region
          %s840 = ssub.s32 128, 128
          %841 = vsyncadd %s792, %s840
          %s842 = smul.addr %s37, 128
          %s843 = scalar_lea.hbm %s6, %s842
          %s845 = sshll.u32 %s795, 4
          %s846 = int_to_ptr.vmem [resolvable:$true] %s845
          %848 = dma.vmem_to_hbm [thread:$0]  %s846, 128, %s843, %s792
        $region68: #{residual_block_forward.6} parent=35 // pred_fallthru
          _
        // Predicated region
        $region69: #{residual_block_forward.6} parent=35 // pred_check
          %p849 = pneg %p241
        $region70: #{residual_block_forward.6} parent=35 // pred_check_branch
          %851 = sbr.rel (%p849) target = $region72
        $region71: #{residual_block_forward.6} parent=35 // pred_region
          %s853 = ssub.s32 128, 128
          %854 = vsyncadd %s797, %s853
          %s855 = smul.addr %s37, 128
          %s856 = scalar_lea.hbm %s7, %s855
          %s858 = sshll.u32 %s800, 4
          %s859 = int_to_ptr.vmem [resolvable:$true] %s858
          %861 = dma.vmem_to_hbm [thread:$0]  %s859, 128, %s856, %s797
        $region72: #{residual_block_forward.6} parent=35 // pred_fallthru
          _
        // Predicated region
        $region73: #{residual_block_forward.6} parent=35 // pred_check
          %p862 = pneg %p267
        $region74: #{residual_block_forward.6} parent=35 // pred_check_branch
          %864 = sbr.rel (%p862) target = $region76
        $region75: #{residual_block_forward.6} parent=35 // pred_region
          %s866 = ssub.s32 128, 128
          %867 = vsyncadd %s802, %s866
          %s868 = smul.addr %s37, 128
          %s869 = scalar_lea.hbm %s8, %s868
          %s871 = sshll.u32 %s805, 4
          %s872 = int_to_ptr.vmem [resolvable:$true] %s871
          %874 = dma.vmem_to_hbm [thread:$0]  %s872, 128, %s869, %s802
        $region76: #{residual_block_forward.6} parent=35 // pred_fallthru
          _
      $region36: #{residual_block_forward.6} parent=5 // pred_fallthru
        _
      %p875 = scmp.le.s32.totalorder 2, %s28
      // Predicated region
      $region77: #{residual_block_forward.6} parent=5 // pred_check
        %p876 = pneg %p875
      $region78: #{residual_block_forward.6} parent=5 // pred_check_branch
        %878 = sbr.rel (%p876) target = $region80
      $region79: #{residual_block_forward.6} parent=5 // pred_region
        %s879 = ssub.s32 %s28, 2
        // Predicated region
        $region81: #{residual_block_forward.6} parent=79 // pred_check
          %p880 = pneg %p169
        $region82: #{residual_block_forward.6} parent=79 // pred_check_branch
          %882 = sbr.rel (%p880) target = $region84
        $region83: #{residual_block_forward.6} parent=79 // pred_region
          %s883 = sand.u32 %s154, 1
          %s884 = scalar_lea.sflag [#allocation4], %s883
          %s885 = sand.u32 %s154, 1
          %s886 = smul.addr %s885, 64
          %s887 = scalar_lea.vmem [#allocation9], %s886
          %888 = dma.done %s884, 1024
        $region84: #{residual_block_forward.6} parent=79 // pred_fallthru
          _
        // Predicated region
        $region85: #{residual_block_forward.6} parent=79 // pred_check
          %p889 = pneg %p195
        $region86: #{residual_block_forward.6} parent=79 // pred_check_branch
          %891 = sbr.rel (%p889) target = $region88
        $region87: #{residual_block_forward.6} parent=79 // pred_region
          %s892 = sand.u32 %s34, 1
          %s893 = scalar_lea.sflag [#allocation11], %s892
          %s894 = sand.u32 %s180, 1
          %s895 = smul.addr %s894, 8
          %s896 = scalar_lea.vmem [#allocation10], %s895
          %897 = dma.done %s893, 128
        $region88: #{residual_block_forward.6} parent=79 // pred_fallthru
          _
        // Predicated region
        $region89: #{residual_block_forward.6} parent=79 // pred_check
          %p898 = pneg %p221
        $region90: #{residual_block_forward.6} parent=79 // pred_check_branch
          %900 = sbr.rel (%p898) target = $region92
        $region91: #{residual_block_forward.6} parent=79 // pred_region
          %s901 = sand.u32 %s34, 1
          %s902 = scalar_lea.sflag [#allocation11], %s901
          %s903 = sand.u32 %s206, 1
          %s904 = smul.addr %s903, 8
          %s905 = scalar_lea.vmem [#allocation12], %s904
          %906 = dma.done %s902, 128
        $region92: #{residual_block_forward.6} parent=79 // pred_fallthru
          _
        // Predicated region
        $region93: #{residual_block_forward.6} parent=79 // pred_check
          %p907 = pneg %p247
        $region94: #{residual_block_forward.6} parent=79 // pred_check_branch
          %909 = sbr.rel (%p907) target = $region96
        $region95: #{residual_block_forward.6} parent=79 // pred_region
          %s910 = sand.u32 %s34, 1
          %s911 = scalar_lea.sflag [#allocation14], %s910
          %s912 = sand.u32 %s232, 1
          %s913 = smul.addr %s912, 8
          %s914 = scalar_lea.vmem [#allocation13], %s913
          %915 = dma.done %s911, 128
        $region96: #{residual_block_forward.6} parent=79 // pred_fallthru
          _
        // Predicated region
        $region97: #{residual_block_forward.6} parent=79 // pred_check
          %p916 = pneg %p273
        $region98: #{residual_block_forward.6} parent=79 // pred_check_branch
          %918 = sbr.rel (%p916) target = $region100
        $region99: #{residual_block_forward.6} parent=79 // pred_region
          %s919 = sand.u32 %s34, 1
          %s920 = scalar_lea.sflag [#allocation14], %s919
          %s921 = sand.u32 %s258, 1
          %s922 = smul.addr %s921, 8
          %s923 = scalar_lea.vmem [#allocation15], %s922
          %924 = dma.done %s920, 128
        $region100: #{residual_block_forward.6} parent=79 // pred_fallthru
          _
      $region80: #{residual_block_forward.6} parent=5 // pred_fallthru
        _
    $region6: #{residual_block_forward.6} parent=1 // loop_footer
      %s32 = sadd.s32 1, %s28
    $region7: #{residual_block_forward.6} parent=1 // loop_footer_branch
      %27 = sbr.rel target = $region3
    $region8: #{residual_block_forward.6} parent=1 // loop_exit
      _
    %925 = vsyncpa [#allocation3], 1
    %s926 = scalar_lea.sflag [#allocation3], 1
    %927 = vsyncpa %s926, 1
    %928 = vsyncpa [#allocation6], 1
    %929 = vsyncpa [#allocation4], 1
    %s930 = scalar_lea.sflag [#allocation4], 1
    %931 = vsyncpa %s930, 1
    %932 = vsyncpa [#allocation11], 1
    %s933 = scalar_lea.sflag [#allocation11], 1
    %934 = vsyncpa %s933, 1
    %935 = vsyncpa [#allocation14], 1
    %s936 = scalar_lea.sflag [#allocation14], 1
    %937 = vsyncpa %s936, 1

</llo_original>
